<compile_context>
chip_gen: v5e
topology: v5e:2x2
jax: 0.10.0
libtpu: 0.0.40
codegen_flags: <defaults>
</compile_context>

<pallas_src>
import jax
import jax.numpy as jnp
from jax.experimental import pallas as pl
from jax.experimental.pallas import tpu as pltpu


def _basic_block5x5_kernel(x_ref, w_ref, sb_ref, out_ref, xp_ref, hp_ref):
    """One grid step: B samples of conv-bn-relu-conv-bn-add-relu.

    x_ref  : (B, L, C)        input chunk, channels last (f32)
    w_ref  : (2, 5, C, C)     per-tap conv weights [conv, tap, c_in, c_out],
                              BN scale already folded in, compute dtype
    sb_ref : (2, C)           rows = [shift1, shift2] (folded BN shifts, f32)
    out_ref: (B, L-4, C)      output chunk (f32)
    xp_ref : VMEM (B*(L+2), C) f32  flat per-sample zero-padded conv1 input
    hp_ref : VMEM (B*(L+2), C) f32  flat per-sample zero-padded conv2 input
    """
    B, L, C = x_ref.shape
    P = L + 2                 # padded per-sample length (conv padding = 1)
    R = B * P                 # flat scratch rows
    l1 = L - 2                # conv1 output length
    l2 = L - 4                # conv2 output length == block output length
    m = R - 4                 # matmul rows (includes junk cross-sample rows)

    # Invariant: the last consumed conv1 row is exactly m-1 and every consumed
    # row r reads only rows r..r+4 of its own sample slab (P = L+2).  Changing
    # P / the pad layout breaks this and would silently mix samples.
    assert (B - 1) * P + l1 - 1 == m - 1

    f32 = jnp.float32
    cd = w_ref.dtype
    cast = (lambda v: v) if cd == xp_ref.dtype else (lambda v: v.astype(cd))
    zrow = jnp.zeros((1, C), f32)

    # ---- conv1 input: per-sample zero padding written in-kernel --------------
    for b in range(B):
        base = b * P
        xp_ref[base:base + 1, :] = zrow                       # left pad
        xp_ref[base + 1:base + 1 + L, :] = x_ref[b]
        xp_ref[base + 1 + L:base + P, :] = zrow               # right pad

    # ---- conv1 (+ folded bn1 scale): 5 accumulating MXU matmuls --------------
    a1 = jnp.dot(cast(xp_ref[0:m, :]), w_ref[0, 0], preferred_element_type=f32)
    for k in range(1, 5):
        a1 = a1 + jnp.dot(cast(xp_ref[k:k + m, :]), w_ref[0, k],
                          preferred_element_type=f32)
    h = jnp.maximum(a1 + sb_ref[0:1, :], 0.0)                 # bn1 shift + relu

    # ---- conv2 input (only rows that are read are written) -------------------
    for b in range(B):
        base = b * P
        hp_ref[base:base + 1, :] = zrow                       # left pad
        hp_ref[base + 1:base + 1 + l1, :] = h[base:base + l1, :]
        hp_ref[base + 1 + l1:base + 2 + l1, :] = zrow         # only read pad row

    # ---- conv2 (+ folded bn2 scale) -------------------------------------------
    a2 = jnp.dot(cast(hp_ref[0:m, :]), w_ref[1, 0], preferred_element_type=f32)
    for k in range(1, 5):
        a2 = a2 + jnp.dot(cast(hp_ref[k:k + m, :]), w_ref[1, k],
                          preferred_element_type=f32)
    y = a2 + sb_ref[1:2, :]                                   # bn2 shift

    # ---- residual[:, 0:L-4] + out, relu (residual from aligned x_ref) --------
    for b in range(B):
        base = b * P
        out_ref[b] = jnp.maximum(x_ref[b, 0:l2, :] + y[base:base + l2, :],
                                 0.0).astype(out_ref.dtype)


def basic_block5x5(x_nlc, w_stack, sb, *, block_batch=None):
    """x_nlc: (N, L, C) f32.  w_stack: (2, 5, C, C).  sb: (2, C).  -> (N, L-4, C)."""
    n, L, C = x_nlc.shape
    l_out = L - 4
    assert w_stack.shape == (2, 5, C, C), w_stack.shape
    assert sb.shape == (2, C), sb.shape

    if block_batch is None:
        # Prefer grid >= 4 (>= 2 steps per TensorCore on v7x), fall back to >= 2.
        block_batch = 1
        for c in (64, 32, 16, 8, 4, 2, 1):
            if n % c == 0 and n // c >= 4:
                block_batch = c
                break
        else:
            for c in (64, 32, 16, 8, 4, 2, 1):
                if n % c == 0 and n // c >= 2:
                    block_batch = c
                    break
    B = block_batch
    assert n % B == 0, (n, B)

    return pl.pallas_call(
        _basic_block5x5_kernel,
        out_shape=jax.ShapeDtypeStruct((n, l_out, C), jnp.float32),
        grid_spec=pltpu.PrefetchScalarGridSpec(
            num_scalar_prefetch=0,
            grid=(n // B,),
            in_specs=[
                pl.BlockSpec((B, L, C), lambda i: (i, 0, 0)),
                pl.BlockSpec((2, 5, C, C), lambda i: (0, 0, 0, 0)),
                pl.BlockSpec((2, C), lambda i: (0, 0)),
            ],
            out_specs=pl.BlockSpec((B, l_out, C), lambda i: (i, 0, 0)),
            scratch_shapes=[
                pltpu.VMEM((B * (L + 2), C), jnp.float32),
                pltpu.VMEM((B * (L + 2), C), jnp.float32),
            ],
        ),
        compiler_params=pltpu.CompilerParams(
            dimension_semantics=("parallel",),
            vmem_limit_bytes=32 * 1024 * 1024),
    )(x_nlc, w_stack, sb)


# ------------------------- host-side parameter prep ---------------------------
def prep_block_params(w1_oik, w2_oik, bn1, bn2, eps=1e-5,
                      compute_dtype=jnp.float32):
    """w*_oik: PyTorch Conv1d weight (C_out, C_in, 5).  bn* = (gamma, beta, mean, var).

    Returns:
      w_stack: (2, 5, C_in, C_out) conv weights with BN scale folded in, cast
               to compute_dtype (use bf16 on v6e/v7x for MXU full rate).
      sb:      (2, C) folded BN shifts [shift1, shift2], f32.
    """
    def fold(w_oik, bn):
        gamma, beta, mean, var = bn
        scale = gamma / jnp.sqrt(var + eps)
        shift = beta - mean * scale
        w_folded = w_oik * scale[:, None, None]          # fold scale per out-ch
        w_taps = jnp.transpose(w_folded, (2, 1, 0))      # (K, C_in, C_out)
        return w_taps, shift

    w1, s1 = fold(w1_oik, bn1)
    w2, s2 = fold(w2_oik, bn2)
    w_stack = jnp.stack([w1, w2], axis=0).astype(compute_dtype)
    sb = jnp.stack([s1, s2], axis=0).astype(jnp.float32)
    return w_stack, sb


# ----------------------------- reference (plain JAX) --------------------------
def reference_block_ncl(x_ncl, w1_oik, w2_oik, bn1, bn2, eps=1e-5):
    conv = lambda x, w: jax.lax.conv_general_dilated(
        x, w, window_strides=(1,), padding=[(1, 1)],
        dimension_numbers=('NCH', 'OIH', 'NCH'),
        precision=jax.lax.Precision.HIGHEST)

    def bn(x, p):
        g, be, m, v = p
        return ((x - m[None, :, None]) / jnp.sqrt(v[None, :, None] + eps)
                * g[None, :, None] + be[None, :, None])

    out = jnp.maximum(bn(conv(x_ncl, w1_oik), bn1), 0.0)
    out = bn(conv(out, w2_oik), bn2)
    d = x_ncl.shape[2] - out.shape[2]
    return jnp.maximum(x_ncl[:, :, 0:-d] + out, 0.0)


if __name__ == "__main__":
    # Shapes consistent with MSResEncoder's 128-plane BasicBlock5x5 layers.
    # C=128 -> lane-dense; B=8 samples/step -> matmul M ~= 252; grid=(4,) keeps
    # both v7x TensorCores busy with >= 2 steps each.
    N, C, L = 32, 128, 30
    eps = 1e-5
    key = jax.random.PRNGKey(0)
    ks = jax.random.split(key, 11)

    w1_oik = jax.random.normal(ks[0], (C, C, 5), jnp.float32) * 0.05
    w2_oik = jax.random.normal(ks[1], (C, C, 5), jnp.float32) * 0.05
    bn1 = (1.0 + 0.1 * jax.random.normal(ks[2], (C,), jnp.float32),
           0.1 * jax.random.normal(ks[3], (C,), jnp.float32),
           0.1 * jax.random.normal(ks[4], (C,), jnp.float32),
           0.5 + jnp.abs(jax.random.normal(ks[5], (C,), jnp.float32)) * 0.5)
    bn2 = (1.0 + 0.1 * jax.random.normal(ks[6], (C,), jnp.float32),
           0.1 * jax.random.normal(ks[7], (C,), jnp.float32),
           0.1 * jax.random.normal(ks[8], (C,), jnp.float32),
           0.5 + jnp.abs(jax.random.normal(ks[9], (C,), jnp.float32)) * 0.5)
    x_ncl = jax.random.normal(ks[10], (N, C, L), jnp.float32)

    # Host-side layout transforms (PyTorch NCL / OIK -> kernel NLC / tap-major).
    x_nlc = jnp.transpose(x_ncl, (0, 2, 1))
    ref = reference_block_ncl(x_ncl, w1_oik, w2_oik, bn1, bn2, eps)

    # --- f32 path (bit-accurate vs the PyTorch-style f32 reference) ----------
    w_f32, sb_f32 = prep_block_params(w1_oik, w2_oik, bn1, bn2, eps)
    out_nlc = jax.block_until_ready(
        basic_block5x5(x_nlc, w_f32, sb_f32, block_batch=8))
    out_ncl = jnp.transpose(out_nlc, (0, 2, 1))
    assert out_ncl.shape == (N, C, L - 4), out_ncl.shape
    max_err = float(jnp.max(jnp.abs(out_ncl - ref)))
    assert jnp.allclose(out_ncl, ref, atol=1e-3, rtol=1e-3), max_err

    # --- bf16-operand fast path (v6e/v7x), f32 accumulation -------------------
    w_bf16, sb_bf16 = prep_block_params(w1_oik, w2_oik, bn1, bn2, eps,
                                        compute_dtype=jnp.bfloat16)
    out_bf16 = jax.block_until_ready(
        basic_block5x5(x_nlc, w_bf16, sb_bf16, block_batch=8))
    out_bf16_ncl = jnp.transpose(out_bf16, (0, 2, 1))
    max_err_bf16 = float(jnp.max(jnp.abs(out_bf16_ncl - ref)))
    assert jnp.allclose(out_bf16_ncl, ref, atol=1e-1, rtol=1e-1), max_err_bf16

    print("KERNEL_OK")
</pallas_src>

<mosaic_0001>
module attributes {stable_mosaic.version = 11 : i64} {
  func.func @_basic_block5x5_kernel(%arg0: i32, %arg1: memref<8x30x128xf32, #tpu.memory_space<vmem>>, %arg2: memref<2x5x128x128xf32, #tpu.memory_space<vmem>>, %arg3: memref<2x128xf32, #tpu.memory_space<vmem>>, %arg4: memref<8x26x128xf32, #tpu.memory_space<vmem>>, %arg5: memref<256x128xf32, #tpu.memory_space<vmem>>, %arg6: memref<256x128xf32, #tpu.memory_space<vmem>>) attributes {dimension_semantics = [#tpu.dimension_semantics<parallel>], iteration_bounds = array<i64: 4>, scalar_prefetch = 0 : i64, scratch_operands = 2 : i64, tpu.core_type = #tpu.core_type<tc>, window_params = [{transform_indices = @transform_0, window_bounds = array<i64: 8, 30, 128>}, {pipeline_mode = #tpu.pipeline_mode<synchronous>, transform_indices = @transform_1, window_bounds = array<i64: 2, 5, 128, 128>}, {pipeline_mode = #tpu.pipeline_mode<synchronous>, transform_indices = @transform_2, window_bounds = array<i64: 2, 128>}, {transform_indices = @transform_3, window_bounds = array<i64: 8, 26, 128>}]} {
    %cst = arith.constant 0.000000e+00 : f32
    %0 = vector.broadcast %cst : f32 to vector<1x128xf32>
    %c0 = arith.constant 0 : index
    %c0_0 = arith.constant 0 : index
    %1 = vector.load %arg5[%c0, %c0_0] : memref<256x128xf32, #tpu.memory_space<vmem>>, vector<1x128xf32>
    tpu.vector_store %arg5[%c0, %c0_0], %0 {strides = array<i32>} : memref<256x128xf32, #tpu.memory_space<vmem>>, vector<1x128xf32>,
    %c0_1 = arith.constant 0 : index
    %c0_2 = arith.constant 0 : index
    %c0_3 = arith.constant 0 : index
    %2 = vector.load %arg1[%c0_1, %c0_2, %c0_3] : memref<8x30x128xf32, #tpu.memory_space<vmem>>, vector<1x30x128xf32>
    %3 = vector.shape_cast %2 : vector<1x30x128xf32> to vector<30x128xf32>
    %c1 = arith.constant 1 : index
    %c0_4 = arith.constant 0 : index
    %4 = vector.load %arg5[%c1, %c0_4] : memref<256x128xf32, #tpu.memory_space<vmem>>, vector<30x128xf32>
    tpu.vector_store %arg5[%c1, %c0_4], %3 {strides = array<i32>} : memref<256x128xf32, #tpu.memory_space<vmem>>, vector<30x128xf32>,
    %c31 = arith.constant 31 : index
    %c0_5 = arith.constant 0 : index
    %5 = vector.load %arg5[%c31, %c0_5] : memref<256x128xf32, #tpu.memory_space<vmem>>, vector<1x128xf32>
    tpu.vector_store %arg5[%c31, %c0_5], %0 {strides = array<i32>} : memref<256x128xf32, #tpu.memory_space<vmem>>, vector<1x128xf32>,
    %c32 = arith.constant 32 : index
    %c0_6 = arith.constant 0 : index
    %6 = vector.load %arg5[%c32, %c0_6] : memref<256x128xf32, #tpu.memory_space<vmem>>, vector<1x128xf32>
    tpu.vector_store %arg5[%c32, %c0_6], %0 {strides = array<i32>} : memref<256x128xf32, #tpu.memory_space<vmem>>, vector<1x128xf32>,
    %c1_7 = arith.constant 1 : index
    %c0_8 = arith.constant 0 : index
    %c0_9 = arith.constant 0 : index
    %7 = vector.load %arg1[%c1_7, %c0_8, %c0_9] : memref<8x30x128xf32, #tpu.memory_space<vmem>>, vector<1x30x128xf32>
    %8 = vector.shape_cast %7 : vector<1x30x128xf32> to vector<30x128xf32>
    %c33 = arith.constant 33 : index
    %c0_10 = arith.constant 0 : index
    %9 = vector.load %arg5[%c33, %c0_10] : memref<256x128xf32, #tpu.memory_space<vmem>>, vector<30x128xf32>
    tpu.vector_store %arg5[%c33, %c0_10], %8 {strides = array<i32>} : memref<256x128xf32, #tpu.memory_space<vmem>>, vector<30x128xf32>,
    %c63 = arith.constant 63 : index
    %c0_11 = arith.constant 0 : index
    %10 = vector.load %arg5[%c63, %c0_11] : memref<256x128xf32, #tpu.memory_space<vmem>>, vector<1x128xf32>
    tpu.vector_store %arg5[%c63, %c0_11], %0 {strides = array<i32>} : memref<256x128xf32, #tpu.memory_space<vmem>>, vector<1x128xf32>,
    %c64 = arith.constant 64 : index
    %c0_12 = arith.constant 0 : index
    %11 = vector.load %arg5[%c64, %c0_12] : memref<256x128xf32, #tpu.memory_space<vmem>>, vector<1x128xf32>
    tpu.vector_store %arg5[%c64, %c0_12], %0 {strides = array<i32>} : memref<256x128xf32, #tpu.memory_space<vmem>>, vector<1x128xf32>,
    %c2 = arith.constant 2 : index
    %c0_13 = arith.constant 0 : index
    %c0_14 = arith.constant 0 : index
    %12 = vector.load %arg1[%c2, %c0_13, %c0_14] : memref<8x30x128xf32, #tpu.memory_space<vmem>>, vector<1x30x128xf32>
    %13 = vector.shape_cast %12 : vector<1x30x128xf32> to vector<30x128xf32>
    %c65 = arith.constant 65 : index
    %c0_15 = arith.constant 0 : index
    %14 = vector.load %arg5[%c65, %c0_15] : memref<256x128xf32, #tpu.memory_space<vmem>>, vector<30x128xf32>
    tpu.vector_store %arg5[%c65, %c0_15], %13 {strides = array<i32>} : memref<256x128xf32, #tpu.memory_space<vmem>>, vector<30x128xf32>,
    %c95 = arith.constant 95 : index
    %c0_16 = arith.constant 0 : index
    %15 = vector.load %arg5[%c95, %c0_16] : memref<256x128xf32, #tpu.memory_space<vmem>>, vector<1x128xf32>
    tpu.vector_store %arg5[%c95, %c0_16], %0 {strides = array<i32>} : memref<256x128xf32, #tpu.memory_space<vmem>>, vector<1x128xf32>,
    %c96 = arith.constant 96 : index
    %c0_17 = arith.constant 0 : index
    %16 = vector.load %arg5[%c96, %c0_17] : memref<256x128xf32, #tpu.memory_space<vmem>>, vector<1x128xf32>
    tpu.vector_store %arg5[%c96, %c0_17], %0 {strides = array<i32>} : memref<256x128xf32, #tpu.memory_space<vmem>>, vector<1x128xf32>,
    %c3 = arith.constant 3 : index
    %c0_18 = arith.constant 0 : index
    %c0_19 = arith.constant 0 : index
    %17 = vector.load %arg1[%c3, %c0_18, %c0_19] : memref<8x30x128xf32, #tpu.memory_space<vmem>>, vector<1x30x128xf32>
    %18 = vector.shape_cast %17 : vector<1x30x128xf32> to vector<30x128xf32>
    %c97 = arith.constant 97 : index
    %c0_20 = arith.constant 0 : index
    %19 = vector.load %arg5[%c97, %c0_20] : memref<256x128xf32, #tpu.memory_space<vmem>>, vector<30x128xf32>
    tpu.vector_store %arg5[%c97, %c0_20], %18 {strides = array<i32>} : memref<256x128xf32, #tpu.memory_space<vmem>>, vector<30x128xf32>,
    %c127 = arith.constant 127 : index
    %c0_21 = arith.constant 0 : index
    %20 = vector.load %arg5[%c127, %c0_21] : memref<256x128xf32, #tpu.memory_space<vmem>>, vector<1x128xf32>
    tpu.vector_store %arg5[%c127, %c0_21], %0 {strides = array<i32>} : memref<256x128xf32, #tpu.memory_space<vmem>>, vector<1x128xf32>,
    %c128 = arith.constant 128 : index
    %c0_22 = arith.constant 0 : index
    %21 = vector.load %arg5[%c128, %c0_22] : memref<256x128xf32, #tpu.memory_space<vmem>>, vector<1x128xf32>
    tpu.vector_store %arg5[%c128, %c0_22], %0 {strides = array<i32>} : memref<256x128xf32, #tpu.memory_space<vmem>>, vector<1x128xf32>,
    %c4 = arith.constant 4 : index
    %c0_23 = arith.constant 0 : index
    %c0_24 = arith.constant 0 : index
    %22 = vector.load %arg1[%c4, %c0_23, %c0_24] : memref<8x30x128xf32, #tpu.memory_space<vmem>>, vector<1x30x128xf32>
    %23 = vector.shape_cast %22 : vector<1x30x128xf32> to vector<30x128xf32>
    %c129 = arith.constant 129 : index
    %c0_25 = arith.constant 0 : index
    %24 = vector.load %arg5[%c129, %c0_25] : memref<256x128xf32, #tpu.memory_space<vmem>>, vector<30x128xf32>
    tpu.vector_store %arg5[%c129, %c0_25], %23 {strides = array<i32>} : memref<256x128xf32, #tpu.memory_space<vmem>>, vector<30x128xf32>,
    %c159 = arith.constant 159 : index
    %c0_26 = arith.constant 0 : index
    %25 = vector.load %arg5[%c159, %c0_26] : memref<256x128xf32, #tpu.memory_space<vmem>>, vector<1x128xf32>
    tpu.vector_store %arg5[%c159, %c0_26], %0 {strides = array<i32>} : memref<256x128xf32, #tpu.memory_space<vmem>>, vector<1x128xf32>,
    %c160 = arith.constant 160 : index
    %c0_27 = arith.constant 0 : index
    %26 = vector.load %arg5[%c160, %c0_27] : memref<256x128xf32, #tpu.memory_space<vmem>>, vector<1x128xf32>
    tpu.vector_store %arg5[%c160, %c0_27], %0 {strides = array<i32>} : memref<256x128xf32, #tpu.memory_space<vmem>>, vector<1x128xf32>,
    %c5 = arith.constant 5 : index
    %c0_28 = arith.constant 0 : index
    %c0_29 = arith.constant 0 : index
    %27 = vector.load %arg1[%c5, %c0_28, %c0_29] : memref<8x30x128xf32, #tpu.memory_space<vmem>>, vector<1x30x128xf32>
    %28 = vector.shape_cast %27 : vector<1x30x128xf32> to vector<30x128xf32>
    %c161 = arith.constant 161 : index
    %c0_30 = arith.constant 0 : index
    %29 = vector.load %arg5[%c161, %c0_30] : memref<256x128xf32, #tpu.memory_space<vmem>>, vector<30x128xf32>
    tpu.vector_store %arg5[%c161, %c0_30], %28 {strides = array<i32>} : memref<256x128xf32, #tpu.memory_space<vmem>>, vector<30x128xf32>,
    %c191 = arith.constant 191 : index
    %c0_31 = arith.constant 0 : index
    %30 = vector.load %arg5[%c191, %c0_31] : memref<256x128xf32, #tpu.memory_space<vmem>>, vector<1x128xf32>
    tpu.vector_store %arg5[%c191, %c0_31], %0 {strides = array<i32>} : memref<256x128xf32, #tpu.memory_space<vmem>>, vector<1x128xf32>,
    %c192 = arith.constant 192 : index
    %c0_32 = arith.constant 0 : index
    %31 = vector.load %arg5[%c192, %c0_32] : memref<256x128xf32, #tpu.memory_space<vmem>>, vector<1x128xf32>
    tpu.vector_store %arg5[%c192, %c0_32], %0 {strides = array<i32>} : memref<256x128xf32, #tpu.memory_space<vmem>>, vector<1x128xf32>,
    %c6 = arith.constant 6 : index
    %c0_33 = arith.constant 0 : index
    %c0_34 = arith.constant 0 : index
    %32 = vector.load %arg1[%c6, %c0_33, %c0_34] : memref<8x30x128xf32, #tpu.memory_space<vmem>>, vector<1x30x128xf32>
    %33 = vector.shape_cast %32 : vector<1x30x128xf32> to vector<30x128xf32>
    %c193 = arith.constant 193 : index
    %c0_35 = arith.constant 0 : index
    %34 = vector.load %arg5[%c193, %c0_35] : memref<256x128xf32, #tpu.memory_space<vmem>>, vector<30x128xf32>
    tpu.vector_store %arg5[%c193, %c0_35], %33 {strides = array<i32>} : memref<256x128xf32, #tpu.memory_space<vmem>>, vector<30x128xf32>,
    %c223 = arith.constant 223 : index
    %c0_36 = arith.constant 0 : index
    %35 = vector.load %arg5[%c223, %c0_36] : memref<256x128xf32, #tpu.memory_space<vmem>>, vector<1x128xf32>
    tpu.vector_store %arg5[%c223, %c0_36], %0 {strides = array<i32>} : memref<256x128xf32, #tpu.memory_space<vmem>>, vector<1x128xf32>,
    %c224 = arith.constant 224 : index
    %c0_37 = arith.constant 0 : index
    %36 = vector.load %arg5[%c224, %c0_37] : memref<256x128xf32, #tpu.memory_space<vmem>>, vector<1x128xf32>
    tpu.vector_store %arg5[%c224, %c0_37], %0 {strides = array<i32>} : memref<256x128xf32, #tpu.memory_space<vmem>>, vector<1x128xf32>,
    %c7 = arith.constant 7 : index
    %c0_38 = arith.constant 0 : index
    %c0_39 = arith.constant 0 : index
    %37 = vector.load %arg1[%c7, %c0_38, %c0_39] : memref<8x30x128xf32, #tpu.memory_space<vmem>>, vector<1x30x128xf32>
    %38 = vector.shape_cast %37 : vector<1x30x128xf32> to vector<30x128xf32>
    %c225 = arith.constant 225 : index
    %c0_40 = arith.constant 0 : index
    %39 = vector.load %arg5[%c225, %c0_40] : memref<256x128xf32, #tpu.memory_space<vmem>>, vector<30x128xf32>
    tpu.vector_store %arg5[%c225, %c0_40], %38 {strides = array<i32>} : memref<256x128xf32, #tpu.memory_space<vmem>>, vector<30x128xf32>,
    %c255 = arith.constant 255 : index
    %c0_41 = arith.constant 0 : index
    %40 = vector.load %arg5[%c255, %c0_41] : memref<256x128xf32, #tpu.memory_space<vmem>>, vector<1x128xf32>
    tpu.vector_store %arg5[%c255, %c0_41], %0 {strides = array<i32>} : memref<256x128xf32, #tpu.memory_space<vmem>>, vector<1x128xf32>,
    %c0_42 = arith.constant 0 : index
    %c0_43 = arith.constant 0 : index
    %41 = vector.load %arg5[%c0_42, %c0_43] : memref<256x128xf32, #tpu.memory_space<vmem>>, vector<252x128xf32>
    %c0_44 = arith.constant 0 : index
    %c0_45 = arith.constant 0 : index
    %c0_46 = arith.constant 0 : index
    %c0_47 = arith.constant 0 : index
    %42 = vector.load %arg2[%c0_44, %c0_45, %c0_46, %c0_47] : memref<2x5x128x128xf32, #tpu.memory_space<vmem>>, vector<1x1x128x128xf32>
    %43 = vector.shape_cast %42 : vector<1x1x128x128xf32> to vector<128x128xf32>
    %cst_48 = arith.constant dense<0.000000e+00> : vector<252x128xf32>
    %44 = tpu.matmul %41, %43, %cst_48 {dimension_numbers = #tpu.dot_dimension_numbers<[1], [0], [0], [1], [0, 0, 1, 1], [], []>} : vector<252x128xf32>, vector<128x128xf32>, vector<252x128xf32> -> vector<252x128xf32>
    %c1_49 = arith.constant 1 : index
    %c0_50 = arith.constant 0 : index
    %45 = vector.load %arg5[%c1_49, %c0_50] : memref<256x128xf32, #tpu.memory_space<vmem>>, vector<252x128xf32>
    %c0_51 = arith.constant 0 : index
    %c1_52 = arith.constant 1 : index
    %c0_53 = arith.constant 0 : index
    %c0_54 = arith.constant 0 : index
    %46 = vector.load %arg2[%c0_51, %c1_52, %c0_53, %c0_54] : memref<2x5x128x128xf32, #tpu.memory_space<vmem>>, vector<1x1x128x128xf32>
    %47 = vector.shape_cast %46 : vector<1x1x128x128xf32> to vector<128x128xf32>
    %cst_55 = arith.constant dense<0.000000e+00> : vector<252x128xf32>
    %48 = tpu.matmul %45, %47, %cst_55 {dimension_numbers = #tpu.dot_dimension_numbers<[1], [0], [0], [1], [0, 0, 1, 1], [], []>} : vector<252x128xf32>, vector<128x128xf32>, vector<252x128xf32> -> vector<252x128xf32>
    %49 = arith.addf %44, %48 : vector<252x128xf32>
    %c2_56 = arith.constant 2 : index
    %c0_57 = arith.constant 0 : index
    %50 = vector.load %arg5[%c2_56, %c0_57] : memref<256x128xf32, #tpu.memory_space<vmem>>, vector<252x128xf32>
    %c0_58 = arith.constant 0 : index
    %c2_59 = arith.constant 2 : index
    %c0_60 = arith.constant 0 : index
    %c0_61 = arith.constant 0 : index
    %51 = vector.load %arg2[%c0_58, %c2_59, %c0_60, %c0_61] : memref<2x5x128x128xf32, #tpu.memory_space<vmem>>, vector<1x1x128x128xf32>
    %52 = vector.shape_cast %51 : vector<1x1x128x128xf32> to vector<128x128xf32>
    %cst_62 = arith.constant dense<0.000000e+00> : vector<252x128xf32>
    %53 = tpu.matmul %50, %52, %cst_62 {dimension_numbers = #tpu.dot_dimension_numbers<[1], [0], [0], [1], [0, 0, 1, 1], [], []>} : vector<252x128xf32>, vector<128x128xf32>, vector<252x128xf32> -> vector<252x128xf32>
    %54 = arith.addf %49, %53 : vector<252x128xf32>
    %c3_63 = arith.constant 3 : index
    %c0_64 = arith.constant 0 : index
    %55 = vector.load %arg5[%c3_63, %c0_64] : memref<256x128xf32, #tpu.memory_space<vmem>>, vector<252x128xf32>
    %c0_65 = arith.constant 0 : index
    %c3_66 = arith.constant 3 : index
    %c0_67 = arith.constant 0 : index
    %c0_68 = arith.constant 0 : index
    %56 = vector.load %arg2[%c0_65, %c3_66, %c0_67, %c0_68] : memref<2x5x128x128xf32, #tpu.memory_space<vmem>>, vector<1x1x128x128xf32>
    %57 = vector.shape_cast %56 : vector<1x1x128x128xf32> to vector<128x128xf32>
    %cst_69 = arith.constant dense<0.000000e+00> : vector<252x128xf32>
    %58 = tpu.matmul %55, %57, %cst_69 {dimension_numbers = #tpu.dot_dimension_numbers<[1], [0], [0], [1], [0, 0, 1, 1], [], []>} : vector<252x128xf32>, vector<128x128xf32>, vector<252x128xf32> -> vector<252x128xf32>
    %59 = arith.addf %54, %58 : vector<252x128xf32>
    %c4_70 = arith.constant 4 : index
    %c0_71 = arith.constant 0 : index
    %60 = vector.load %arg5[%c4_70, %c0_71] : memref<256x128xf32, #tpu.memory_space<vmem>>, vector<252x128xf32>
    %c0_72 = arith.constant 0 : index
    %c4_73 = arith.constant 4 : index
    %c0_74 = arith.constant 0 : index
    %c0_75 = arith.constant 0 : index
    %61 = vector.load %arg2[%c0_72, %c4_73, %c0_74, %c0_75] : memref<2x5x128x128xf32, #tpu.memory_space<vmem>>, vector<1x1x128x128xf32>
    %62 = vector.shape_cast %61 : vector<1x1x128x128xf32> to vector<128x128xf32>
    %cst_76 = arith.constant dense<0.000000e+00> : vector<252x128xf32>
    %63 = tpu.matmul %60, %62, %cst_76 {dimension_numbers = #tpu.dot_dimension_numbers<[1], [0], [0], [1], [0, 0, 1, 1], [], []>} : vector<252x128xf32>, vector<128x128xf32>, vector<252x128xf32> -> vector<252x128xf32>
    %64 = arith.addf %59, %63 : vector<252x128xf32>
    %c0_77 = arith.constant 0 : index
    %c0_78 = arith.constant 0 : index
    %65 = vector.load %arg3[%c0_77, %c0_78] : memref<2x128xf32, #tpu.memory_space<vmem>>, vector<1x128xf32>
    %66 = vector.broadcast %65 : vector<1x128xf32> to vector<252x128xf32>
    %67 = arith.addf %64, %66 : vector<252x128xf32>
    %cst_79 = arith.constant 0.000000e+00 : f32
    %68 = vector.broadcast %cst_79 : f32 to vector<252x128xf32>
    %69 = arith.maximumf %67, %68 : vector<252x128xf32>
    %c0_80 = arith.constant 0 : index
    %c0_81 = arith.constant 0 : index
    %70 = vector.load %arg6[%c0_80, %c0_81] : memref<256x128xf32, #tpu.memory_space<vmem>>, vector<1x128xf32>
    tpu.vector_store %arg6[%c0_80, %c0_81], %0 {strides = array<i32>} : memref<256x128xf32, #tpu.memory_space<vmem>>, vector<1x128xf32>,
    %71 = vector.extract_strided_slice %69 {offsets = [0, 0], sizes = [28, 128], strides = [1, 1]} : vector<252x128xf32> to vector<28x128xf32>
    %c1_82 = arith.constant 1 : index
    %c0_83 = arith.constant 0 : index
    %72 = vector.load %arg6[%c1_82, %c0_83] : memref<256x128xf32, #tpu.memory_space<vmem>>, vector<28x128xf32>
    tpu.vector_store %arg6[%c1_82, %c0_83], %71 {strides = array<i32>} : memref<256x128xf32, #tpu.memory_space<vmem>>, vector<28x128xf32>,
    %c29 = arith.constant 29 : index
    %c0_84 = arith.constant 0 : index
    %73 = vector.load %arg6[%c29, %c0_84] : memref<256x128xf32, #tpu.memory_space<vmem>>, vector<1x128xf32>
    tpu.vector_store %arg6[%c29, %c0_84], %0 {strides = array<i32>} : memref<256x128xf32, #tpu.memory_space<vmem>>, vector<1x128xf32>,
    %c32_85 = arith.constant 32 : index
    %c0_86 = arith.constant 0 : index
    %74 = vector.load %arg6[%c32_85, %c0_86] : memref<256x128xf32, #tpu.memory_space<vmem>>, vector<1x128xf32>
    tpu.vector_store %arg6[%c32_85, %c0_86], %0 {strides = array<i32>} : memref<256x128xf32, #tpu.memory_space<vmem>>, vector<1x128xf32>,
    %75 = vector.extract_strided_slice %69 {offsets = [32, 0], sizes = [28, 128], strides = [1, 1]} : vector<252x128xf32> to vector<28x128xf32>
    %c33_87 = arith.constant 33 : index
    %c0_88 = arith.constant 0 : index
    %76 = vector.load %arg6[%c33_87, %c0_88] : memref<256x128xf32, #tpu.memory_space<vmem>>, vector<28x128xf32>
    tpu.vector_store %arg6[%c33_87, %c0_88], %75 {strides = array<i32>} : memref<256x128xf32, #tpu.memory_space<vmem>>, vector<28x128xf32>,
    %c61 = arith.constant 61 : index
    %c0_89 = arith.constant 0 : index
    %77 = vector.load %arg6[%c61, %c0_89] : memref<256x128xf32, #tpu.memory_space<vmem>>, vector<1x128xf32>
    tpu.vector_store %arg6[%c61, %c0_89], %0 {strides = array<i32>} : memref<256x128xf32, #tpu.memory_space<vmem>>, vector<1x128xf32>,
    %c64_90 = arith.constant 64 : index
    %c0_91 = arith.constant 0 : index
    %78 = vector.load %arg6[%c64_90, %c0_91] : memref<256x128xf32, #tpu.memory_space<vmem>>, vector<1x128xf32>
    tpu.vector_store %arg6[%c64_90, %c0_91], %0 {strides = array<i32>} : memref<256x128xf32, #tpu.memory_space<vmem>>, vector<1x128xf32>,
    %79 = vector.extract_strided_slice %69 {offsets = [64, 0], sizes = [28, 128], strides = [1, 1]} : vector<252x128xf32> to vector<28x128xf32>
    %c65_92 = arith.constant 65 : index
    %c0_93 = arith.constant 0 : index
    %80 = vector.load %arg6[%c65_92, %c0_93] : memref<256x128xf32, #tpu.memory_space<vmem>>, vector<28x128xf32>
    tpu.vector_store %arg6[%c65_92, %c0_93], %79 {strides = array<i32>} : memref<256x128xf32, #tpu.memory_space<vmem>>, vector<28x128xf32>,
    %c93 = arith.constant 93 : index
    %c0_94 = arith.constant 0 : index
    %81 = vector.load %arg6[%c93, %c0_94] : memref<256x128xf32, #tpu.memory_space<vmem>>, vector<1x128xf32>
    tpu.vector_store %arg6[%c93, %c0_94], %0 {strides = array<i32>} : memref<256x128xf32, #tpu.memory_space<vmem>>, vector<1x128xf32>,
    %c96_95 = arith.constant 96 : index
    %c0_96 = arith.constant 0 : index
    %82 = vector.load %arg6[%c96_95, %c0_96] : memref<256x128xf32, #tpu.memory_space<vmem>>, vector<1x128xf32>
    tpu.vector_store %arg6[%c96_95, %c0_96], %0 {strides = array<i32>} : memref<256x128xf32, #tpu.memory_space<vmem>>, vector<1x128xf32>,
    %83 = vector.extract_strided_slice %69 {offsets = [96, 0], sizes = [28, 128], strides = [1, 1]} : vector<252x128xf32> to vector<28x128xf32>
    %c97_97 = arith.constant 97 : index
    %c0_98 = arith.constant 0 : index
    %84 = vector.load %arg6[%c97_97, %c0_98] : memref<256x128xf32, #tpu.memory_space<vmem>>, vector<28x128xf32>
    tpu.vector_store %arg6[%c97_97, %c0_98], %83 {strides = array<i32>} : memref<256x128xf32, #tpu.memory_space<vmem>>, vector<28x128xf32>,
    %c125 = arith.constant 125 : index
    %c0_99 = arith.constant 0 : index
    %85 = vector.load %arg6[%c125, %c0_99] : memref<256x128xf32, #tpu.memory_space<vmem>>, vector<1x128xf32>
    tpu.vector_store %arg6[%c125, %c0_99], %0 {strides = array<i32>} : memref<256x128xf32, #tpu.memory_space<vmem>>, vector<1x128xf32>,
    %c128_100 = arith.constant 128 : index
    %c0_101 = arith.constant 0 : index
    %86 = vector.load %arg6[%c128_100, %c0_101] : memref<256x128xf32, #tpu.memory_space<vmem>>, vector<1x128xf32>
    tpu.vector_store %arg6[%c128_100, %c0_101], %0 {strides = array<i32>} : memref<256x128xf32, #tpu.memory_space<vmem>>, vector<1x128xf32>,
    %87 = vector.extract_strided_slice %69 {offsets = [128, 0], sizes = [28, 128], strides = [1, 1]} : vector<252x128xf32> to vector<28x128xf32>
    %c129_102 = arith.constant 129 : index
    %c0_103 = arith.constant 0 : index
    %88 = vector.load %arg6[%c129_102, %c0_103] : memref<256x128xf32, #tpu.memory_space<vmem>>, vector<28x128xf32>
    tpu.vector_store %arg6[%c129_102, %c0_103], %87 {strides = array<i32>} : memref<256x128xf32, #tpu.memory_space<vmem>>, vector<28x128xf32>,
    %c157 = arith.constant 157 : index
    %c0_104 = arith.constant 0 : index
    %89 = vector.load %arg6[%c157, %c0_104] : memref<256x128xf32, #tpu.memory_space<vmem>>, vector<1x128xf32>
    tpu.vector_store %arg6[%c157, %c0_104], %0 {strides = array<i32>} : memref<256x128xf32, #tpu.memory_space<vmem>>, vector<1x128xf32>,
    %c160_105 = arith.constant 160 : index
    %c0_106 = arith.constant 0 : index
    %90 = vector.load %arg6[%c160_105, %c0_106] : memref<256x128xf32, #tpu.memory_space<vmem>>, vector<1x128xf32>
    tpu.vector_store %arg6[%c160_105, %c0_106], %0 {strides = array<i32>} : memref<256x128xf32, #tpu.memory_space<vmem>>, vector<1x128xf32>,
    %91 = vector.extract_strided_slice %69 {offsets = [160, 0], sizes = [28, 128], strides = [1, 1]} : vector<252x128xf32> to vector<28x128xf32>
    %c161_107 = arith.constant 161 : index
    %c0_108 = arith.constant 0 : index
    %92 = vector.load %arg6[%c161_107, %c0_108] : memref<256x128xf32, #tpu.memory_space<vmem>>, vector<28x128xf32>
    tpu.vector_store %arg6[%c161_107, %c0_108], %91 {strides = array<i32>} : memref<256x128xf32, #tpu.memory_space<vmem>>, vector<28x128xf32>,
    %c189 = arith.constant 189 : index
    %c0_109 = arith.constant 0 : index
    %93 = vector.load %arg6[%c189, %c0_109] : memref<256x128xf32, #tpu.memory_space<vmem>>, vector<1x128xf32>
    tpu.vector_store %arg6[%c189, %c0_109], %0 {strides = array<i32>} : memref<256x128xf32, #tpu.memory_space<vmem>>, vector<1x128xf32>,
    %c192_110 = arith.constant 192 : index
    %c0_111 = arith.constant 0 : index
    %94 = vector.load %arg6[%c192_110, %c0_111] : memref<256x128xf32, #tpu.memory_space<vmem>>, vector<1x128xf32>
    tpu.vector_store %arg6[%c192_110, %c0_111], %0 {strides = array<i32>} : memref<256x128xf32, #tpu.memory_space<vmem>>, vector<1x128xf32>,
    %95 = vector.extract_strided_slice %69 {offsets = [192, 0], sizes = [28, 128], strides = [1, 1]} : vector<252x128xf32> to vector<28x128xf32>
    %c193_112 = arith.constant 193 : index
    %c0_113 = arith.constant 0 : index
    %96 = vector.load %arg6[%c193_112, %c0_113] : memref<256x128xf32, #tpu.memory_space<vmem>>, vector<28x128xf32>
    tpu.vector_store %arg6[%c193_112, %c0_113], %95 {strides = array<i32>} : memref<256x128xf32, #tpu.memory_space<vmem>>, vector<28x128xf32>,
    %c221 = arith.constant 221 : index
    %c0_114 = arith.constant 0 : index
    %97 = vector.load %arg6[%c221, %c0_114] : memref<256x128xf32, #tpu.memory_space<vmem>>, vector<1x128xf32>
    tpu.vector_store %arg6[%c221, %c0_114], %0 {strides = array<i32>} : memref<256x128xf32, #tpu.memory_space<vmem>>, vector<1x128xf32>,
    %c224_115 = arith.constant 224 : index
    %c0_116 = arith.constant 0 : index
    %98 = vector.load %arg6[%c224_115, %c0_116] : memref<256x128xf32, #tpu.memory_space<vmem>>, vector<1x128xf32>
    tpu.vector_store %arg6[%c224_115, %c0_116], %0 {strides = array<i32>} : memref<256x128xf32, #tpu.memory_space<vmem>>, vector<1x128xf32>,
    %99 = vector.extract_strided_slice %69 {offsets = [224, 0], sizes = [28, 128], strides = [1, 1]} : vector<252x128xf32> to vector<28x128xf32>
    %c225_117 = arith.constant 225 : index
    %c0_118 = arith.constant 0 : index
    %100 = vector.load %arg6[%c225_117, %c0_118] : memref<256x128xf32, #tpu.memory_space<vmem>>, vector<28x128xf32>
    tpu.vector_store %arg6[%c225_117, %c0_118], %99 {strides = array<i32>} : memref<256x128xf32, #tpu.memory_space<vmem>>, vector<28x128xf32>,
    %c253 = arith.constant 253 : index
    %c0_119 = arith.constant 0 : index
    %101 = vector.load %arg6[%c253, %c0_119] : memref<256x128xf32, #tpu.memory_space<vmem>>, vector<1x128xf32>
    tpu.vector_store %arg6[%c253, %c0_119], %0 {strides = array<i32>} : memref<256x128xf32, #tpu.memory_space<vmem>>, vector<1x128xf32>,
    %c0_120 = arith.constant 0 : index
    %c0_121 = arith.constant 0 : index
    %102 = vector.load %arg6[%c0_120, %c0_121] : memref<256x128xf32, #tpu.memory_space<vmem>>, vector<252x128xf32>
    %c1_122 = arith.constant 1 : index
    %c0_123 = arith.constant 0 : index
    %c0_124 = arith.constant 0 : index
    %c0_125 = arith.constant 0 : index
    %103 = vector.load %arg2[%c1_122, %c0_123, %c0_124, %c0_125] : memref<2x5x128x128xf32, #tpu.memory_space<vmem>>, vector<1x1x128x128xf32>
    %104 = vector.shape_cast %103 : vector<1x1x128x128xf32> to vector<128x128xf32>
    %cst_126 = arith.constant dense<0.000000e+00> : vector<252x128xf32>
    %105 = tpu.matmul %102, %104, %cst_126 {dimension_numbers = #tpu.dot_dimension_numbers<[1], [0], [0], [1], [0, 0, 1, 1], [], []>} : vector<252x128xf32>, vector<128x128xf32>, vector<252x128xf32> -> vector<252x128xf32>
    %c1_127 = arith.constant 1 : index
    %c0_128 = arith.constant 0 : index
    %106 = vector.load %arg6[%c1_127, %c0_128] : memref<256x128xf32, #tpu.memory_space<vmem>>, vector<252x128xf32>
    %c1_129 = arith.constant 1 : index
    %c1_130 = arith.constant 1 : index
    %c0_131 = arith.constant 0 : index
    %c0_132 = arith.constant 0 : index
    %107 = vector.load %arg2[%c1_129, %c1_130, %c0_131, %c0_132] : memref<2x5x128x128xf32, #tpu.memory_space<vmem>>, vector<1x1x128x128xf32>
    %108 = vector.shape_cast %107 : vector<1x1x128x128xf32> to vector<128x128xf32>
    %cst_133 = arith.constant dense<0.000000e+00> : vector<252x128xf32>
    %109 = tpu.matmul %106, %108, %cst_133 {dimension_numbers = #tpu.dot_dimension_numbers<[1], [0], [0], [1], [0, 0, 1, 1], [], []>} : vector<252x128xf32>, vector<128x128xf32>, vector<252x128xf32> -> vector<252x128xf32>
    %110 = arith.addf %105, %109 : vector<252x128xf32>
    %c2_134 = arith.constant 2 : index
    %c0_135 = arith.constant 0 : index
    %111 = vector.load %arg6[%c2_134, %c0_135] : memref<256x128xf32, #tpu.memory_space<vmem>>, vector<252x128xf32>
    %c1_136 = arith.constant 1 : index
    %c2_137 = arith.constant 2 : index
    %c0_138 = arith.constant 0 : index
    %c0_139 = arith.constant 0 : index
    %112 = vector.load %arg2[%c1_136, %c2_137, %c0_138, %c0_139] : memref<2x5x128x128xf32, #tpu.memory_space<vmem>>, vector<1x1x128x128xf32>
    %113 = vector.shape_cast %112 : vector<1x1x128x128xf32> to vector<128x128xf32>
    %cst_140 = arith.constant dense<0.000000e+00> : vector<252x128xf32>
    %114 = tpu.matmul %111, %113, %cst_140 {dimension_numbers = #tpu.dot_dimension_numbers<[1], [0], [0], [1], [0, 0, 1, 1], [], []>} : vector<252x128xf32>, vector<128x128xf32>, vector<252x128xf32> -> vector<252x128xf32>
    %115 = arith.addf %110, %114 : vector<252x128xf32>
    %c3_141 = arith.constant 3 : index
    %c0_142 = arith.constant 0 : index
    %116 = vector.load %arg6[%c3_141, %c0_142] : memref<256x128xf32, #tpu.memory_space<vmem>>, vector<252x128xf32>
    %c1_143 = arith.constant 1 : index
    %c3_144 = arith.constant 3 : index
    %c0_145 = arith.constant 0 : index
    %c0_146 = arith.constant 0 : index
    %117 = vector.load %arg2[%c1_143, %c3_144, %c0_145, %c0_146] : memref<2x5x128x128xf32, #tpu.memory_space<vmem>>, vector<1x1x128x128xf32>
    %118 = vector.shape_cast %117 : vector<1x1x128x128xf32> to vector<128x128xf32>
    %cst_147 = arith.constant dense<0.000000e+00> : vector<252x128xf32>
    %119 = tpu.matmul %116, %118, %cst_147 {dimension_numbers = #tpu.dot_dimension_numbers<[1], [0], [0], [1], [0, 0, 1, 1], [], []>} : vector<252x128xf32>, vector<128x128xf32>, vector<252x128xf32> -> vector<252x128xf32>
    %120 = arith.addf %115, %119 : vector<252x128xf32>
    %c4_148 = arith.constant 4 : index
    %c0_149 = arith.constant 0 : index
    %121 = vector.load %arg6[%c4_148, %c0_149] : memref<256x128xf32, #tpu.memory_space<vmem>>, vector<252x128xf32>
    %c1_150 = arith.constant 1 : index
    %c4_151 = arith.constant 4 : index
    %c0_152 = arith.constant 0 : index
    %c0_153 = arith.constant 0 : index
    %122 = vector.load %arg2[%c1_150, %c4_151, %c0_152, %c0_153] : memref<2x5x128x128xf32, #tpu.memory_space<vmem>>, vector<1x1x128x128xf32>
    %123 = vector.shape_cast %122 : vector<1x1x128x128xf32> to vector<128x128xf32>
    %cst_154 = arith.constant dense<0.000000e+00> : vector<252x128xf32>
    %124 = tpu.matmul %121, %123, %cst_154 {dimension_numbers = #tpu.dot_dimension_numbers<[1], [0], [0], [1], [0, 0, 1, 1], [], []>} : vector<252x128xf32>, vector<128x128xf32>, vector<252x128xf32> -> vector<252x128xf32>
    %125 = arith.addf %120, %124 : vector<252x128xf32>
    %c1_155 = arith.constant 1 : index
    %c0_156 = arith.constant 0 : index
    %126 = vector.load %arg3[%c1_155, %c0_156] : memref<2x128xf32, #tpu.memory_space<vmem>>, vector<1x128xf32>
    %127 = vector.broadcast %126 : vector<1x128xf32> to vector<252x128xf32>
    %128 = arith.addf %125, %127 : vector<252x128xf32>
    %c0_157 = arith.constant 0 : index
    %c0_158 = arith.constant 0 : index
    %c0_159 = arith.constant 0 : index
    %129 = vector.load %arg1[%c0_157, %c0_158, %c0_159] : memref<8x30x128xf32, #tpu.memory_space<vmem>>, vector<1x26x128xf32>
    %130 = vector.shape_cast %129 : vector<1x26x128xf32> to vector<26x128xf32>
    %131 = vector.extract_strided_slice %128 {offsets = [0, 0], sizes = [26, 128], strides = [1, 1]} : vector<252x128xf32> to vector<26x128xf32>
    %132 = arith.addf %130, %131 : vector<26x128xf32>
    %cst_160 = arith.constant 0.000000e+00 : f32
    %133 = vector.broadcast %cst_160 : f32 to vector<26x128xf32>
    %134 = arith.maximumf %132, %133 : vector<26x128xf32>
    %c0_161 = arith.constant 0 : index
    %c0_162 = arith.constant 0 : index
    %c0_163 = arith.constant 0 : index
    %135 = vector.load %arg4[%c0_161, %c0_162, %c0_163] : memref<8x26x128xf32, #tpu.memory_space<vmem>>, vector<1x26x128xf32>
    %136 = vector.shape_cast %135 : vector<1x26x128xf32> to vector<26x128xf32>
    %137 = vector.shape_cast %134 : vector<26x128xf32> to vector<1x26x128xf32>
    tpu.vector_store %arg4[%c0_161, %c0_162, %c0_163], %137 {strides = array<i32>} : memref<8x26x128xf32, #tpu.memory_space<vmem>>, vector<1x26x128xf32>,
    %c1_164 = arith.constant 1 : index
    %c0_165 = arith.constant 0 : index
    %c0_166 = arith.constant 0 : index
    %138 = vector.load %arg1[%c1_164, %c0_165, %c0_166] : memref<8x30x128xf32, #tpu.memory_space<vmem>>, vector<1x26x128xf32>
    %139 = vector.shape_cast %138 : vector<1x26x128xf32> to vector<26x128xf32>
    %140 = vector.extract_strided_slice %128 {offsets = [32, 0], sizes = [26, 128], strides = [1, 1]} : vector<252x128xf32> to vector<26x128xf32>
    %141 = arith.addf %139, %140 : vector<26x128xf32>
    %cst_167 = arith.constant 0.000000e+00 : f32
    %142 = vector.broadcast %cst_167 : f32 to vector<26x128xf32>
    %143 = arith.maximumf %141, %142 : vector<26x128xf32>
    %c1_168 = arith.constant 1 : index
    %c0_169 = arith.constant 0 : index
    %c0_170 = arith.constant 0 : index
    %144 = vector.load %arg4[%c1_168, %c0_169, %c0_170] : memref<8x26x128xf32, #tpu.memory_space<vmem>>, vector<1x26x128xf32>
    %145 = vector.shape_cast %144 : vector<1x26x128xf32> to vector<26x128xf32>
    %146 = vector.shape_cast %143 : vector<26x128xf32> to vector<1x26x128xf32>
    tpu.vector_store %arg4[%c1_168, %c0_169, %c0_170], %146 {strides = array<i32>} : memref<8x26x128xf32, #tpu.memory_space<vmem>>, vector<1x26x128xf32>,
    %c2_171 = arith.constant 2 : index
    %c0_172 = arith.constant 0 : index
    %c0_173 = arith.constant 0 : index
    %147 = vector.load %arg1[%c2_171, %c0_172, %c0_173] : memref<8x30x128xf32, #tpu.memory_space<vmem>>, vector<1x26x128xf32>
    %148 = vector.shape_cast %147 : vector<1x26x128xf32> to vector<26x128xf32>
    %149 = vector.extract_strided_slice %128 {offsets = [64, 0], sizes = [26, 128], strides = [1, 1]} : vector<252x128xf32> to vector<26x128xf32>
    %150 = arith.addf %148, %149 : vector<26x128xf32>
    %cst_174 = arith.constant 0.000000e+00 : f32
    %151 = vector.broadcast %cst_174 : f32 to vector<26x128xf32>
    %152 = arith.maximumf %150, %151 : vector<26x128xf32>
    %c2_175 = arith.constant 2 : index
    %c0_176 = arith.constant 0 : index
    %c0_177 = arith.constant 0 : index
    %153 = vector.load %arg4[%c2_175, %c0_176, %c0_177] : memref<8x26x128xf32, #tpu.memory_space<vmem>>, vector<1x26x128xf32>
    %154 = vector.shape_cast %153 : vector<1x26x128xf32> to vector<26x128xf32>
    %155 = vector.shape_cast %152 : vector<26x128xf32> to vector<1x26x128xf32>
    tpu.vector_store %arg4[%c2_175, %c0_176, %c0_177], %155 {strides = array<i32>} : memref<8x26x128xf32, #tpu.memory_space<vmem>>, vector<1x26x128xf32>,
    %c3_178 = arith.constant 3 : index
    %c0_179 = arith.constant 0 : index
    %c0_180 = arith.constant 0 : index
    %156 = vector.load %arg1[%c3_178, %c0_179, %c0_180] : memref<8x30x128xf32, #tpu.memory_space<vmem>>, vector<1x26x128xf32>
    %157 = vector.shape_cast %156 : vector<1x26x128xf32> to vector<26x128xf32>
    %158 = vector.extract_strided_slice %128 {offsets = [96, 0], sizes = [26, 128], strides = [1, 1]} : vector<252x128xf32> to vector<26x128xf32>
    %159 = arith.addf %157, %158 : vector<26x128xf32>
    %cst_181 = arith.constant 0.000000e+00 : f32
    %160 = vector.broadcast %cst_181 : f32 to vector<26x128xf32>
    %161 = arith.maximumf %159, %160 : vector<26x128xf32>
    %c3_182 = arith.constant 3 : index
    %c0_183 = arith.constant 0 : index
    %c0_184 = arith.constant 0 : index
    %162 = vector.load %arg4[%c3_182, %c0_183, %c0_184] : memref<8x26x128xf32, #tpu.memory_space<vmem>>, vector<1x26x128xf32>
    %163 = vector.shape_cast %162 : vector<1x26x128xf32> to vector<26x128xf32>
    %164 = vector.shape_cast %161 : vector<26x128xf32> to vector<1x26x128xf32>
    tpu.vector_store %arg4[%c3_182, %c0_183, %c0_184], %164 {strides = array<i32>} : memref<8x26x128xf32, #tpu.memory_space<vmem>>, vector<1x26x128xf32>,
    %c4_185 = arith.constant 4 : index
    %c0_186 = arith.constant 0 : index
    %c0_187 = arith.constant 0 : index
    %165 = vector.load %arg1[%c4_185, %c0_186, %c0_187] : memref<8x30x128xf32, #tpu.memory_space<vmem>>, vector<1x26x128xf32>
    %166 = vector.shape_cast %165 : vector<1x26x128xf32> to vector<26x128xf32>
    %167 = vector.extract_strided_slice %128 {offsets = [128, 0], sizes = [26, 128], strides = [1, 1]} : vector<252x128xf32> to vector<26x128xf32>
    %168 = arith.addf %166, %167 : vector<26x128xf32>
    %cst_188 = arith.constant 0.000000e+00 : f32
    %169 = vector.broadcast %cst_188 : f32 to vector<26x128xf32>
    %170 = arith.maximumf %168, %169 : vector<26x128xf32>
    %c4_189 = arith.constant 4 : index
    %c0_190 = arith.constant 0 : index
    %c0_191 = arith.constant 0 : index
    %171 = vector.load %arg4[%c4_189, %c0_190, %c0_191] : memref<8x26x128xf32, #tpu.memory_space<vmem>>, vector<1x26x128xf32>
    %172 = vector.shape_cast %171 : vector<1x26x128xf32> to vector<26x128xf32>
    %173 = vector.shape_cast %170 : vector<26x128xf32> to vector<1x26x128xf32>
    tpu.vector_store %arg4[%c4_189, %c0_190, %c0_191], %173 {strides = array<i32>} : memref<8x26x128xf32, #tpu.memory_space<vmem>>, vector<1x26x128xf32>,
    %c5_192 = arith.constant 5 : index
    %c0_193 = arith.constant 0 : index
    %c0_194 = arith.constant 0 : index
    %174 = vector.load %arg1[%c5_192, %c0_193, %c0_194] : memref<8x30x128xf32, #tpu.memory_space<vmem>>, vector<1x26x128xf32>
    %175 = vector.shape_cast %174 : vector<1x26x128xf32> to vector<26x128xf32>
    %176 = vector.extract_strided_slice %128 {offsets = [160, 0], sizes = [26, 128], strides = [1, 1]} : vector<252x128xf32> to vector<26x128xf32>
    %177 = arith.addf %175, %176 : vector<26x128xf32>
    %cst_195 = arith.constant 0.000000e+00 : f32
    %178 = vector.broadcast %cst_195 : f32 to vector<26x128xf32>
    %179 = arith.maximumf %177, %178 : vector<26x128xf32>
    %c5_196 = arith.constant 5 : index
    %c0_197 = arith.constant 0 : index
    %c0_198 = arith.constant 0 : index
    %180 = vector.load %arg4[%c5_196, %c0_197, %c0_198] : memref<8x26x128xf32, #tpu.memory_space<vmem>>, vector<1x26x128xf32>
    %181 = vector.shape_cast %180 : vector<1x26x128xf32> to vector<26x128xf32>
    %182 = vector.shape_cast %179 : vector<26x128xf32> to vector<1x26x128xf32>
    tpu.vector_store %arg4[%c5_196, %c0_197, %c0_198], %182 {strides = array<i32>} : memref<8x26x128xf32, #tpu.memory_space<vmem>>, vector<1x26x128xf32>,
    %c6_199 = arith.constant 6 : index
    %c0_200 = arith.constant 0 : index
    %c0_201 = arith.constant 0 : index
    %183 = vector.load %arg1[%c6_199, %c0_200, %c0_201] : memref<8x30x128xf32, #tpu.memory_space<vmem>>, vector<1x26x128xf32>
    %184 = vector.shape_cast %183 : vector<1x26x128xf32> to vector<26x128xf32>
    %185 = vector.extract_strided_slice %128 {offsets = [192, 0], sizes = [26, 128], strides = [1, 1]} : vector<252x128xf32> to vector<26x128xf32>
    %186 = arith.addf %184, %185 : vector<26x128xf32>
    %cst_202 = arith.constant 0.000000e+00 : f32
    %187 = vector.broadcast %cst_202 : f32 to vector<26x128xf32>
    %188 = arith.maximumf %186, %187 : vector<26x128xf32>
    %c6_203 = arith.constant 6 : index
    %c0_204 = arith.constant 0 : index
    %c0_205 = arith.constant 0 : index
    %189 = vector.load %arg4[%c6_203, %c0_204, %c0_205] : memref<8x26x128xf32, #tpu.memory_space<vmem>>, vector<1x26x128xf32>
    %190 = vector.shape_cast %189 : vector<1x26x128xf32> to vector<26x128xf32>
    %191 = vector.shape_cast %188 : vector<26x128xf32> to vector<1x26x128xf32>
    tpu.vector_store %arg4[%c6_203, %c0_204, %c0_205], %191 {strides = array<i32>} : memref<8x26x128xf32, #tpu.memory_space<vmem>>, vector<1x26x128xf32>,
    %c7_206 = arith.constant 7 : index
    %c0_207 = arith.constant 0 : index
    %c0_208 = arith.constant 0 : index
    %192 = vector.load %arg1[%c7_206, %c0_207, %c0_208] : memref<8x30x128xf32, #tpu.memory_space<vmem>>, vector<1x26x128xf32>
    %193 = vector.shape_cast %192 : vector<1x26x128xf32> to vector<26x128xf32>
    %194 = vector.extract_strided_slice %128 {offsets = [224, 0], sizes = [26, 128], strides = [1, 1]} : vector<252x128xf32> to vector<26x128xf32>
    %195 = arith.addf %193, %194 : vector<26x128xf32>
    %cst_209 = arith.constant 0.000000e+00 : f32
    %196 = vector.broadcast %cst_209 : f32 to vector<26x128xf32>
    %197 = arith.maximumf %195, %196 : vector<26x128xf32>
    %c7_210 = arith.constant 7 : index
    %c0_211 = arith.constant 0 : index
    %c0_212 = arith.constant 0 : index
    %198 = vector.load %arg4[%c7_210, %c0_211, %c0_212] : memref<8x26x128xf32, #tpu.memory_space<vmem>>, vector<1x26x128xf32>
    %199 = vector.shape_cast %198 : vector<1x26x128xf32> to vector<26x128xf32>
    %200 = vector.shape_cast %197 : vector<26x128xf32> to vector<1x26x128xf32>
    tpu.vector_store %arg4[%c7_210, %c0_211, %c0_212], %200 {strides = array<i32>} : memref<8x26x128xf32, #tpu.memory_space<vmem>>, vector<1x26x128xf32>,
    return
  }
  func.func @transform_0(%arg0: i32) -> (i32, i32, i32) {
    %c0_i32 = arith.constant 0 : i32
    %c0_i32_0 = arith.constant 0 : i32
    %c0_i32_1 = arith.constant 0 : i32
    return %arg0, %c0_i32, %c0_i32_0 : i32, i32, i32
  }
  func.func @transform_1(%arg0: i32) -> (i32, i32, i32, i32) {
    %c0_i32 = arith.constant 0 : i32
    %c0_i32_0 = arith.constant 0 : i32
    %c0_i32_1 = arith.constant 0 : i32
    %c0_i32_2 = arith.constant 0 : i32
    %c0_i32_3 = arith.constant 0 : i32
    return %c0_i32, %c0_i32_0, %c0_i32_1, %c0_i32_2 : i32, i32, i32, i32
  }
  func.func @transform_2(%arg0: i32) -> (i32, i32) {
    %c0_i32 = arith.constant 0 : i32
    %c0_i32_0 = arith.constant 0 : i32
    %c0_i32_1 = arith.constant 0 : i32
    return %c0_i32, %c0_i32_0 : i32, i32
  }
  func.func @transform_3(%arg0: i32) -> (i32, i32, i32) {
    %c0_i32 = arith.constant 0 : i32
    %c0_i32_0 = arith.constant 0 : i32
    %c0_i32_1 = arith.constant 0 : i32
    return %arg0, %c0_i32, %c0_i32_0 : i32, i32, i32
  }
}

</mosaic_0001>

<llo_original>
// kernel: tpu_custom_call.1
$region0: #{tpu_custom_call.1}
  #allocation0 [shape = 'u32[]', space=smem, size = 0x4, offset = 0x4, fixed_abs, tag = 'smem constant byte address 0x4 - core index']
  #allocation1 [shape = 'u32[72,128]{1,0:T(1,128)}', space=vmem, size = 0x9000, scoped, tag = 'internal scratch']
  #allocation2 [shape = 'f32[256,128]{1,0:T(8,128)}', space=vmem, size = 0x20000, scoped, tag = 'scratch operand']
  #allocation3 [shape = 'f32[256,128]{1,0:T(8,128)}', space=vmem, size = 0x20000, scoped, tag = 'scratch operand']
  %s0 = inlined_call_operand.vmem [shape: f32[32,30,128], index: 0, kind: input, shape index: {}]
  %s1 = inlined_call_operand.vmem [shape: f32[2,5,128,128], index: 1, kind: input, shape index: {}]
  %s2 = inlined_call_operand.vmem [shape: f32[2,128], index: 2, kind: input, shape index: {}]
  %s3 = inlined_call_operand.vmem [shape: f32[32,26,128], index: 3, kind: output, shape index: {}]
  %s4 = sld [smem:[#allocation0]]
  $region45: #{tpu_custom_call.1} parent=0
    _
  %s6 = ssub.s32 1, %s4
  %s7 = scalar_select 0, %s6, %s4
  loop: start=0, step=1, limit=6
  $region2: #{tpu_custom_call.1} parent=0 // loop_pre_header
    _
  $region3: #{tpu_custom_call.1} parent=0 // loop_header
    %s9 = sphi 0, %s13
    %p10 = scmp.ge.s32.totalorder %s9, 6
    %s19 = sphi 0, %s21
    %s22 = sphi 0, %s19
    %s23 = sphi 0, %s22
    %s39 = sphi 0, %s23
    %s43 = sphi 0, %s43
    %s45 = sphi 0, %s43
    %s46 = sphi 0, %s45
    %s60 = sphi 0, %s46
    %s64 = sphi 0, %s64
    %s66 = sphi 0, %s64
    %s67 = sphi 0, %s66
    %s81 = sphi 0, %s67
    %s87 = sphi 0, %s89
    %s90 = sphi 0, %s87
    %s91 = sphi 0, %s90
    %s107 = sphi 0, %s91
  $region4: #{tpu_custom_call.1} parent=0 // loop_header_branch
    %12 = sbr.rel (%p10) target = $region8
  $region5: #{tpu_custom_call.1} parent=0 // loop_body
    %s14 = ssub.s32 %s9, 1
    %s15 = ssub.s32 %s9, 2
    %s16 = sadd.s32 %s9, 1
    %s17 = ssub.s32 %s9, %s16
    %p18 = scmp.eq.s32.totalorder %s17, 0
    %s20 = sadd.s32 %s19, 1
    %s21 = scalar_select %p18, %s19, %s20
    %p24 = pneg %p18
    %p25 = scmp.eq.s32.totalorder %s9, 3
    %p26 = por %p24, %p25
    %p27 = scmp.ne.s32.totalorder %s19, %s22
    %p28 = scmp.eq.s32.totalorder %s9, 0
    %p29 = por %p27, %p28
    %p30 = scmp.ne.s32.totalorder %s19, %s22
    %p31 = scmp.eq.s32.totalorder %s14, 3
    %p32 = por %p30, %p31
    %p33 = scmp.ne.s32.totalorder %s22, %s23
    %p34 = scmp.eq.s32.totalorder %s14, 0
    %p35 = por %p33, %p34
    %p36 = scmp.ne.s32.totalorder %s22, %s23
    %p37 = scmp.eq.s32.totalorder %s15, 3
    %p38 = por %p36, %p37
    %p40 = scmp.ne.s32.totalorder %s23, %s39
    %p41 = scmp.eq.s32.totalorder %s15, 0
    %p42 = por %p40, %p41
    %s44 = sadd.s32 %s43, 1
    %p47 = scmp.eq.s32.totalorder %s9, 3
    %p48 = scmp.ne.s32.totalorder %s43, %s45
    %p49 = scmp.eq.s32.totalorder %s9, 0
    %p50 = por %p48, %p49
    %p51 = scmp.ne.s32.totalorder %s43, %s45
    %p52 = scmp.eq.s32.totalorder %s14, 3
    %p53 = por %p51, %p52
    %p54 = scmp.ne.s32.totalorder %s45, %s46
    %p55 = scmp.eq.s32.totalorder %s14, 0
    %p56 = por %p54, %p55
    %p57 = scmp.ne.s32.totalorder %s45, %s46
    %p58 = scmp.eq.s32.totalorder %s15, 3
    %p59 = por %p57, %p58
    %p61 = scmp.ne.s32.totalorder %s46, %s60
    %p62 = scmp.eq.s32.totalorder %s15, 0
    %p63 = por %p61, %p62
    %s65 = sadd.s32 %s64, 1
    %p68 = scmp.eq.s32.totalorder %s9, 3
    %p69 = scmp.ne.s32.totalorder %s64, %s66
    %p70 = scmp.eq.s32.totalorder %s9, 0
    %p71 = por %p69, %p70
    %p72 = scmp.ne.s32.totalorder %s64, %s66
    %p73 = scmp.eq.s32.totalorder %s14, 3
    %p74 = por %p72, %p73
    %p75 = scmp.ne.s32.totalorder %s66, %s67
    %p76 = scmp.eq.s32.totalorder %s14, 0
    %p77 = por %p75, %p76
    %p78 = scmp.ne.s32.totalorder %s66, %s67
    %p79 = scmp.eq.s32.totalorder %s15, 3
    %p80 = por %p78, %p79
    %p82 = scmp.ne.s32.totalorder %s67, %s81
    %p83 = scmp.eq.s32.totalorder %s15, 0
    %p84 = por %p82, %p83
    %s85 = ssub.s32 %s9, %s16
    %p86 = scmp.eq.s32.totalorder %s85, 0
    %s88 = sadd.s32 %s87, 1
    %s89 = scalar_select %p86, %s87, %s88
    %p92 = pneg %p86
    %p93 = scmp.eq.s32.totalorder %s9, 3
    %p94 = por %p92, %p93
    %p95 = scmp.ne.s32.totalorder %s87, %s90
    %p96 = scmp.eq.s32.totalorder %s9, 0
    %p97 = por %p95, %p96
    %p98 = scmp.ne.s32.totalorder %s87, %s90
    %p99 = scmp.eq.s32.totalorder %s14, 3
    %p100 = por %p98, %p99
    %p101 = scmp.ne.s32.totalorder %s90, %s91
    %p102 = scmp.eq.s32.totalorder %s14, 0
    %p103 = por %p101, %p102
    %p104 = scmp.ne.s32.totalorder %s90, %s91
    %p105 = scmp.eq.s32.totalorder %s15, 3
    %p106 = por %p104, %p105
    %p108 = scmp.ne.s32.totalorder %s91, %s107
    %p109 = scmp.eq.s32.totalorder %s15, 0
    %p110 = por %p108, %p109
    %p111 = scmp.le.s32.totalorder 1, %s9
    %p112 = scmp.lt.s32.totalorder %s9, 5
    %p113 = pnand %p111, %p112
    %p114 = pneg %p113
    // Predicated region
    $region9: #{tpu_custom_call.1} parent=5 // pred_check
      _
    $region10: #{tpu_custom_call.1} parent=5 // pred_check_branch
      %116 = sbr.rel (%p113) target = $region12
    $region11: #{tpu_custom_call.1} parent=5 // pred_region
      %s117 = ssub.s32 %s9, 1
      // Predicated region
      $region13: #{tpu_custom_call.1} parent=11 // pred_check
        %p118 = pneg %p56
      $region14: #{tpu_custom_call.1} parent=11 // pred_check_branch
        %120 = sbr.rel (%p118) target = $region16
      $region15: #{tpu_custom_call.1} parent=11 // pred_region
        _
      $region16: #{tpu_custom_call.1} parent=11 // pred_fallthru
        _
      // Predicated region
      $region17: #{tpu_custom_call.1} parent=11 // pred_check
        %p121 = pneg %p77
      $region18: #{tpu_custom_call.1} parent=11 // pred_check_branch
        %123 = sbr.rel (%p121) target = $region20
      $region19: #{tpu_custom_call.1} parent=11 // pred_region
        _
      $region20: #{tpu_custom_call.1} parent=11 // pred_fallthru
        _
    $region12: #{tpu_custom_call.1} parent=5 // pred_fallthru
      _
    %p124 = scmp.lt.s32.totalorder %s9, 4
    // Predicated region
    $region21: #{tpu_custom_call.1} parent=5 // pred_check
      %p125 = pneg %p124
    $region22: #{tpu_custom_call.1} parent=5 // pred_check_branch
      %127 = sbr.rel (%p125) target = $region24
    $region23: #{tpu_custom_call.1} parent=5 // pred_region
      // Predicated region
      $region25: #{tpu_custom_call.1} parent=23 // pred_check
        %p128 = pneg %p29
      $region26: #{tpu_custom_call.1} parent=23 // pred_check_branch
        %130 = sbr.rel (%p128) target = $region28
      $region27: #{tpu_custom_call.1} parent=23 // pred_region
        %s131 = smul.u32 8, %s9
        %p132 = scmp.lt.s32.totalorder %s131, 31
        %s133 = scalar_select %p132, %s131, 31
        %s134 = smul.addr %s133, 4
        %s135 = smul.addr %s134, 8
        %s136 = scalar_lea.vmem %s0, %s135
        %s137 = smul.u32 8, %s9
      $region28: #{tpu_custom_call.1} parent=23 // pred_fallthru
        _
    $region24: #{tpu_custom_call.1} parent=5 // pred_fallthru
      _
    %p138 = scmp.le.s32.totalorder 1, %s9
    %p139 = scmp.lt.s32.totalorder %s9, 5
    %p140 = pnand %p138, %p139
    %p141 = pneg %p140
    // Predicated region
    $region29: #{tpu_custom_call.1} parent=5 // pred_check
      _
    $region30: #{tpu_custom_call.1} parent=5 // pred_check_branch
      %143 = sbr.rel (%p140) target = $region32
    $region31: #{tpu_custom_call.1} parent=5 // pred_region
      %s144 = ssub.s32 %s9, 1
      %s145 = smul.u32 8, %s14
      %p146 = scmp.lt.s32.totalorder %s145, 31
      %s147 = scalar_select %p146, %s145, 31
      %s148 = smul.addr %s147, 4
      %s149 = smul.addr %s148, 8
      %s150 = scalar_lea.vmem %s0, %s149
      %p151 = pneg %p35
      %p152 = pneg %p32
      %p153 = pneg %p56
      %p154 = pneg %p53
      %p155 = pneg %p77
      %p156 = pneg %p74
      %p157 = pneg %p103
      %p158 = pneg %p100
      %s159 = smul.u32 8, %s14
      %p160 = scmp.lt.s32.totalorder %s159, 31
      %s161 = scalar_select %p160, %s159, 31
      %s162 = smul.addr %s161, 4
      %s163 = smul.addr %s162, 8
      %s164 = scalar_lea.vmem %s3, %s163
      %s165 = smul.u32 8, %s14
      %p166 = scmp.lt.s32.totalorder %s165, 31
      %s167 = scalar_select %p166, %s165, 31
      %s168 = smul.addr %s167, 4
      %s169 = smul.addr %s168, 8
      %s170 = scalar_lea.vmem %s0, %s169
      %s171 = smul.u32 8, %s14
      %s172 = smul.u32 8, %s14
      %p173 = scmp.lt.s32.totalorder %s172, 31
      %s174 = scalar_select %p173, %s172, 31
      %s175 = smul.addr %s174, 4
      %s176 = smul.addr %s175, 8
      %s177 = scalar_lea.vmem %s3, %s176
      %s178 = smul.u32 8, %s14
      %179 = vst [vmem:[#allocation2] sm:$0x1] 0.0
      %v180 = vld [vmem:[%s170] sm:$0xff]
      %v181 = vld [vmem:[%s170 + $0x8] sm:$0xff]
      %v182 = vld [vmem:[%s170 + $0x10] sm:$0xff]
      %v183 = vld [vmem:[%s170 + $0x18] sm:$0x3f]
      %184 = vst [vmem:[#allocation2 + $0x1] sm:$0xff] %v180
      %185 = vst [vmem:[#allocation2 + $0x9] sm:$0xff] %v181
      %186 = vst [vmem:[#allocation2 + $0x11] sm:$0xff] %v182
      %187 = vst [vmem:[#allocation2 + $0x19] sm:$0x3f] %v183
      %188 = vst [vmem:[#allocation2 + $0x1f] sm:$0x1] 0.0
      %189 = vst [vmem:[#allocation2 + $0x20] sm:$0x1] 0.0
      %s190 = scalar_lea.vmem %s170, 32
      %v191 = vld [vmem:[%s190] sm:$0xff]
      %v192 = vld [vmem:[%s190 + $0x8] sm:$0xff]
      %v193 = vld [vmem:[%s190 + $0x10] sm:$0xff]
      %v194 = vld [vmem:[%s190 + $0x18] sm:$0x3f]
      %195 = vst [vmem:[#allocation2 + $0x21] sm:$0xff] %v191
      %196 = vst [vmem:[#allocation2 + $0x29] sm:$0xff] %v192
      %197 = vst [vmem:[#allocation2 + $0x31] sm:$0xff] %v193
      %198 = vst [vmem:[#allocation2 + $0x39] sm:$0x3f] %v194
      %199 = vst [vmem:[#allocation2 + $0x3f] sm:$0x1] 0.0
      %200 = vst [vmem:[#allocation2 + $0x40] sm:$0x1] 0.0
      %s201 = scalar_lea.vmem %s170, 64
      %v202 = vld [vmem:[%s201] sm:$0xff]
      %v203 = vld [vmem:[%s201 + $0x8] sm:$0xff]
      %v204 = vld [vmem:[%s201 + $0x10] sm:$0xff]
      %v205 = vld [vmem:[%s201 + $0x18] sm:$0x3f]
      %206 = vst [vmem:[#allocation2 + $0x41] sm:$0xff] %v202
      %207 = vst [vmem:[#allocation2 + $0x49] sm:$0xff] %v203
      %208 = vst [vmem:[#allocation2 + $0x51] sm:$0xff] %v204
      %209 = vst [vmem:[#allocation2 + $0x59] sm:$0x3f] %v205
      %210 = vst [vmem:[#allocation2 + $0x5f] sm:$0x1] 0.0
      %211 = vst [vmem:[#allocation2 + $0x60] sm:$0x1] 0.0
      %s212 = scalar_lea.vmem %s170, 96
      %v213 = vld [vmem:[%s212] sm:$0xff]
      %v214 = vld [vmem:[%s212 + $0x8] sm:$0xff]
      %v215 = vld [vmem:[%s212 + $0x10] sm:$0xff]
      %v216 = vld [vmem:[%s212 + $0x18] sm:$0x3f]
      %217 = vst [vmem:[#allocation2 + $0x61] sm:$0xff] %v213
      %218 = vst [vmem:[#allocation2 + $0x69] sm:$0xff] %v214
      %219 = vst [vmem:[#allocation2 + $0x71] sm:$0xff] %v215
      %220 = vst [vmem:[#allocation2 + $0x79] sm:$0x3f] %v216
      %221 = vst [vmem:[#allocation2 + $0x7f] sm:$0x1] 0.0
      %222 = vst [vmem:[#allocation2 + $0x80] sm:$0x1] 0.0
      %s223 = scalar_lea.vmem %s170, 128
      %v224 = vld [vmem:[%s223] sm:$0xff]
      %v225 = vld [vmem:[%s223 + $0x8] sm:$0xff]
      %v226 = vld [vmem:[%s223 + $0x10] sm:$0xff]
      %v227 = vld [vmem:[%s223 + $0x18] sm:$0x3f]
      %228 = vst [vmem:[#allocation2 + $0x81] sm:$0xff] %v224
      %229 = vst [vmem:[#allocation2 + $0x89] sm:$0xff] %v225
      %230 = vst [vmem:[#allocation2 + $0x91] sm:$0xff] %v226
      %231 = vst [vmem:[#allocation2 + $0x99] sm:$0x3f] %v227
      %232 = vst [vmem:[#allocation2 + $0x9f] sm:$0x1] 0.0
      %233 = vst [vmem:[#allocation2 + $0xa0] sm:$0x1] 0.0
      %s234 = scalar_lea.vmem %s170, 160
      %v235 = vld [vmem:[%s234] sm:$0xff]
      %v236 = vld [vmem:[%s234 + $0x8] sm:$0xff]
      %v237 = vld [vmem:[%s234 + $0x10] sm:$0xff]
      %v238 = vld [vmem:[%s234 + $0x18] sm:$0x3f]
      %239 = vst [vmem:[#allocation2 + $0xa1] sm:$0xff] %v235
      %240 = vst [vmem:[#allocation2 + $0xa9] sm:$0xff] %v236
      %241 = vst [vmem:[#allocation2 + $0xb1] sm:$0xff] %v237
      %242 = vst [vmem:[#allocation2 + $0xb9] sm:$0x3f] %v238
      %243 = vst [vmem:[#allocation2 + $0xbf] sm:$0x1] 0.0
      %244 = vst [vmem:[#allocation2 + $0xc0] sm:$0x1] 0.0
      %s245 = scalar_lea.vmem %s170, 192
      %v246 = vld [vmem:[%s245] sm:$0xff]
      %v247 = vld [vmem:[%s245 + $0x8] sm:$0xff]
      %v248 = vld [vmem:[%s245 + $0x10] sm:$0xff]
      %v249 = vld [vmem:[%s245 + $0x18] sm:$0x3f]
      %250 = vst [vmem:[#allocation2 + $0xc1] sm:$0xff] %v246
      %251 = vst [vmem:[#allocation2 + $0xc9] sm:$0xff] %v247
      %252 = vst [vmem:[#allocation2 + $0xd1] sm:$0xff] %v248
      %253 = vst [vmem:[#allocation2 + $0xd9] sm:$0x3f] %v249
      %254 = vst [vmem:[#allocation2 + $0xdf] sm:$0x1] 0.0
      %255 = vst [vmem:[#allocation2 + $0xe0] sm:$0x1] 0.0
      %s256 = scalar_lea.vmem %s170, 224
      %v257 = vld [vmem:[%s256] sm:$0xff]
      %v258 = vld [vmem:[%s256 + $0x8] sm:$0xff]
      %v259 = vld [vmem:[%s256 + $0x10] sm:$0xff]
      %v260 = vld [vmem:[%s256 + $0x18] sm:$0x3f]
      %261 = vst [vmem:[#allocation2 + $0xe1] sm:$0xff] %v257
      %262 = vst [vmem:[#allocation2 + $0xe9] sm:$0xff] %v258
      %263 = vst [vmem:[#allocation2 + $0xf1] sm:$0xff] %v259
      %264 = vst [vmem:[#allocation2 + $0xf9] sm:$0x3f] %v260
      %265 = vst [vmem:[#allocation2 + $0xff] sm:$0x1] 0.0
      %v266 = vld [vmem:[#allocation2] sm:$0xff]
      %v267 = vld [vmem:[#allocation2 + $0x8] sm:$0xff]
      %v268 = vld [vmem:[#allocation2 + $0x10] sm:$0xff]
      %v269 = vld [vmem:[#allocation2 + $0x18] sm:$0xff]
      %v270 = vld [vmem:[#allocation2 + $0x20] sm:$0xff]
      %v271 = vld [vmem:[#allocation2 + $0x28] sm:$0xff]
      %v272 = vld [vmem:[#allocation2 + $0x30] sm:$0xff]
      %v273 = vld [vmem:[#allocation2 + $0x38] sm:$0xff]
      %v274 = vld [vmem:[#allocation2 + $0x40] sm:$0xff]
      %v275 = vld [vmem:[#allocation2 + $0x48] sm:$0xff]
      %v276 = vld [vmem:[#allocation2 + $0x50] sm:$0xff]
      %v277 = vld [vmem:[#allocation2 + $0x58] sm:$0xff]
      %v278 = vld [vmem:[#allocation2 + $0x60] sm:$0xff]
      %v279 = vld [vmem:[#allocation2 + $0x68] sm:$0xff]
      %v280 = vld [vmem:[#allocation2 + $0x70] sm:$0xff]
      %v281 = vld [vmem:[#allocation2 + $0x78] sm:$0xff]
      %v282 = vld [vmem:[#allocation2 + $0x80] sm:$0xff]
      %v283 = vld [vmem:[#allocation2 + $0x88] sm:$0xff]
      %v284 = vld [vmem:[#allocation2 + $0x90] sm:$0xff]
      %v285 = vld [vmem:[#allocation2 + $0x98] sm:$0xff]
      %v286 = vld [vmem:[#allocation2 + $0xa0] sm:$0xff]
      %v287 = vld [vmem:[#allocation2 + $0xa8] sm:$0xff]
      %v288 = vld [vmem:[#allocation2 + $0xb0] sm:$0xff]
      %v289 = vld [vmem:[#allocation2 + $0xb8] sm:$0xff]
      %v290 = vld [vmem:[#allocation2 + $0xc0] sm:$0xff]
      %v291 = vld [vmem:[#allocation2 + $0xc8] sm:$0xff]
      %v292 = vld [vmem:[#allocation2 + $0xd0] sm:$0xff]
      %v293 = vld [vmem:[#allocation2 + $0xd8] sm:$0xff]
      %v294 = vld [vmem:[#allocation2 + $0xe0] sm:$0xff]
      %v295 = vld [vmem:[#allocation2 + $0xe8] sm:$0xff]
      %v296 = vld [vmem:[#allocation2 + $0xf0] sm:$0xff]
      %v297 = vld [vmem:[#allocation2 + $0xf8] sm:$0xf]
      %v298 = vld [vmem:[%s1] sm:$0xff]
      %v299 = vld [vmem:[%s1 + $0x8] sm:$0xff]
      %v300 = vld [vmem:[%s1 + $0x10] sm:$0xff]
      %v301 = vld [vmem:[%s1 + $0x18] sm:$0xff]
      %v302 = vld [vmem:[%s1 + $0x20] sm:$0xff]
      %v303 = vld [vmem:[%s1 + $0x28] sm:$0xff]
      %v304 = vld [vmem:[%s1 + $0x30] sm:$0xff]
      %v305 = vld [vmem:[%s1 + $0x38] sm:$0xff]
      %v306 = vld [vmem:[%s1 + $0x40] sm:$0xff]
      %v307 = vld [vmem:[%s1 + $0x48] sm:$0xff]
      %v308 = vld [vmem:[%s1 + $0x50] sm:$0xff]
      %v309 = vld [vmem:[%s1 + $0x58] sm:$0xff]
      %v310 = vld [vmem:[%s1 + $0x60] sm:$0xff]
      %v311 = vld [vmem:[%s1 + $0x68] sm:$0xff]
      %v312 = vld [vmem:[%s1 + $0x70] sm:$0xff]
      %v313 = vld [vmem:[%s1 + $0x78] sm:$0xff]
      %v314 = vld [vmem:[#allocation2 + $0x1] sm:$0xff]
      %v315 = vld [vmem:[#allocation2 + $0x9] sm:$0xff]
      %v316 = vld [vmem:[#allocation2 + $0x11] sm:$0xff]
      %v317 = vld [vmem:[#allocation2 + $0x19] sm:$0xff]
      %v318 = vld [vmem:[#allocation2 + $0x21] sm:$0xff]
      %v319 = vld [vmem:[#allocation2 + $0x29] sm:$0xff]
      %v320 = vld [vmem:[#allocation2 + $0x31] sm:$0xff]
      %v321 = vld [vmem:[#allocation2 + $0x39] sm:$0xff]
      %v322 = vld [vmem:[#allocation2 + $0x41] sm:$0xff]
      %v323 = vld [vmem:[#allocation2 + $0x49] sm:$0xff]
      %v324 = vld [vmem:[#allocation2 + $0x51] sm:$0xff]
      %v325 = vld [vmem:[#allocation2 + $0x59] sm:$0xff]
      %v326 = vld [vmem:[#allocation2 + $0x61] sm:$0xff]
      %v327 = vld [vmem:[#allocation2 + $0x69] sm:$0xff]
      %v328 = vld [vmem:[#allocation2 + $0x71] sm:$0xff]
      %v329 = vld [vmem:[#allocation2 + $0x79] sm:$0xff]
      %v330 = vld [vmem:[#allocation2 + $0x81] sm:$0xff]
      %v331 = vld [vmem:[#allocation2 + $0x89] sm:$0xff]
      %v332 = vld [vmem:[#allocation2 + $0x91] sm:$0xff]
      %v333 = vld [vmem:[#allocation2 + $0x99] sm:$0xff]
      %v334 = vld [vmem:[#allocation2 + $0xa1] sm:$0xff]
      %v335 = vld [vmem:[#allocation2 + $0xa9] sm:$0xff]
      %v336 = vld [vmem:[#allocation2 + $0xb1] sm:$0xff]
      %v337 = vld [vmem:[#allocation2 + $0xb9] sm:$0xff]
      %v338 = vld [vmem:[#allocation2 + $0xc1] sm:$0xff]
      %v339 = vld [vmem:[#allocation2 + $0xc9] sm:$0xff]
      %v340 = vld [vmem:[#allocation2 + $0xd1] sm:$0xff]
      %v341 = vld [vmem:[#allocation2 + $0xd9] sm:$0xff]
      %v342 = vld [vmem:[#allocation2 + $0xe1] sm:$0xff]
      %v343 = vld [vmem:[#allocation2 + $0xe9] sm:$0xff]
      %v344 = vld [vmem:[#allocation2 + $0xf1] sm:$0xff]
      %v345 = vld [vmem:[#allocation2 + $0xf9] sm:$0xf]
      %s346 = scalar_lea.vmem %s1, 128
      %v347 = vld [vmem:[%s346] sm:$0xff]
      %v348 = vld [vmem:[%s346 + $0x8] sm:$0xff]
      %v349 = vld [vmem:[%s346 + $0x10] sm:$0xff]
      %v350 = vld [vmem:[%s346 + $0x18] sm:$0xff]
      %v351 = vld [vmem:[%s346 + $0x20] sm:$0xff]
      %v352 = vld [vmem:[%s346 + $0x28] sm:$0xff]
      %v353 = vld [vmem:[%s346 + $0x30] sm:$0xff]
      %v354 = vld [vmem:[%s346 + $0x38] sm:$0xff]
      %v355 = vld [vmem:[%s346 + $0x40] sm:$0xff]
      %v356 = vld [vmem:[%s346 + $0x48] sm:$0xff]
      %v357 = vld [vmem:[%s346 + $0x50] sm:$0xff]
      %v358 = vld [vmem:[%s346 + $0x58] sm:$0xff]
      %v359 = vld [vmem:[%s346 + $0x60] sm:$0xff]
      %v360 = vld [vmem:[%s346 + $0x68] sm:$0xff]
      %v361 = vld [vmem:[%s346 + $0x70] sm:$0xff]
      %v362 = vld [vmem:[%s346 + $0x78] sm:$0xff]
      %363 = vmatpush.msra.mxu0 %v362
      %364 = vmatpush.msra.mxu0 %v361
      %365 = vmatpush.msra.mxu0 %v360
      %366 = vmatpush.msra.mxu0 %v359
      %367 = vmatpush.msra.mxu0 %v358
      %368 = vmatpush.msra.mxu0 %v357
      %369 = vmatpush.msra.mxu0 %v356
      %370 = vmatpush.msra.mxu0 %v355
      %371 = vmatpush.msra.mxu0 %v354
      %372 = vmatpush.msra.mxu0 %v353
      %373 = vmatpush.msra.mxu0 %v352
      %374 = vmatpush.msra.mxu0 %v351
      %375 = vmatpush.msra.mxu0 %v350
      %376 = vmatpush.msra.mxu0 %v349
      %377 = vmatpush.msra.mxu0 %v348
      %378 = vmatpush.msra.mxu0 %v347
      %379 = vmatmul.f32.gmra.mxu0 %v314
      %v380 = vpop.f32.mrf.mxu0
      %v381 = vadd.f32 0.0, %v380
      %382 = vmatmul.f32.gmra.mxu0 %v315
      %v383 = vpop.f32.mrf.mxu0
      %v384 = vadd.f32 0.0, %v383
      %385 = vmatmul.f32.gmra.mxu0 %v316
      %v386 = vpop.f32.mrf.mxu0
      %v387 = vadd.f32 0.0, %v386
      %388 = vmatmul.f32.gmra.mxu0 %v317
      %v389 = vpop.f32.mrf.mxu0
      %v390 = vadd.f32 0.0, %v389
      %391 = vmatmul.f32.gmra.mxu0 %v318
      %v392 = vpop.f32.mrf.mxu0
      %v393 = vadd.f32 0.0, %v392
      %394 = vmatmul.f32.gmra.mxu0 %v319
      %v395 = vpop.f32.mrf.mxu0
      %v396 = vadd.f32 0.0, %v395
      %397 = vmatmul.f32.gmra.mxu0 %v320
      %v398 = vpop.f32.mrf.mxu0
      %v399 = vadd.f32 0.0, %v398
      %400 = vmatmul.f32.gmra.mxu0 %v321
      %v401 = vpop.f32.mrf.mxu0
      %v402 = vadd.f32 0.0, %v401
      %403 = vmatmul.f32.gmra.mxu0 %v322
      %v404 = vpop.f32.mrf.mxu0
      %v405 = vadd.f32 0.0, %v404
      %406 = vmatmul.f32.gmra.mxu0 %v323
      %v407 = vpop.f32.mrf.mxu0
      %v408 = vadd.f32 0.0, %v407
      %409 = vmatmul.f32.gmra.mxu0 %v324
      %v410 = vpop.f32.mrf.mxu0
      %v411 = vadd.f32 0.0, %v410
      %412 = vmatmul.f32.gmra.mxu0 %v325
      %v413 = vpop.f32.mrf.mxu0
      %v414 = vadd.f32 0.0, %v413
      %415 = vmatmul.f32.gmra.mxu0 %v326
      %v416 = vpop.f32.mrf.mxu0
      %v417 = vadd.f32 0.0, %v416
      %418 = vmatmul.f32.gmra.mxu0 %v327
      %v419 = vpop.f32.mrf.mxu0
      %v420 = vadd.f32 0.0, %v419
      %421 = vmatmul.f32.gmra.mxu0 %v328
      %v422 = vpop.f32.mrf.mxu0
      %v423 = vadd.f32 0.0, %v422
      %424 = vmatmul.f32.gmra.mxu0 %v329
      %v425 = vpop.f32.mrf.mxu0
      %v426 = vadd.f32 0.0, %v425
      %427 = vmatmul.f32.gmra.mxu0 %v330
      %v428 = vpop.f32.mrf.mxu0
      %v429 = vadd.f32 0.0, %v428
      %430 = vmatmul.f32.gmra.mxu0 %v331
      %v431 = vpop.f32.mrf.mxu0
      %v432 = vadd.f32 0.0, %v431
      %433 = vmatmul.f32.gmra.mxu0 %v332
      %v434 = vpop.f32.mrf.mxu0
      %v435 = vadd.f32 0.0, %v434
      %436 = vmatmul.f32.gmra.mxu0 %v333
      %v437 = vpop.f32.mrf.mxu0
      %v438 = vadd.f32 0.0, %v437
      %439 = vmatmul.f32.gmra.mxu0 %v334
      %v440 = vpop.f32.mrf.mxu0
      %v441 = vadd.f32 0.0, %v440
      %442 = vmatmul.f32.gmra.mxu0 %v335
      %v443 = vpop.f32.mrf.mxu0
      %v444 = vadd.f32 0.0, %v443
      %445 = vmatmul.f32.gmra.mxu0 %v336
      %v446 = vpop.f32.mrf.mxu0
      %v447 = vadd.f32 0.0, %v446
      %448 = vmatmul.f32.gmra.mxu0 %v337
      %v449 = vpop.f32.mrf.mxu0
      %v450 = vadd.f32 0.0, %v449
      %451 = vmatmul.f32.gmra.mxu0 %v338
      %v452 = vpop.f32.mrf.mxu0
      %v453 = vadd.f32 0.0, %v452
      %454 = vmatmul.f32.gmra.mxu0 %v339
      %v455 = vpop.f32.mrf.mxu0
      %v456 = vadd.f32 0.0, %v455
      %457 = vmatmul.f32.gmra.mxu0 %v340
      %v458 = vpop.f32.mrf.mxu0
      %v459 = vadd.f32 0.0, %v458
      %460 = vmatmul.f32.gmra.mxu0 %v341
      %v461 = vpop.f32.mrf.mxu0
      %v462 = vadd.f32 0.0, %v461
      %463 = vmatmul.f32.gmra.mxu0 %v342
      %v464 = vpop.f32.mrf.mxu0
      %v465 = vadd.f32 0.0, %v464
      %466 = vmatmul.f32.gmra.mxu0 %v343
      %v467 = vpop.f32.mrf.mxu0
      %v468 = vadd.f32 0.0, %v467
      %469 = vmatmul.f32.gmra.mxu0 %v344
      %v470 = vpop.f32.mrf.mxu0
      %v471 = vadd.f32 0.0, %v470
      %472 = vmatmul.f32.gmra.mxu0 %v345
      %v473 = vpop.f32.mrf.mxu0
      %v474 = vadd.f32 0.0, %v473
      %475 = vdwg.mxu0
      %476 = vmatpush.msra.mxu0 %v313
      %477 = vmatpush.msra.mxu0 %v312
      %478 = vmatpush.msra.mxu0 %v311
      %479 = vmatpush.msra.mxu0 %v310
      %480 = vmatpush.msra.mxu0 %v309
      %481 = vmatpush.msra.mxu0 %v308
      %482 = vmatpush.msra.mxu0 %v307
      %483 = vmatpush.msra.mxu0 %v306
      %484 = vmatpush.msra.mxu0 %v305
      %485 = vmatpush.msra.mxu0 %v304
      %486 = vmatpush.msra.mxu0 %v303
      %487 = vmatpush.msra.mxu0 %v302
      %488 = vmatpush.msra.mxu0 %v301
      %489 = vmatpush.msra.mxu0 %v300
      %490 = vmatpush.msra.mxu0 %v299
      %491 = vmatpush.msra.mxu0 %v298
      %492 = vmatmul.f32.gmra.mxu0 %v266
      %v493 = vpop.f32.mrf.mxu0
      %v494 = vadd.f32 %v381, %v493
      %495 = vmatmul.f32.gmra.mxu0 %v267
      %v496 = vpop.f32.mrf.mxu0
      %v497 = vadd.f32 %v384, %v496
      %498 = vmatmul.f32.gmra.mxu0 %v268
      %v499 = vpop.f32.mrf.mxu0
      %v500 = vadd.f32 %v387, %v499
      %501 = vmatmul.f32.gmra.mxu0 %v269
      %v502 = vpop.f32.mrf.mxu0
      %v503 = vadd.f32 %v390, %v502
      %504 = vmatmul.f32.gmra.mxu0 %v270
      %v505 = vpop.f32.mrf.mxu0
      %v506 = vadd.f32 %v393, %v505
      %507 = vmatmul.f32.gmra.mxu0 %v271
      %v508 = vpop.f32.mrf.mxu0
      %v509 = vadd.f32 %v396, %v508
      %510 = vmatmul.f32.gmra.mxu0 %v272
      %v511 = vpop.f32.mrf.mxu0
      %v512 = vadd.f32 %v399, %v511
      %513 = vmatmul.f32.gmra.mxu0 %v273
      %v514 = vpop.f32.mrf.mxu0
      %v515 = vadd.f32 %v402, %v514
      %516 = vmatmul.f32.gmra.mxu0 %v274
      %v517 = vpop.f32.mrf.mxu0
      %v518 = vadd.f32 %v405, %v517
      %519 = vmatmul.f32.gmra.mxu0 %v275
      %v520 = vpop.f32.mrf.mxu0
      %v521 = vadd.f32 %v408, %v520
      %522 = vmatmul.f32.gmra.mxu0 %v276
      %v523 = vpop.f32.mrf.mxu0
      %v524 = vadd.f32 %v411, %v523
      %525 = vmatmul.f32.gmra.mxu0 %v277
      %v526 = vpop.f32.mrf.mxu0
      %v527 = vadd.f32 %v414, %v526
      %528 = vmatmul.f32.gmra.mxu0 %v278
      %v529 = vpop.f32.mrf.mxu0
      %v530 = vadd.f32 %v417, %v529
      %531 = vmatmul.f32.gmra.mxu0 %v279
      %v532 = vpop.f32.mrf.mxu0
      %v533 = vadd.f32 %v420, %v532
      %534 = vmatmul.f32.gmra.mxu0 %v280
      %v535 = vpop.f32.mrf.mxu0
      %v536 = vadd.f32 %v423, %v535
      %537 = vmatmul.f32.gmra.mxu0 %v281
      %v538 = vpop.f32.mrf.mxu0
      %v539 = vadd.f32 %v426, %v538
      %540 = vmatmul.f32.gmra.mxu0 %v282
      %v541 = vpop.f32.mrf.mxu0
      %v542 = vadd.f32 %v429, %v541
      %543 = vmatmul.f32.gmra.mxu0 %v283
      %v544 = vpop.f32.mrf.mxu0
      %v545 = vadd.f32 %v432, %v544
      %546 = vmatmul.f32.gmra.mxu0 %v284
      %v547 = vpop.f32.mrf.mxu0
      %v548 = vadd.f32 %v435, %v547
      %549 = vmatmul.f32.gmra.mxu0 %v285
      %v550 = vpop.f32.mrf.mxu0
      %v551 = vadd.f32 %v438, %v550
      %552 = vmatmul.f32.gmra.mxu0 %v286
      %v553 = vpop.f32.mrf.mxu0
      %v554 = vadd.f32 %v441, %v553
      %555 = vmatmul.f32.gmra.mxu0 %v287
      %v556 = vpop.f32.mrf.mxu0
      %v557 = vadd.f32 %v444, %v556
      %558 = vmatmul.f32.gmra.mxu0 %v288
      %v559 = vpop.f32.mrf.mxu0
      %v560 = vadd.f32 %v447, %v559
      %561 = vmatmul.f32.gmra.mxu0 %v289
      %v562 = vpop.f32.mrf.mxu0
      %v563 = vadd.f32 %v450, %v562
      %564 = vmatmul.f32.gmra.mxu0 %v290
      %v565 = vpop.f32.mrf.mxu0
      %v566 = vadd.f32 %v453, %v565
      %567 = vmatmul.f32.gmra.mxu0 %v291
      %v568 = vpop.f32.mrf.mxu0
      %v569 = vadd.f32 %v456, %v568
      %570 = vmatmul.f32.gmra.mxu0 %v292
      %v571 = vpop.f32.mrf.mxu0
      %v572 = vadd.f32 %v459, %v571
      %573 = vmatmul.f32.gmra.mxu0 %v293
      %v574 = vpop.f32.mrf.mxu0
      %v575 = vadd.f32 %v462, %v574
      %576 = vmatmul.f32.gmra.mxu0 %v294
      %v577 = vpop.f32.mrf.mxu0
      %v578 = vadd.f32 %v465, %v577
      %579 = vmatmul.f32.gmra.mxu0 %v295
      %v580 = vpop.f32.mrf.mxu0
      %v581 = vadd.f32 %v468, %v580
      %582 = vmatmul.f32.gmra.mxu0 %v296
      %v583 = vpop.f32.mrf.mxu0
      %v584 = vadd.f32 %v471, %v583
      %585 = vmatmul.f32.gmra.mxu0 %v297
      %v586 = vpop.f32.mrf.mxu0
      %v587 = vadd.f32 %v474, %v586
      %588 = vdwg.mxu0
      %v589 = vld [vmem:[#allocation2 + $0x2] sm:$0xff]
      %v590 = vld [vmem:[#allocation2 + $0xa] sm:$0xff]
      %v591 = vld [vmem:[#allocation2 + $0x12] sm:$0xff]
      %v592 = vld [vmem:[#allocation2 + $0x1a] sm:$0xff]
      %v593 = vld [vmem:[#allocation2 + $0x22] sm:$0xff]
      %v594 = vld [vmem:[#allocation2 + $0x2a] sm:$0xff]
      %v595 = vld [vmem:[#allocation2 + $0x32] sm:$0xff]
      %v596 = vld [vmem:[#allocation2 + $0x3a] sm:$0xff]
      %v597 = vld [vmem:[#allocation2 + $0x42] sm:$0xff]
      %v598 = vld [vmem:[#allocation2 + $0x4a] sm:$0xff]
      %v599 = vld [vmem:[#allocation2 + $0x52] sm:$0xff]
      %v600 = vld [vmem:[#allocation2 + $0x5a] sm:$0xff]
      %v601 = vld [vmem:[#allocation2 + $0x62] sm:$0xff]
      %v602 = vld [vmem:[#allocation2 + $0x6a] sm:$0xff]
      %v603 = vld [vmem:[#allocation2 + $0x72] sm:$0xff]
      %v604 = vld [vmem:[#allocation2 + $0x7a] sm:$0xff]
      %v605 = vld [vmem:[#allocation2 + $0x82] sm:$0xff]
      %v606 = vld [vmem:[#allocation2 + $0x8a] sm:$0xff]
      %v607 = vld [vmem:[#allocation2 + $0x92] sm:$0xff]
      %v608 = vld [vmem:[#allocation2 + $0x9a] sm:$0xff]
      %v609 = vld [vmem:[#allocation2 + $0xa2] sm:$0xff]
      %v610 = vld [vmem:[#allocation2 + $0xaa] sm:$0xff]
      %v611 = vld [vmem:[#allocation2 + $0xb2] sm:$0xff]
      %v612 = vld [vmem:[#allocation2 + $0xba] sm:$0xff]
      %v613 = vld [vmem:[#allocation2 + $0xc2] sm:$0xff]
      %v614 = vld [vmem:[#allocation2 + $0xca] sm:$0xff]
      %v615 = vld [vmem:[#allocation2 + $0xd2] sm:$0xff]
      %v616 = vld [vmem:[#allocation2 + $0xda] sm:$0xff]
      %v617 = vld [vmem:[#allocation2 + $0xe2] sm:$0xff]
      %v618 = vld [vmem:[#allocation2 + $0xea] sm:$0xff]
      %v619 = vld [vmem:[#allocation2 + $0xf2] sm:$0xff]
      %v620 = vld [vmem:[#allocation2 + $0xfa] sm:$0xf]
      %s621 = scalar_lea.vmem %s1, 256
      %v622 = vld [vmem:[%s621] sm:$0xff]
      %v623 = vld [vmem:[%s621 + $0x8] sm:$0xff]
      %v624 = vld [vmem:[%s621 + $0x10] sm:$0xff]
      %v625 = vld [vmem:[%s621 + $0x18] sm:$0xff]
      %v626 = vld [vmem:[%s621 + $0x20] sm:$0xff]
      %v627 = vld [vmem:[%s621 + $0x28] sm:$0xff]
      %v628 = vld [vmem:[%s621 + $0x30] sm:$0xff]
      %v629 = vld [vmem:[%s621 + $0x38] sm:$0xff]
      %v630 = vld [vmem:[%s621 + $0x40] sm:$0xff]
      %v631 = vld [vmem:[%s621 + $0x48] sm:$0xff]
      %v632 = vld [vmem:[%s621 + $0x50] sm:$0xff]
      %v633 = vld [vmem:[%s621 + $0x58] sm:$0xff]
      %v634 = vld [vmem:[%s621 + $0x60] sm:$0xff]
      %v635 = vld [vmem:[%s621 + $0x68] sm:$0xff]
      %v636 = vld [vmem:[%s621 + $0x70] sm:$0xff]
      %v637 = vld [vmem:[%s621 + $0x78] sm:$0xff]
      %638 = vmatpush.msra.mxu0 %v637
      %639 = vmatpush.msra.mxu0 %v636
      %640 = vmatpush.msra.mxu0 %v635
      %641 = vmatpush.msra.mxu0 %v634
      %642 = vmatpush.msra.mxu0 %v633
      %643 = vmatpush.msra.mxu0 %v632
      %644 = vmatpush.msra.mxu0 %v631
      %645 = vmatpush.msra.mxu0 %v630
      %646 = vmatpush.msra.mxu0 %v629
      %647 = vmatpush.msra.mxu0 %v628
      %648 = vmatpush.msra.mxu0 %v627
      %649 = vmatpush.msra.mxu0 %v626
      %650 = vmatpush.msra.mxu0 %v625
      %651 = vmatpush.msra.mxu0 %v624
      %652 = vmatpush.msra.mxu0 %v623
      %653 = vmatpush.msra.mxu0 %v622
      %654 = vmatmul.f32.gmra.mxu0 %v589
      %v655 = vpop.f32.mrf.mxu0
      %v656 = vadd.f32 0.0, %v655
      %657 = vmatmul.f32.gmra.mxu0 %v590
      %v658 = vpop.f32.mrf.mxu0
      %v659 = vadd.f32 0.0, %v658
      %660 = vmatmul.f32.gmra.mxu0 %v591
      %v661 = vpop.f32.mrf.mxu0
      %v662 = vadd.f32 0.0, %v661
      %663 = vmatmul.f32.gmra.mxu0 %v592
      %v664 = vpop.f32.mrf.mxu0
      %v665 = vadd.f32 0.0, %v664
      %666 = vmatmul.f32.gmra.mxu0 %v593
      %v667 = vpop.f32.mrf.mxu0
      %v668 = vadd.f32 0.0, %v667
      %669 = vmatmul.f32.gmra.mxu0 %v594
      %v670 = vpop.f32.mrf.mxu0
      %v671 = vadd.f32 0.0, %v670
      %672 = vmatmul.f32.gmra.mxu0 %v595
      %v673 = vpop.f32.mrf.mxu0
      %v674 = vadd.f32 0.0, %v673
      %675 = vmatmul.f32.gmra.mxu0 %v596
      %v676 = vpop.f32.mrf.mxu0
      %v677 = vadd.f32 0.0, %v676
      %678 = vmatmul.f32.gmra.mxu0 %v597
      %v679 = vpop.f32.mrf.mxu0
      %v680 = vadd.f32 0.0, %v679
      %681 = vmatmul.f32.gmra.mxu0 %v598
      %v682 = vpop.f32.mrf.mxu0
      %v683 = vadd.f32 0.0, %v682
      %684 = vmatmul.f32.gmra.mxu0 %v599
      %v685 = vpop.f32.mrf.mxu0
      %v686 = vadd.f32 0.0, %v685
      %687 = vmatmul.f32.gmra.mxu0 %v600
      %v688 = vpop.f32.mrf.mxu0
      %v689 = vadd.f32 0.0, %v688
      %690 = vmatmul.f32.gmra.mxu0 %v601
      %v691 = vpop.f32.mrf.mxu0
      %v692 = vadd.f32 0.0, %v691
      %693 = vmatmul.f32.gmra.mxu0 %v602
      %v694 = vpop.f32.mrf.mxu0
      %v695 = vadd.f32 0.0, %v694
      %696 = vmatmul.f32.gmra.mxu0 %v603
      %v697 = vpop.f32.mrf.mxu0
      %v698 = vadd.f32 0.0, %v697
      %699 = vmatmul.f32.gmra.mxu0 %v604
      %v700 = vpop.f32.mrf.mxu0
      %v701 = vadd.f32 0.0, %v700
      %702 = vmatmul.f32.gmra.mxu0 %v605
      %v703 = vpop.f32.mrf.mxu0
      %v704 = vadd.f32 0.0, %v703
      %705 = vmatmul.f32.gmra.mxu0 %v606
      %v706 = vpop.f32.mrf.mxu0
      %v707 = vadd.f32 0.0, %v706
      %708 = vmatmul.f32.gmra.mxu0 %v607
      %v709 = vpop.f32.mrf.mxu0
      %v710 = vadd.f32 0.0, %v709
      %711 = vmatmul.f32.gmra.mxu0 %v608
      %v712 = vpop.f32.mrf.mxu0
      %v713 = vadd.f32 0.0, %v712
      %714 = vmatmul.f32.gmra.mxu0 %v609
      %v715 = vpop.f32.mrf.mxu0
      %v716 = vadd.f32 0.0, %v715
      %717 = vmatmul.f32.gmra.mxu0 %v610
      %v718 = vpop.f32.mrf.mxu0
      %v719 = vadd.f32 0.0, %v718
      %720 = vmatmul.f32.gmra.mxu0 %v611
      %v721 = vpop.f32.mrf.mxu0
      %v722 = vadd.f32 0.0, %v721
      %723 = vmatmul.f32.gmra.mxu0 %v612
      %v724 = vpop.f32.mrf.mxu0
      %v725 = vadd.f32 0.0, %v724
      %726 = vmatmul.f32.gmra.mxu0 %v613
      %v727 = vpop.f32.mrf.mxu0
      %v728 = vadd.f32 0.0, %v727
      %729 = vmatmul.f32.gmra.mxu0 %v614
      %v730 = vpop.f32.mrf.mxu0
      %v731 = vadd.f32 0.0, %v730
      %732 = vmatmul.f32.gmra.mxu0 %v615
      %v733 = vpop.f32.mrf.mxu0
      %v734 = vadd.f32 0.0, %v733
      %735 = vmatmul.f32.gmra.mxu0 %v616
      %v736 = vpop.f32.mrf.mxu0
      %v737 = vadd.f32 0.0, %v736
      %738 = vmatmul.f32.gmra.mxu0 %v617
      %v739 = vpop.f32.mrf.mxu0
      %v740 = vadd.f32 0.0, %v739
      %741 = vmatmul.f32.gmra.mxu0 %v618
      %v742 = vpop.f32.mrf.mxu0
      %v743 = vadd.f32 0.0, %v742
      %744 = vmatmul.f32.gmra.mxu0 %v619
      %v745 = vpop.f32.mrf.mxu0
      %v746 = vadd.f32 0.0, %v745
      %747 = vmatmul.f32.gmra.mxu0 %v620
      %v748 = vpop.f32.mrf.mxu0
      %v749 = vadd.f32 0.0, %v748
      %750 = vdwg.mxu0
      %v751 = vadd.f32 %v494, %v656
      %v752 = vadd.f32 %v497, %v659
      %v753 = vadd.f32 %v500, %v662
      %v754 = vadd.f32 %v503, %v665
      %v755 = vadd.f32 %v506, %v668
      %v756 = vadd.f32 %v509, %v671
      %v757 = vadd.f32 %v512, %v674
      %v758 = vadd.f32 %v515, %v677
      %v759 = vadd.f32 %v518, %v680
      %v760 = vadd.f32 %v521, %v683
      %v761 = vadd.f32 %v524, %v686
      %v762 = vadd.f32 %v527, %v689
      %v763 = vadd.f32 %v530, %v692
      %v764 = vadd.f32 %v533, %v695
      %v765 = vadd.f32 %v536, %v698
      %v766 = vadd.f32 %v539, %v701
      %v767 = vadd.f32 %v542, %v704
      %v768 = vadd.f32 %v545, %v707
      %v769 = vadd.f32 %v548, %v710
      %v770 = vadd.f32 %v551, %v713
      %v771 = vadd.f32 %v554, %v716
      %v772 = vadd.f32 %v557, %v719
      %v773 = vadd.f32 %v560, %v722
      %v774 = vadd.f32 %v563, %v725
      %v775 = vadd.f32 %v566, %v728
      %v776 = vadd.f32 %v569, %v731
      %v777 = vadd.f32 %v572, %v734
      %v778 = vadd.f32 %v575, %v737
      %v779 = vadd.f32 %v578, %v740
      %v780 = vadd.f32 %v581, %v743
      %v781 = vadd.f32 %v584, %v746
      %v782 = vadd.f32 %v587, %v749
      %v783 = vld [vmem:[#allocation2 + $0x3] sm:$0xff]
      %v784 = vld [vmem:[#allocation2 + $0xb] sm:$0xff]
      %v785 = vld [vmem:[#allocation2 + $0x13] sm:$0xff]
      %v786 = vld [vmem:[#allocation2 + $0x1b] sm:$0xff]
      %v787 = vld [vmem:[#allocation2 + $0x23] sm:$0xff]
      %v788 = vld [vmem:[#allocation2 + $0x2b] sm:$0xff]
      %v789 = vld [vmem:[#allocation2 + $0x33] sm:$0xff]
      %v790 = vld [vmem:[#allocation2 + $0x3b] sm:$0xff]
      %v791 = vld [vmem:[#allocation2 + $0x43] sm:$0xff]
      %v792 = vld [vmem:[#allocation2 + $0x4b] sm:$0xff]
      %v793 = vld [vmem:[#allocation2 + $0x53] sm:$0xff]
      %v794 = vld [vmem:[#allocation2 + $0x5b] sm:$0xff]
      %v795 = vld [vmem:[#allocation2 + $0x63] sm:$0xff]
      %v796 = vld [vmem:[#allocation2 + $0x6b] sm:$0xff]
      %v797 = vld [vmem:[#allocation2 + $0x73] sm:$0xff]
      %v798 = vld [vmem:[#allocation2 + $0x7b] sm:$0xff]
      %v799 = vld [vmem:[#allocation2 + $0x83] sm:$0xff]
      %v800 = vld [vmem:[#allocation2 + $0x8b] sm:$0xff]
      %v801 = vld [vmem:[#allocation2 + $0x93] sm:$0xff]
      %v802 = vld [vmem:[#allocation2 + $0x9b] sm:$0xff]
      %v803 = vld [vmem:[#allocation2 + $0xa3] sm:$0xff]
      %v804 = vld [vmem:[#allocation2 + $0xab] sm:$0xff]
      %v805 = vld [vmem:[#allocation2 + $0xb3] sm:$0xff]
      %v806 = vld [vmem:[#allocation2 + $0xbb] sm:$0xff]
      %v807 = vld [vmem:[#allocation2 + $0xc3] sm:$0xff]
      %v808 = vld [vmem:[#allocation2 + $0xcb] sm:$0xff]
      %v809 = vld [vmem:[#allocation2 + $0xd3] sm:$0xff]
      %v810 = vld [vmem:[#allocation2 + $0xdb] sm:$0xff]
      %v811 = vld [vmem:[#allocation2 + $0xe3] sm:$0xff]
      %v812 = vld [vmem:[#allocation2 + $0xeb] sm:$0xff]
      %v813 = vld [vmem:[#allocation2 + $0xf3] sm:$0xff]
      %v814 = vld [vmem:[#allocation2 + $0xfb] sm:$0xf]
      %s815 = scalar_lea.vmem %s1, 384
      %v816 = vld [vmem:[%s815] sm:$0xff]
      %v817 = vld [vmem:[%s815 + $0x8] sm:$0xff]
      %v818 = vld [vmem:[%s815 + $0x10] sm:$0xff]
      %v819 = vld [vmem:[%s815 + $0x18] sm:$0xff]
      %v820 = vld [vmem:[%s815 + $0x20] sm:$0xff]
      %v821 = vld [vmem:[%s815 + $0x28] sm:$0xff]
      %v822 = vld [vmem:[%s815 + $0x30] sm:$0xff]
      %v823 = vld [vmem:[%s815 + $0x38] sm:$0xff]
      %v824 = vld [vmem:[%s815 + $0x40] sm:$0xff]
      %v825 = vld [vmem:[%s815 + $0x48] sm:$0xff]
      %v826 = vld [vmem:[%s815 + $0x50] sm:$0xff]
      %v827 = vld [vmem:[%s815 + $0x58] sm:$0xff]
      %v828 = vld [vmem:[%s815 + $0x60] sm:$0xff]
      %v829 = vld [vmem:[%s815 + $0x68] sm:$0xff]
      %v830 = vld [vmem:[%s815 + $0x70] sm:$0xff]
      %v831 = vld [vmem:[%s815 + $0x78] sm:$0xff]
      %832 = vmatpush.msra.mxu0 %v831
      %833 = vmatpush.msra.mxu0 %v830
      %834 = vmatpush.msra.mxu0 %v829
      %835 = vmatpush.msra.mxu0 %v828
      %836 = vmatpush.msra.mxu0 %v827
      %837 = vmatpush.msra.mxu0 %v826
      %838 = vmatpush.msra.mxu0 %v825
      %839 = vmatpush.msra.mxu0 %v824
      %840 = vmatpush.msra.mxu0 %v823
      %841 = vmatpush.msra.mxu0 %v822
      %842 = vmatpush.msra.mxu0 %v821
      %843 = vmatpush.msra.mxu0 %v820
      %844 = vmatpush.msra.mxu0 %v819
      %845 = vmatpush.msra.mxu0 %v818
      %846 = vmatpush.msra.mxu0 %v817
      %847 = vmatpush.msra.mxu0 %v816
      %848 = vmatmul.f32.gmra.mxu0 %v783
      %v849 = vpop.f32.mrf.mxu0
      %v850 = vadd.f32 0.0, %v849
      %851 = vmatmul.f32.gmra.mxu0 %v784
      %v852 = vpop.f32.mrf.mxu0
      %v853 = vadd.f32 0.0, %v852
      %854 = vmatmul.f32.gmra.mxu0 %v785
      %v855 = vpop.f32.mrf.mxu0
      %v856 = vadd.f32 0.0, %v855
      %857 = vmatmul.f32.gmra.mxu0 %v786
      %v858 = vpop.f32.mrf.mxu0
      %v859 = vadd.f32 0.0, %v858
      %860 = vmatmul.f32.gmra.mxu0 %v787
      %v861 = vpop.f32.mrf.mxu0
      %v862 = vadd.f32 0.0, %v861
      %863 = vmatmul.f32.gmra.mxu0 %v788
      %v864 = vpop.f32.mrf.mxu0
      %v865 = vadd.f32 0.0, %v864
      %866 = vmatmul.f32.gmra.mxu0 %v789
      %v867 = vpop.f32.mrf.mxu0
      %v868 = vadd.f32 0.0, %v867
      %869 = vmatmul.f32.gmra.mxu0 %v790
      %v870 = vpop.f32.mrf.mxu0
      %v871 = vadd.f32 0.0, %v870
      %872 = vmatmul.f32.gmra.mxu0 %v791
      %v873 = vpop.f32.mrf.mxu0
      %v874 = vadd.f32 0.0, %v873
      %875 = vmatmul.f32.gmra.mxu0 %v792
      %v876 = vpop.f32.mrf.mxu0
      %v877 = vadd.f32 0.0, %v876
      %878 = vmatmul.f32.gmra.mxu0 %v793
      %v879 = vpop.f32.mrf.mxu0
      %v880 = vadd.f32 0.0, %v879
      %881 = vmatmul.f32.gmra.mxu0 %v794
      %v882 = vpop.f32.mrf.mxu0
      %v883 = vadd.f32 0.0, %v882
      %884 = vmatmul.f32.gmra.mxu0 %v795
      %v885 = vpop.f32.mrf.mxu0
      %v886 = vadd.f32 0.0, %v885
      %887 = vmatmul.f32.gmra.mxu0 %v796
      %v888 = vpop.f32.mrf.mxu0
      %v889 = vadd.f32 0.0, %v888
      %890 = vmatmul.f32.gmra.mxu0 %v797
      %v891 = vpop.f32.mrf.mxu0
      %v892 = vadd.f32 0.0, %v891
      %893 = vmatmul.f32.gmra.mxu0 %v798
      %v894 = vpop.f32.mrf.mxu0
      %v895 = vadd.f32 0.0, %v894
      %896 = vmatmul.f32.gmra.mxu0 %v799
      %v897 = vpop.f32.mrf.mxu0
      %v898 = vadd.f32 0.0, %v897
      %899 = vmatmul.f32.gmra.mxu0 %v800
      %v900 = vpop.f32.mrf.mxu0
      %v901 = vadd.f32 0.0, %v900
      %902 = vmatmul.f32.gmra.mxu0 %v801
      %v903 = vpop.f32.mrf.mxu0
      %v904 = vadd.f32 0.0, %v903
      %905 = vmatmul.f32.gmra.mxu0 %v802
      %v906 = vpop.f32.mrf.mxu0
      %v907 = vadd.f32 0.0, %v906
      %908 = vmatmul.f32.gmra.mxu0 %v803
      %v909 = vpop.f32.mrf.mxu0
      %v910 = vadd.f32 0.0, %v909
      %911 = vmatmul.f32.gmra.mxu0 %v804
      %v912 = vpop.f32.mrf.mxu0
      %v913 = vadd.f32 0.0, %v912
      %914 = vmatmul.f32.gmra.mxu0 %v805
      %v915 = vpop.f32.mrf.mxu0
      %v916 = vadd.f32 0.0, %v915
      %917 = vmatmul.f32.gmra.mxu0 %v806
      %v918 = vpop.f32.mrf.mxu0
      %v919 = vadd.f32 0.0, %v918
      %920 = vmatmul.f32.gmra.mxu0 %v807
      %v921 = vpop.f32.mrf.mxu0
      %v922 = vadd.f32 0.0, %v921
      %923 = vmatmul.f32.gmra.mxu0 %v808
      %v924 = vpop.f32.mrf.mxu0
      %v925 = vadd.f32 0.0, %v924
      %926 = vmatmul.f32.gmra.mxu0 %v809
      %v927 = vpop.f32.mrf.mxu0
      %v928 = vadd.f32 0.0, %v927
      %929 = vmatmul.f32.gmra.mxu0 %v810
      %v930 = vpop.f32.mrf.mxu0
      %v931 = vadd.f32 0.0, %v930
      %932 = vmatmul.f32.gmra.mxu0 %v811
      %v933 = vpop.f32.mrf.mxu0
      %v934 = vadd.f32 0.0, %v933
      %935 = vmatmul.f32.gmra.mxu0 %v812
      %v936 = vpop.f32.mrf.mxu0
      %v937 = vadd.f32 0.0, %v936
      %938 = vmatmul.f32.gmra.mxu0 %v813
      %v939 = vpop.f32.mrf.mxu0
      %v940 = vadd.f32 0.0, %v939
      %941 = vmatmul.f32.gmra.mxu0 %v814
      %v942 = vpop.f32.mrf.mxu0
      %v943 = vadd.f32 0.0, %v942
      %944 = vdwg.mxu0
      %v945 = vadd.f32 %v751, %v850
      %v946 = vadd.f32 %v752, %v853
      %v947 = vadd.f32 %v753, %v856
      %v948 = vadd.f32 %v754, %v859
      %v949 = vadd.f32 %v755, %v862
      %v950 = vadd.f32 %v756, %v865
      %v951 = vadd.f32 %v757, %v868
      %v952 = vadd.f32 %v758, %v871
      %v953 = vadd.f32 %v759, %v874
      %v954 = vadd.f32 %v760, %v877
      %v955 = vadd.f32 %v761, %v880
      %v956 = vadd.f32 %v762, %v883
      %v957 = vadd.f32 %v763, %v886
      %v958 = vadd.f32 %v764, %v889
      %v959 = vadd.f32 %v765, %v892
      %v960 = vadd.f32 %v766, %v895
      %v961 = vadd.f32 %v767, %v898
      %v962 = vadd.f32 %v768, %v901
      %v963 = vadd.f32 %v769, %v904
      %v964 = vadd.f32 %v770, %v907
      %v965 = vadd.f32 %v771, %v910
      %v966 = vadd.f32 %v772, %v913
      %v967 = vadd.f32 %v773, %v916
      %v968 = vadd.f32 %v774, %v919
      %v969 = vadd.f32 %v775, %v922
      %v970 = vadd.f32 %v776, %v925
      %v971 = vadd.f32 %v777, %v928
      %v972 = vadd.f32 %v778, %v931
      %v973 = vadd.f32 %v779, %v934
      %v974 = vadd.f32 %v780, %v937
      %v975 = vadd.f32 %v781, %v940
      %v976 = vadd.f32 %v782, %v943
      %v977 = vld [vmem:[#allocation2 + $0x4] sm:$0xff]
      %v978 = vld [vmem:[#allocation2 + $0xc] sm:$0xff]
      %v979 = vld [vmem:[#allocation2 + $0x14] sm:$0xff]
      %v980 = vld [vmem:[#allocation2 + $0x1c] sm:$0xff]
      %v981 = vld [vmem:[#allocation2 + $0x24] sm:$0xff]
      %v982 = vld [vmem:[#allocation2 + $0x2c] sm:$0xff]
      %v983 = vld [vmem:[#allocation2 + $0x34] sm:$0xff]
      %v984 = vld [vmem:[#allocation2 + $0x3c] sm:$0xff]
      %v985 = vld [vmem:[#allocation2 + $0x44] sm:$0xff]
      %v986 = vld [vmem:[#allocation2 + $0x4c] sm:$0xff]
      %v987 = vld [vmem:[#allocation2 + $0x54] sm:$0xff]
      %v988 = vld [vmem:[#allocation2 + $0x5c] sm:$0xff]
      %v989 = vld [vmem:[#allocation2 + $0x64] sm:$0xff]
      %v990 = vld [vmem:[#allocation2 + $0x6c] sm:$0xff]
      %v991 = vld [vmem:[#allocation2 + $0x74] sm:$0xff]
      %v992 = vld [vmem:[#allocation2 + $0x7c] sm:$0xff]
      %v993 = vld [vmem:[#allocation2 + $0x84] sm:$0xff]
      %v994 = vld [vmem:[#allocation2 + $0x8c] sm:$0xff]
      %v995 = vld [vmem:[#allocation2 + $0x94] sm:$0xff]
      %v996 = vld [vmem:[#allocation2 + $0x9c] sm:$0xff]
      %v997 = vld [vmem:[#allocation2 + $0xa4] sm:$0xff]
      %v998 = vld [vmem:[#allocation2 + $0xac] sm:$0xff]
      %v999 = vld [vmem:[#allocation2 + $0xb4] sm:$0xff]
      %v1000 = vld [vmem:[#allocation2 + $0xbc] sm:$0xff]
      %v1001 = vld [vmem:[#allocation2 + $0xc4] sm:$0xff]
      %v1002 = vld [vmem:[#allocation2 + $0xcc] sm:$0xff]
      %v1003 = vld [vmem:[#allocation2 + $0xd4] sm:$0xff]
      %v1004 = vld [vmem:[#allocation2 + $0xdc] sm:$0xff]
      %v1005 = vld [vmem:[#allocation2 + $0xe4] sm:$0xff]
      %v1006 = vld [vmem:[#allocation2 + $0xec] sm:$0xff]
      %v1007 = vld [vmem:[#allocation2 + $0xf4] sm:$0xff]
      %v1008 = vld [vmem:[#allocation2 + $0xfc] sm:$0xf]
      %s1009 = scalar_lea.vmem %s1, 512
      %v1010 = vld [vmem:[%s1009] sm:$0xff]
      %v1011 = vld [vmem:[%s1009 + $0x8] sm:$0xff]
      %v1012 = vld [vmem:[%s1009 + $0x10] sm:$0xff]
      %v1013 = vld [vmem:[%s1009 + $0x18] sm:$0xff]
      %v1014 = vld [vmem:[%s1009 + $0x20] sm:$0xff]
      %v1015 = vld [vmem:[%s1009 + $0x28] sm:$0xff]
      %v1016 = vld [vmem:[%s1009 + $0x30] sm:$0xff]
      %v1017 = vld [vmem:[%s1009 + $0x38] sm:$0xff]
      %v1018 = vld [vmem:[%s1009 + $0x40] sm:$0xff]
      %v1019 = vld [vmem:[%s1009 + $0x48] sm:$0xff]
      %v1020 = vld [vmem:[%s1009 + $0x50] sm:$0xff]
      %v1021 = vld [vmem:[%s1009 + $0x58] sm:$0xff]
      %v1022 = vld [vmem:[%s1009 + $0x60] sm:$0xff]
      %v1023 = vld [vmem:[%s1009 + $0x68] sm:$0xff]
      %v1024 = vld [vmem:[%s1009 + $0x70] sm:$0xff]
      %v1025 = vld [vmem:[%s1009 + $0x78] sm:$0xff]
      %1026 = vmatpush.msra.mxu0 %v1025
      %1027 = vmatpush.msra.mxu0 %v1024
      %1028 = vmatpush.msra.mxu0 %v1023
      %1029 = vmatpush.msra.mxu0 %v1022
      %1030 = vmatpush.msra.mxu0 %v1021
      %1031 = vmatpush.msra.mxu0 %v1020
      %1032 = vmatpush.msra.mxu0 %v1019
      %1033 = vmatpush.msra.mxu0 %v1018
      %1034 = vmatpush.msra.mxu0 %v1017
      %1035 = vmatpush.msra.mxu0 %v1016
      %1036 = vmatpush.msra.mxu0 %v1015
      %1037 = vmatpush.msra.mxu0 %v1014
      %1038 = vmatpush.msra.mxu0 %v1013
      %1039 = vmatpush.msra.mxu0 %v1012
      %1040 = vmatpush.msra.mxu0 %v1011
      %1041 = vmatpush.msra.mxu0 %v1010
      %1042 = vmatmul.f32.gmra.mxu0 %v977
      %v1043 = vpop.f32.mrf.mxu0
      %v1044 = vadd.f32 0.0, %v1043
      %1045 = vmatmul.f32.gmra.mxu0 %v978
      %v1046 = vpop.f32.mrf.mxu0
      %v1047 = vadd.f32 0.0, %v1046
      %1048 = vmatmul.f32.gmra.mxu0 %v979
      %v1049 = vpop.f32.mrf.mxu0
      %v1050 = vadd.f32 0.0, %v1049
      %1051 = vmatmul.f32.gmra.mxu0 %v980
      %v1052 = vpop.f32.mrf.mxu0
      %v1053 = vadd.f32 0.0, %v1052
      %1054 = vmatmul.f32.gmra.mxu0 %v981
      %v1055 = vpop.f32.mrf.mxu0
      %v1056 = vadd.f32 0.0, %v1055
      %1057 = vmatmul.f32.gmra.mxu0 %v982
      %v1058 = vpop.f32.mrf.mxu0
      %v1059 = vadd.f32 0.0, %v1058
      %1060 = vmatmul.f32.gmra.mxu0 %v983
      %v1061 = vpop.f32.mrf.mxu0
      %v1062 = vadd.f32 0.0, %v1061
      %1063 = vmatmul.f32.gmra.mxu0 %v984
      %v1064 = vpop.f32.mrf.mxu0
      %v1065 = vadd.f32 0.0, %v1064
      %1066 = vmatmul.f32.gmra.mxu0 %v985
      %v1067 = vpop.f32.mrf.mxu0
      %v1068 = vadd.f32 0.0, %v1067
      %1069 = vmatmul.f32.gmra.mxu0 %v986
      %v1070 = vpop.f32.mrf.mxu0
      %v1071 = vadd.f32 0.0, %v1070
      %1072 = vmatmul.f32.gmra.mxu0 %v987
      %v1073 = vpop.f32.mrf.mxu0
      %v1074 = vadd.f32 0.0, %v1073
      %1075 = vmatmul.f32.gmra.mxu0 %v988
      %v1076 = vpop.f32.mrf.mxu0
      %v1077 = vadd.f32 0.0, %v1076
      %1078 = vmatmul.f32.gmra.mxu0 %v989
      %v1079 = vpop.f32.mrf.mxu0
      %v1080 = vadd.f32 0.0, %v1079
      %1081 = vmatmul.f32.gmra.mxu0 %v990
      %v1082 = vpop.f32.mrf.mxu0
      %v1083 = vadd.f32 0.0, %v1082
      %1084 = vmatmul.f32.gmra.mxu0 %v991
      %v1085 = vpop.f32.mrf.mxu0
      %v1086 = vadd.f32 0.0, %v1085
      %1087 = vmatmul.f32.gmra.mxu0 %v992
      %v1088 = vpop.f32.mrf.mxu0
      %v1089 = vadd.f32 0.0, %v1088
      %1090 = vmatmul.f32.gmra.mxu0 %v993
      %v1091 = vpop.f32.mrf.mxu0
      %v1092 = vadd.f32 0.0, %v1091
      %1093 = vmatmul.f32.gmra.mxu0 %v994
      %v1094 = vpop.f32.mrf.mxu0
      %v1095 = vadd.f32 0.0, %v1094
      %1096 = vmatmul.f32.gmra.mxu0 %v995
      %v1097 = vpop.f32.mrf.mxu0
      %v1098 = vadd.f32 0.0, %v1097
      %1099 = vmatmul.f32.gmra.mxu0 %v996
      %v1100 = vpop.f32.mrf.mxu0
      %v1101 = vadd.f32 0.0, %v1100
      %1102 = vmatmul.f32.gmra.mxu0 %v997
      %v1103 = vpop.f32.mrf.mxu0
      %v1104 = vadd.f32 0.0, %v1103
      %1105 = vmatmul.f32.gmra.mxu0 %v998
      %v1106 = vpop.f32.mrf.mxu0
      %v1107 = vadd.f32 0.0, %v1106
      %1108 = vmatmul.f32.gmra.mxu0 %v999
      %v1109 = vpop.f32.mrf.mxu0
      %v1110 = vadd.f32 0.0, %v1109
      %1111 = vmatmul.f32.gmra.mxu0 %v1000
      %v1112 = vpop.f32.mrf.mxu0
      %v1113 = vadd.f32 0.0, %v1112
      %1114 = vmatmul.f32.gmra.mxu0 %v1001
      %v1115 = vpop.f32.mrf.mxu0
      %v1116 = vadd.f32 0.0, %v1115
      %1117 = vmatmul.f32.gmra.mxu0 %v1002
      %v1118 = vpop.f32.mrf.mxu0
      %v1119 = vadd.f32 0.0, %v1118
      %1120 = vmatmul.f32.gmra.mxu0 %v1003
      %v1121 = vpop.f32.mrf.mxu0
      %v1122 = vadd.f32 0.0, %v1121
      %1123 = vmatmul.f32.gmra.mxu0 %v1004
      %v1124 = vpop.f32.mrf.mxu0
      %v1125 = vadd.f32 0.0, %v1124
      %1126 = vmatmul.f32.gmra.mxu0 %v1005
      %v1127 = vpop.f32.mrf.mxu0
      %v1128 = vadd.f32 0.0, %v1127
      %1129 = vmatmul.f32.gmra.mxu0 %v1006
      %v1130 = vpop.f32.mrf.mxu0
      %v1131 = vadd.f32 0.0, %v1130
      %1132 = vmatmul.f32.gmra.mxu0 %v1007
      %v1133 = vpop.f32.mrf.mxu0
      %v1134 = vadd.f32 0.0, %v1133
      %1135 = vmatmul.f32.gmra.mxu0 %v1008
      %v1136 = vpop.f32.mrf.mxu0
      %v1137 = vadd.f32 0.0, %v1136
      %1138 = vdwg.mxu0
      %v1139 = vadd.f32 %v945, %v1044
      %v1140 = vadd.f32 %v946, %v1047
      %v1141 = vadd.f32 %v947, %v1050
      %v1142 = vadd.f32 %v948, %v1053
      %v1143 = vadd.f32 %v949, %v1056
      %v1144 = vadd.f32 %v950, %v1059
      %v1145 = vadd.f32 %v951, %v1062
      %v1146 = vadd.f32 %v952, %v1065
      %v1147 = vadd.f32 %v953, %v1068
      %v1148 = vadd.f32 %v954, %v1071
      %v1149 = vadd.f32 %v955, %v1074
      %v1150 = vadd.f32 %v956, %v1077
      %v1151 = vadd.f32 %v957, %v1080
      %v1152 = vadd.f32 %v958, %v1083
      %v1153 = vadd.f32 %v959, %v1086
      %v1154 = vadd.f32 %v960, %v1089
      %v1155 = vadd.f32 %v961, %v1092
      %v1156 = vadd.f32 %v962, %v1095
      %v1157 = vadd.f32 %v963, %v1098
      %v1158 = vadd.f32 %v964, %v1101
      %v1159 = vadd.f32 %v965, %v1104
      %v1160 = vadd.f32 %v966, %v1107
      %v1161 = vadd.f32 %v967, %v1110
      %v1162 = vadd.f32 %v968, %v1113
      %v1163 = vadd.f32 %v969, %v1116
      %v1164 = vadd.f32 %v970, %v1119
      %v1165 = vadd.f32 %v971, %v1122
      %v1166 = vadd.f32 %v972, %v1125
      %v1167 = vadd.f32 %v973, %v1128
      %v1168 = vadd.f32 %v974, %v1131
      %v1169 = vadd.f32 %v975, %v1134
      %v1170 = vadd.f32 %v976, %v1137
      %v1171 = vld [vmem:[%s2] sm:$0x1]
      %v1172 = vperm.slane %v1171, 0
      %v1173 = vadd.f32 %v1139, %v1172
      %v1174 = vadd.f32 %v1140, %v1172
      %v1175 = vadd.f32 %v1141, %v1172
      %v1176 = vadd.f32 %v1142, %v1172
      %v1177 = vadd.f32 %v1143, %v1172
      %v1178 = vadd.f32 %v1144, %v1172
      %v1179 = vadd.f32 %v1145, %v1172
      %v1180 = vadd.f32 %v1146, %v1172
      %v1181 = vadd.f32 %v1147, %v1172
      %v1182 = vadd.f32 %v1148, %v1172
      %v1183 = vadd.f32 %v1149, %v1172
      %v1184 = vadd.f32 %v1150, %v1172
      %v1185 = vadd.f32 %v1151, %v1172
      %v1186 = vadd.f32 %v1152, %v1172
      %v1187 = vadd.f32 %v1153, %v1172
      %v1188 = vadd.f32 %v1154, %v1172
      %v1189 = vadd.f32 %v1155, %v1172
      %v1190 = vadd.f32 %v1156, %v1172
      %v1191 = vadd.f32 %v1157, %v1172
      %v1192 = vadd.f32 %v1158, %v1172
      %v1193 = vadd.f32 %v1159, %v1172
      %v1194 = vadd.f32 %v1160, %v1172
      %v1195 = vadd.f32 %v1161, %v1172
      %v1196 = vadd.f32 %v1162, %v1172
      %v1197 = vadd.f32 %v1163, %v1172
      %v1198 = vadd.f32 %v1164, %v1172
      %v1199 = vadd.f32 %v1165, %v1172
      %v1200 = vadd.f32 %v1166, %v1172
      %v1201 = vadd.f32 %v1167, %v1172
      %v1202 = vadd.f32 %v1168, %v1172
      %v1203 = vadd.f32 %v1169, %v1172
      %v1204 = vadd.f32 %v1170, %v1172
      %v1205 = vmax.f32 %v1173, 0.0
      %v1206 = vmax.f32 %v1174, 0.0
      %v1207 = vmax.f32 %v1175, 0.0
      %v1208 = vmax.f32 %v1176, 0.0
      %v1209 = vmax.f32 %v1177, 0.0
      %v1210 = vmax.f32 %v1178, 0.0
      %v1211 = vmax.f32 %v1179, 0.0
      %v1212 = vmax.f32 %v1180, 0.0
      %v1213 = vmax.f32 %v1181, 0.0
      %v1214 = vmax.f32 %v1182, 0.0
      %v1215 = vmax.f32 %v1183, 0.0
      %v1216 = vmax.f32 %v1184, 0.0
      %v1217 = vmax.f32 %v1185, 0.0
      %v1218 = vmax.f32 %v1186, 0.0
      %v1219 = vmax.f32 %v1187, 0.0
      %v1220 = vmax.f32 %v1188, 0.0
      %v1221 = vmax.f32 %v1189, 0.0
      %v1222 = vmax.f32 %v1190, 0.0
      %v1223 = vmax.f32 %v1191, 0.0
      %v1224 = vmax.f32 %v1192, 0.0
      %v1225 = vmax.f32 %v1193, 0.0
      %v1226 = vmax.f32 %v1194, 0.0
      %v1227 = vmax.f32 %v1195, 0.0
      %v1228 = vmax.f32 %v1196, 0.0
      %v1229 = vmax.f32 %v1197, 0.0
      %v1230 = vmax.f32 %v1198, 0.0
      %v1231 = vmax.f32 %v1199, 0.0
      %v1232 = vmax.f32 %v1200, 0.0
      %v1233 = vmax.f32 %v1201, 0.0
      %v1234 = vmax.f32 %v1202, 0.0
      %v1235 = vmax.f32 %v1203, 0.0
      %v1236 = vmax.f32 %v1204, 0.0
      %1237 = vst [vmem:[#allocation3] sm:$0x1] 0.0
      %1238 = vst [vmem:[#allocation3 + $0x1] sm:$0xff] %v1205
      %1239 = vst [vmem:[#allocation3 + $0x9] sm:$0xff] %v1206
      %1240 = vst [vmem:[#allocation3 + $0x11] sm:$0xff] %v1207
      %1241 = vst [vmem:[#allocation3 + $0x19] sm:$0xf] %v1208
      %1242 = vst [vmem:[#allocation3 + $0x1d] sm:$0x1] 0.0
      %1243 = vst [vmem:[#allocation3 + $0x20] sm:$0x1] 0.0
      %1244 = vst [vmem:[#allocation3 + $0x21] sm:$0xff] %v1209
      %1245 = vst [vmem:[#allocation3 + $0x29] sm:$0xff] %v1210
      %1246 = vst [vmem:[#allocation3 + $0x31] sm:$0xff] %v1211
      %1247 = vst [vmem:[#allocation3 + $0x39] sm:$0xf] %v1212
      %1248 = vst [vmem:[#allocation3 + $0x3d] sm:$0x1] 0.0
      %1249 = vst [vmem:[#allocation3 + $0x40] sm:$0x1] 0.0
      %1250 = vst [vmem:[#allocation3 + $0x41] sm:$0xff] %v1213
      %1251 = vst [vmem:[#allocation3 + $0x49] sm:$0xff] %v1214
      %1252 = vst [vmem:[#allocation3 + $0x51] sm:$0xff] %v1215
      %1253 = vst [vmem:[#allocation3 + $0x59] sm:$0xf] %v1216
      %1254 = vst [vmem:[#allocation3 + $0x5d] sm:$0x1] 0.0
      %1255 = vst [vmem:[#allocation3 + $0x60] sm:$0x1] 0.0
      %1256 = vst [vmem:[#allocation3 + $0x61] sm:$0xff] %v1217
      %1257 = vst [vmem:[#allocation3 + $0x69] sm:$0xff] %v1218
      %1258 = vst [vmem:[#allocation3 + $0x71] sm:$0xff] %v1219
      %1259 = vst [vmem:[#allocation3 + $0x79] sm:$0xf] %v1220
      %1260 = vst [vmem:[#allocation3 + $0x7d] sm:$0x1] 0.0
      %1261 = vst [vmem:[#allocation3 + $0x80] sm:$0x1] 0.0
      %1262 = vst [vmem:[#allocation3 + $0x81] sm:$0xff] %v1221
      %1263 = vst [vmem:[#allocation3 + $0x89] sm:$0xff] %v1222
      %1264 = vst [vmem:[#allocation3 + $0x91] sm:$0xff] %v1223
      %1265 = vst [vmem:[#allocation3 + $0x99] sm:$0xf] %v1224
      %1266 = vst [vmem:[#allocation3 + $0x9d] sm:$0x1] 0.0
      %1267 = vst [vmem:[#allocation3 + $0xa0] sm:$0x1] 0.0
      %1268 = vst [vmem:[#allocation3 + $0xa1] sm:$0xff] %v1225
      %1269 = vst [vmem:[#allocation3 + $0xa9] sm:$0xff] %v1226
      %1270 = vst [vmem:[#allocation3 + $0xb1] sm:$0xff] %v1227
      %1271 = vst [vmem:[#allocation3 + $0xb9] sm:$0xf] %v1228
      %1272 = vst [vmem:[#allocation3 + $0xbd] sm:$0x1] 0.0
      %1273 = vst [vmem:[#allocation3 + $0xc0] sm:$0x1] 0.0
      %1274 = vst [vmem:[#allocation3 + $0xc1] sm:$0xff] %v1229
      %1275 = vst [vmem:[#allocation3 + $0xc9] sm:$0xff] %v1230
      %1276 = vst [vmem:[#allocation3 + $0xd1] sm:$0xff] %v1231
      %1277 = vst [vmem:[#allocation3 + $0xd9] sm:$0xf] %v1232
      %1278 = vst [vmem:[#allocation3 + $0xdd] sm:$0x1] 0.0
      %1279 = vst [vmem:[#allocation3 + $0xe0] sm:$0x1] 0.0
      %1280 = vst [vmem:[#allocation3 + $0xe1] sm:$0xff] %v1233
      %1281 = vst [vmem:[#allocation3 + $0xe9] sm:$0xff] %v1234
      %1282 = vst [vmem:[#allocation3 + $0xf1] sm:$0xff] %v1235
      %1283 = vst [vmem:[#allocation3 + $0xf9] sm:$0xf] %v1236
      %1284 = vst [vmem:[#allocation3 + $0xfd] sm:$0x1] 0.0
      %v1285 = vld [vmem:[#allocation3] sm:$0xff]
      %v1286 = vld [vmem:[#allocation3 + $0x8] sm:$0xff]
      %v1287 = vld [vmem:[#allocation3 + $0x10] sm:$0xff]
      %v1288 = vld [vmem:[#allocation3 + $0x18] sm:$0xff]
      %v1289 = vld [vmem:[#allocation3 + $0x20] sm:$0xff]
      %v1290 = vld [vmem:[#allocation3 + $0x28] sm:$0xff]
      %v1291 = vld [vmem:[#allocation3 + $0x30] sm:$0xff]
      %v1292 = vld [vmem:[#allocation3 + $0x38] sm:$0xff]
      %v1293 = vld [vmem:[#allocation3 + $0x40] sm:$0xff]
      %v1294 = vld [vmem:[#allocation3 + $0x48] sm:$0xff]
      %v1295 = vld [vmem:[#allocation3 + $0x50] sm:$0xff]
      %v1296 = vld [vmem:[#allocation3 + $0x58] sm:$0xff]
      %v1297 = vld [vmem:[#allocation3 + $0x60] sm:$0xff]
      %v1298 = vld [vmem:[#allocation3 + $0x68] sm:$0xff]
      %v1299 = vld [vmem:[#allocation3 + $0x70] sm:$0xff]
      %v1300 = vld [vmem:[#allocation3 + $0x78] sm:$0xff]
      %v1301 = vld [vmem:[#allocation3 + $0x80] sm:$0xff]
      %v1302 = vld [vmem:[#allocation3 + $0x88] sm:$0xff]
      %v1303 = vld [vmem:[#allocation3 + $0x90] sm:$0xff]
      %v1304 = vld [vmem:[#allocation3 + $0x98] sm:$0xff]
      %v1305 = vld [vmem:[#allocation3 + $0xa0] sm:$0xff]
      %v1306 = vld [vmem:[#allocation3 + $0xa8] sm:$0xff]
      %v1307 = vld [vmem:[#allocation3 + $0xb0] sm:$0xff]
      %v1308 = vld [vmem:[#allocation3 + $0xb8] sm:$0xff]
      %v1309 = vld [vmem:[#allocation3 + $0xc0] sm:$0xff]
      %v1310 = vld [vmem:[#allocation3 + $0xc8] sm:$0xff]
      %v1311 = vld [vmem:[#allocation3 + $0xd0] sm:$0xff]
      %v1312 = vld [vmem:[#allocation3 + $0xd8] sm:$0xff]
      %v1313 = vld [vmem:[#allocation3 + $0xe0] sm:$0xff]
      %v1314 = vld [vmem:[#allocation3 + $0xe8] sm:$0xff]
      %v1315 = vld [vmem:[#allocation3 + $0xf0] sm:$0xff]
      %v1316 = vld [vmem:[#allocation3 + $0xf8] sm:$0xf]
      %s1317 = scalar_lea.vmem %s1, 640
      %v1318 = vld [vmem:[%s1317] sm:$0xff]
      %v1319 = vld [vmem:[%s1317 + $0x8] sm:$0xff]
      %v1320 = vld [vmem:[%s1317 + $0x10] sm:$0xff]
      %v1321 = vld [vmem:[%s1317 + $0x18] sm:$0xff]
      %v1322 = vld [vmem:[%s1317 + $0x20] sm:$0xff]
      %v1323 = vld [vmem:[%s1317 + $0x28] sm:$0xff]
      %v1324 = vld [vmem:[%s1317 + $0x30] sm:$0xff]
      %v1325 = vld [vmem:[%s1317 + $0x38] sm:$0xff]
      %v1326 = vld [vmem:[%s1317 + $0x40] sm:$0xff]
      %v1327 = vld [vmem:[%s1317 + $0x48] sm:$0xff]
      %v1328 = vld [vmem:[%s1317 + $0x50] sm:$0xff]
      %v1329 = vld [vmem:[%s1317 + $0x58] sm:$0xff]
      %v1330 = vld [vmem:[%s1317 + $0x60] sm:$0xff]
      %v1331 = vld [vmem:[%s1317 + $0x68] sm:$0xff]
      %v1332 = vld [vmem:[%s1317 + $0x70] sm:$0xff]
      %v1333 = vld [vmem:[%s1317 + $0x78] sm:$0xff]
      %v1334 = vld [vmem:[#allocation3 + $0x1] sm:$0xff]
      %v1335 = vld [vmem:[#allocation3 + $0x9] sm:$0xff]
      %v1336 = vld [vmem:[#allocation3 + $0x11] sm:$0xff]
      %v1337 = vld [vmem:[#allocation3 + $0x19] sm:$0xff]
      %v1338 = vld [vmem:[#allocation3 + $0x21] sm:$0xff]
      %v1339 = vld [vmem:[#allocation3 + $0x29] sm:$0xff]
      %v1340 = vld [vmem:[#allocation3 + $0x31] sm:$0xff]
      %v1341 = vld [vmem:[#allocation3 + $0x39] sm:$0xff]
      %v1342 = vld [vmem:[#allocation3 + $0x41] sm:$0xff]
      %v1343 = vld [vmem:[#allocation3 + $0x49] sm:$0xff]
      %v1344 = vld [vmem:[#allocation3 + $0x51] sm:$0xff]
      %v1345 = vld [vmem:[#allocation3 + $0x59] sm:$0xff]
      %v1346 = vld [vmem:[#allocation3 + $0x61] sm:$0xff]
      %v1347 = vld [vmem:[#allocation3 + $0x69] sm:$0xff]
      %v1348 = vld [vmem:[#allocation3 + $0x71] sm:$0xff]
      %v1349 = vld [vmem:[#allocation3 + $0x79] sm:$0xff]
      %v1350 = vld [vmem:[#allocation3 + $0x81] sm:$0xff]
      %v1351 = vld [vmem:[#allocation3 + $0x89] sm:$0xff]
      %v1352 = vld [vmem:[#allocation3 + $0x91] sm:$0xff]
      %v1353 = vld [vmem:[#allocation3 + $0x99] sm:$0xff]
      %v1354 = vld [vmem:[#allocation3 + $0xa1] sm:$0xff]
      %v1355 = vld [vmem:[#allocation3 + $0xa9] sm:$0xff]
      %v1356 = vld [vmem:[#allocation3 + $0xb1] sm:$0xff]
      %v1357 = vld [vmem:[#allocation3 + $0xb9] sm:$0xff]
      %v1358 = vld [vmem:[#allocation3 + $0xc1] sm:$0xff]
      %v1359 = vld [vmem:[#allocation3 + $0xc9] sm:$0xff]
      %v1360 = vld [vmem:[#allocation3 + $0xd1] sm:$0xff]
      %v1361 = vld [vmem:[#allocation3 + $0xd9] sm:$0xff]
      %v1362 = vld [vmem:[#allocation3 + $0xe1] sm:$0xff]
      %v1363 = vld [vmem:[#allocation3 + $0xe9] sm:$0xff]
      %v1364 = vld [vmem:[#allocation3 + $0xf1] sm:$0xff]
      %v1365 = vld [vmem:[#allocation3 + $0xf9] sm:$0xf]
      %s1366 = scalar_lea.vmem %s1, 768
      %v1367 = vld [vmem:[%s1366] sm:$0xff]
      %v1368 = vld [vmem:[%s1366 + $0x8] sm:$0xff]
      %v1369 = vld [vmem:[%s1366 + $0x10] sm:$0xff]
      %v1370 = vld [vmem:[%s1366 + $0x18] sm:$0xff]
      %v1371 = vld [vmem:[%s1366 + $0x20] sm:$0xff]
      %v1372 = vld [vmem:[%s1366 + $0x28] sm:$0xff]
      %v1373 = vld [vmem:[%s1366 + $0x30] sm:$0xff]
      %v1374 = vld [vmem:[%s1366 + $0x38] sm:$0xff]
      %v1375 = vld [vmem:[%s1366 + $0x40] sm:$0xff]
      %v1376 = vld [vmem:[%s1366 + $0x48] sm:$0xff]
      %v1377 = vld [vmem:[%s1366 + $0x50] sm:$0xff]
      %v1378 = vld [vmem:[%s1366 + $0x58] sm:$0xff]
      %v1379 = vld [vmem:[%s1366 + $0x60] sm:$0xff]
      %v1380 = vld [vmem:[%s1366 + $0x68] sm:$0xff]
      %v1381 = vld [vmem:[%s1366 + $0x70] sm:$0xff]
      %v1382 = vld [vmem:[%s1366 + $0x78] sm:$0xff]
      %1383 = vmatpush.msra.mxu0 %v1382
      %1384 = vmatpush.msra.mxu0 %v1381
      %1385 = vmatpush.msra.mxu0 %v1380
      %1386 = vmatpush.msra.mxu0 %v1379
      %1387 = vmatpush.msra.mxu0 %v1378
      %1388 = vmatpush.msra.mxu0 %v1377
      %1389 = vmatpush.msra.mxu0 %v1376
      %1390 = vmatpush.msra.mxu0 %v1375
      %1391 = vmatpush.msra.mxu0 %v1374
      %1392 = vmatpush.msra.mxu0 %v1373
      %1393 = vmatpush.msra.mxu0 %v1372
      %1394 = vmatpush.msra.mxu0 %v1371
      %1395 = vmatpush.msra.mxu0 %v1370
      %1396 = vmatpush.msra.mxu0 %v1369
      %1397 = vmatpush.msra.mxu0 %v1368
      %1398 = vmatpush.msra.mxu0 %v1367
      %1399 = vmatmul.f32.gmra.mxu0 %v1334
      %v1400 = vpop.f32.mrf.mxu0
      %v1401 = vadd.f32 0.0, %v1400
      %1402 = vmatmul.f32.gmra.mxu0 %v1335
      %v1403 = vpop.f32.mrf.mxu0
      %v1404 = vadd.f32 0.0, %v1403
      %1405 = vmatmul.f32.gmra.mxu0 %v1336
      %v1406 = vpop.f32.mrf.mxu0
      %v1407 = vadd.f32 0.0, %v1406
      %1408 = vmatmul.f32.gmra.mxu0 %v1337
      %v1409 = vpop.f32.mrf.mxu0
      %v1410 = vadd.f32 0.0, %v1409
      %1411 = vmatmul.f32.gmra.mxu0 %v1338
      %v1412 = vpop.f32.mrf.mxu0
      %v1413 = vadd.f32 0.0, %v1412
      %1414 = vmatmul.f32.gmra.mxu0 %v1339
      %v1415 = vpop.f32.mrf.mxu0
      %v1416 = vadd.f32 0.0, %v1415
      %1417 = vmatmul.f32.gmra.mxu0 %v1340
      %v1418 = vpop.f32.mrf.mxu0
      %v1419 = vadd.f32 0.0, %v1418
      %1420 = vmatmul.f32.gmra.mxu0 %v1341
      %v1421 = vpop.f32.mrf.mxu0
      %v1422 = vadd.f32 0.0, %v1421
      %1423 = vmatmul.f32.gmra.mxu0 %v1342
      %v1424 = vpop.f32.mrf.mxu0
      %v1425 = vadd.f32 0.0, %v1424
      %1426 = vmatmul.f32.gmra.mxu0 %v1343
      %v1427 = vpop.f32.mrf.mxu0
      %v1428 = vadd.f32 0.0, %v1427
      %1429 = vmatmul.f32.gmra.mxu0 %v1344
      %v1430 = vpop.f32.mrf.mxu0
      %v1431 = vadd.f32 0.0, %v1430
      %1432 = vmatmul.f32.gmra.mxu0 %v1345
      %v1433 = vpop.f32.mrf.mxu0
      %v1434 = vadd.f32 0.0, %v1433
      %1435 = vmatmul.f32.gmra.mxu0 %v1346
      %v1436 = vpop.f32.mrf.mxu0
      %v1437 = vadd.f32 0.0, %v1436
      %1438 = vmatmul.f32.gmra.mxu0 %v1347
      %v1439 = vpop.f32.mrf.mxu0
      %v1440 = vadd.f32 0.0, %v1439
      %1441 = vmatmul.f32.gmra.mxu0 %v1348
      %v1442 = vpop.f32.mrf.mxu0
      %v1443 = vadd.f32 0.0, %v1442
      %1444 = vmatmul.f32.gmra.mxu0 %v1349
      %v1445 = vpop.f32.mrf.mxu0
      %v1446 = vadd.f32 0.0, %v1445
      %1447 = vmatmul.f32.gmra.mxu0 %v1350
      %v1448 = vpop.f32.mrf.mxu0
      %v1449 = vadd.f32 0.0, %v1448
      %1450 = vmatmul.f32.gmra.mxu0 %v1351
      %v1451 = vpop.f32.mrf.mxu0
      %v1452 = vadd.f32 0.0, %v1451
      %1453 = vmatmul.f32.gmra.mxu0 %v1352
      %v1454 = vpop.f32.mrf.mxu0
      %v1455 = vadd.f32 0.0, %v1454
      %1456 = vmatmul.f32.gmra.mxu0 %v1353
      %v1457 = vpop.f32.mrf.mxu0
      %v1458 = vadd.f32 0.0, %v1457
      %1459 = vmatmul.f32.gmra.mxu0 %v1354
      %v1460 = vpop.f32.mrf.mxu0
      %v1461 = vadd.f32 0.0, %v1460
      %1462 = vmatmul.f32.gmra.mxu0 %v1355
      %v1463 = vpop.f32.mrf.mxu0
      %v1464 = vadd.f32 0.0, %v1463
      %1465 = vmatmul.f32.gmra.mxu0 %v1356
      %v1466 = vpop.f32.mrf.mxu0
      %v1467 = vadd.f32 0.0, %v1466
      %1468 = vmatmul.f32.gmra.mxu0 %v1357
      %v1469 = vpop.f32.mrf.mxu0
      %v1470 = vadd.f32 0.0, %v1469
      %1471 = vmatmul.f32.gmra.mxu0 %v1358
      %v1472 = vpop.f32.mrf.mxu0
      %v1473 = vadd.f32 0.0, %v1472
      %1474 = vmatmul.f32.gmra.mxu0 %v1359
      %v1475 = vpop.f32.mrf.mxu0
      %v1476 = vadd.f32 0.0, %v1475
      %1477 = vmatmul.f32.gmra.mxu0 %v1360
      %v1478 = vpop.f32.mrf.mxu0
      %v1479 = vadd.f32 0.0, %v1478
      %1480 = vmatmul.f32.gmra.mxu0 %v1361
      %v1481 = vpop.f32.mrf.mxu0
      %v1482 = vadd.f32 0.0, %v1481
      %1483 = vmatmul.f32.gmra.mxu0 %v1362
      %v1484 = vpop.f32.mrf.mxu0
      %v1485 = vadd.f32 0.0, %v1484
      %1486 = vmatmul.f32.gmra.mxu0 %v1363
      %v1487 = vpop.f32.mrf.mxu0
      %v1488 = vadd.f32 0.0, %v1487
      %1489 = vmatmul.f32.gmra.mxu0 %v1364
      %v1490 = vpop.f32.mrf.mxu0
      %v1491 = vadd.f32 0.0, %v1490
      %1492 = vmatmul.f32.gmra.mxu0 %v1365
      %v1493 = vpop.f32.mrf.mxu0
      %v1494 = vadd.f32 0.0, %v1493
      %1495 = vdwg.mxu0
      %1496 = vmatpush.msra.mxu0 %v1333
      %1497 = vmatpush.msra.mxu0 %v1332
      %1498 = vmatpush.msra.mxu0 %v1331
      %1499 = vmatpush.msra.mxu0 %v1330
      %1500 = vmatpush.msra.mxu0 %v1329
      %1501 = vmatpush.msra.mxu0 %v1328
      %1502 = vmatpush.msra.mxu0 %v1327
      %1503 = vmatpush.msra.mxu0 %v1326
      %1504 = vmatpush.msra.mxu0 %v1325
      %1505 = vmatpush.msra.mxu0 %v1324
      %1506 = vmatpush.msra.mxu0 %v1323
      %1507 = vmatpush.msra.mxu0 %v1322
      %1508 = vmatpush.msra.mxu0 %v1321
      %1509 = vmatpush.msra.mxu0 %v1320
      %1510 = vmatpush.msra.mxu0 %v1319
      %1511 = vmatpush.msra.mxu0 %v1318
      %1512 = vmatmul.f32.gmra.mxu0 %v1285
      %v1513 = vpop.f32.mrf.mxu0
      %v1514 = vadd.f32 %v1401, %v1513
      %1515 = vmatmul.f32.gmra.mxu0 %v1286
      %v1516 = vpop.f32.mrf.mxu0
      %v1517 = vadd.f32 %v1404, %v1516
      %1518 = vmatmul.f32.gmra.mxu0 %v1287
      %v1519 = vpop.f32.mrf.mxu0
      %v1520 = vadd.f32 %v1407, %v1519
      %1521 = vmatmul.f32.gmra.mxu0 %v1288
      %v1522 = vpop.f32.mrf.mxu0
      %v1523 = vadd.f32 %v1410, %v1522
      %1524 = vmatmul.f32.gmra.mxu0 %v1289
      %v1525 = vpop.f32.mrf.mxu0
      %v1526 = vadd.f32 %v1413, %v1525
      %1527 = vmatmul.f32.gmra.mxu0 %v1290
      %v1528 = vpop.f32.mrf.mxu0
      %v1529 = vadd.f32 %v1416, %v1528
      %1530 = vmatmul.f32.gmra.mxu0 %v1291
      %v1531 = vpop.f32.mrf.mxu0
      %v1532 = vadd.f32 %v1419, %v1531
      %1533 = vmatmul.f32.gmra.mxu0 %v1292
      %v1534 = vpop.f32.mrf.mxu0
      %v1535 = vadd.f32 %v1422, %v1534
      %1536 = vmatmul.f32.gmra.mxu0 %v1293
      %v1537 = vpop.f32.mrf.mxu0
      %v1538 = vadd.f32 %v1425, %v1537
      %1539 = vmatmul.f32.gmra.mxu0 %v1294
      %v1540 = vpop.f32.mrf.mxu0
      %v1541 = vadd.f32 %v1428, %v1540
      %1542 = vmatmul.f32.gmra.mxu0 %v1295
      %v1543 = vpop.f32.mrf.mxu0
      %v1544 = vadd.f32 %v1431, %v1543
      %1545 = vmatmul.f32.gmra.mxu0 %v1296
      %v1546 = vpop.f32.mrf.mxu0
      %v1547 = vadd.f32 %v1434, %v1546
      %1548 = vmatmul.f32.gmra.mxu0 %v1297
      %v1549 = vpop.f32.mrf.mxu0
      %v1550 = vadd.f32 %v1437, %v1549
      %1551 = vmatmul.f32.gmra.mxu0 %v1298
      %v1552 = vpop.f32.mrf.mxu0
      %v1553 = vadd.f32 %v1440, %v1552
      %1554 = vmatmul.f32.gmra.mxu0 %v1299
      %v1555 = vpop.f32.mrf.mxu0
      %v1556 = vadd.f32 %v1443, %v1555
      %1557 = vmatmul.f32.gmra.mxu0 %v1300
      %v1558 = vpop.f32.mrf.mxu0
      %v1559 = vadd.f32 %v1446, %v1558
      %1560 = vmatmul.f32.gmra.mxu0 %v1301
      %v1561 = vpop.f32.mrf.mxu0
      %v1562 = vadd.f32 %v1449, %v1561
      %1563 = vmatmul.f32.gmra.mxu0 %v1302
      %v1564 = vpop.f32.mrf.mxu0
      %v1565 = vadd.f32 %v1452, %v1564
      %1566 = vmatmul.f32.gmra.mxu0 %v1303
      %v1567 = vpop.f32.mrf.mxu0
      %v1568 = vadd.f32 %v1455, %v1567
      %1569 = vmatmul.f32.gmra.mxu0 %v1304
      %v1570 = vpop.f32.mrf.mxu0
      %v1571 = vadd.f32 %v1458, %v1570
      %1572 = vmatmul.f32.gmra.mxu0 %v1305
      %v1573 = vpop.f32.mrf.mxu0
      %v1574 = vadd.f32 %v1461, %v1573
      %1575 = vmatmul.f32.gmra.mxu0 %v1306
      %v1576 = vpop.f32.mrf.mxu0
      %v1577 = vadd.f32 %v1464, %v1576
      %1578 = vmatmul.f32.gmra.mxu0 %v1307
      %v1579 = vpop.f32.mrf.mxu0
      %v1580 = vadd.f32 %v1467, %v1579
      %1581 = vmatmul.f32.gmra.mxu0 %v1308
      %v1582 = vpop.f32.mrf.mxu0
      %v1583 = vadd.f32 %v1470, %v1582
      %1584 = vmatmul.f32.gmra.mxu0 %v1309
      %v1585 = vpop.f32.mrf.mxu0
      %v1586 = vadd.f32 %v1473, %v1585
      %1587 = vmatmul.f32.gmra.mxu0 %v1310
      %v1588 = vpop.f32.mrf.mxu0
      %v1589 = vadd.f32 %v1476, %v1588
      %1590 = vmatmul.f32.gmra.mxu0 %v1311
      %v1591 = vpop.f32.mrf.mxu0
      %v1592 = vadd.f32 %v1479, %v1591
      %1593 = vmatmul.f32.gmra.mxu0 %v1312
      %v1594 = vpop.f32.mrf.mxu0
      %v1595 = vadd.f32 %v1482, %v1594
      %1596 = vmatmul.f32.gmra.mxu0 %v1313
      %v1597 = vpop.f32.mrf.mxu0
      %v1598 = vadd.f32 %v1485, %v1597
      %1599 = vmatmul.f32.gmra.mxu0 %v1314
      %v1600 = vpop.f32.mrf.mxu0
      %v1601 = vadd.f32 %v1488, %v1600
      %1602 = vmatmul.f32.gmra.mxu0 %v1315
      %v1603 = vpop.f32.mrf.mxu0
      %v1604 = vadd.f32 %v1491, %v1603
      %1605 = vmatmul.f32.gmra.mxu0 %v1316
      %v1606 = vpop.f32.mrf.mxu0
      %v1607 = vadd.f32 %v1494, %v1606
      %1608 = vdwg.mxu0
      %v1609 = vld [vmem:[#allocation3 + $0x2] sm:$0xff]
      %v1610 = vld [vmem:[#allocation3 + $0xa] sm:$0xff]
      %v1611 = vld [vmem:[#allocation3 + $0x12] sm:$0xff]
      %v1612 = vld [vmem:[#allocation3 + $0x1a] sm:$0xff]
      %v1613 = vld [vmem:[#allocation3 + $0x22] sm:$0xff]
      %v1614 = vld [vmem:[#allocation3 + $0x2a] sm:$0xff]
      %v1615 = vld [vmem:[#allocation3 + $0x32] sm:$0xff]
      %v1616 = vld [vmem:[#allocation3 + $0x3a] sm:$0xff]
      %v1617 = vld [vmem:[#allocation3 + $0x42] sm:$0xff]
      %v1618 = vld [vmem:[#allocation3 + $0x4a] sm:$0xff]
      %v1619 = vld [vmem:[#allocation3 + $0x52] sm:$0xff]
      %v1620 = vld [vmem:[#allocation3 + $0x5a] sm:$0xff]
      %v1621 = vld [vmem:[#allocation3 + $0x62] sm:$0xff]
      %v1622 = vld [vmem:[#allocation3 + $0x6a] sm:$0xff]
      %v1623 = vld [vmem:[#allocation3 + $0x72] sm:$0xff]
      %v1624 = vld [vmem:[#allocation3 + $0x7a] sm:$0xff]
      %v1625 = vld [vmem:[#allocation3 + $0x82] sm:$0xff]
      %v1626 = vld [vmem:[#allocation3 + $0x8a] sm:$0xff]
      %v1627 = vld [vmem:[#allocation3 + $0x92] sm:$0xff]
      %v1628 = vld [vmem:[#allocation3 + $0x9a] sm:$0xff]
      %v1629 = vld [vmem:[#allocation3 + $0xa2] sm:$0xff]
      %v1630 = vld [vmem:[#allocation3 + $0xaa] sm:$0xff]
      %v1631 = vld [vmem:[#allocation3 + $0xb2] sm:$0xff]
      %v1632 = vld [vmem:[#allocation3 + $0xba] sm:$0xff]
      %v1633 = vld [vmem:[#allocation3 + $0xc2] sm:$0xff]
      %v1634 = vld [vmem:[#allocation3 + $0xca] sm:$0xff]
      %v1635 = vld [vmem:[#allocation3 + $0xd2] sm:$0xff]
      %v1636 = vld [vmem:[#allocation3 + $0xda] sm:$0xff]
      %v1637 = vld [vmem:[#allocation3 + $0xe2] sm:$0xff]
      %v1638 = vld [vmem:[#allocation3 + $0xea] sm:$0xff]
      %v1639 = vld [vmem:[#allocation3 + $0xf2] sm:$0xff]
      %v1640 = vld [vmem:[#allocation3 + $0xfa] sm:$0xf]
      %s1641 = scalar_lea.vmem %s1, 896
      %v1642 = vld [vmem:[%s1641] sm:$0xff]
      %v1643 = vld [vmem:[%s1641 + $0x8] sm:$0xff]
      %v1644 = vld [vmem:[%s1641 + $0x10] sm:$0xff]
      %v1645 = vld [vmem:[%s1641 + $0x18] sm:$0xff]
      %v1646 = vld [vmem:[%s1641 + $0x20] sm:$0xff]
      %v1647 = vld [vmem:[%s1641 + $0x28] sm:$0xff]
      %v1648 = vld [vmem:[%s1641 + $0x30] sm:$0xff]
      %v1649 = vld [vmem:[%s1641 + $0x38] sm:$0xff]
      %v1650 = vld [vmem:[%s1641 + $0x40] sm:$0xff]
      %v1651 = vld [vmem:[%s1641 + $0x48] sm:$0xff]
      %v1652 = vld [vmem:[%s1641 + $0x50] sm:$0xff]
      %v1653 = vld [vmem:[%s1641 + $0x58] sm:$0xff]
      %v1654 = vld [vmem:[%s1641 + $0x60] sm:$0xff]
      %v1655 = vld [vmem:[%s1641 + $0x68] sm:$0xff]
      %v1656 = vld [vmem:[%s1641 + $0x70] sm:$0xff]
      %v1657 = vld [vmem:[%s1641 + $0x78] sm:$0xff]
      %1658 = vmatpush.msra.mxu0 %v1657
      %1659 = vmatpush.msra.mxu0 %v1656
      %1660 = vmatpush.msra.mxu0 %v1655
      %1661 = vmatpush.msra.mxu0 %v1654
      %1662 = vmatpush.msra.mxu0 %v1653
      %1663 = vmatpush.msra.mxu0 %v1652
      %1664 = vmatpush.msra.mxu0 %v1651
      %1665 = vmatpush.msra.mxu0 %v1650
      %1666 = vmatpush.msra.mxu0 %v1649
      %1667 = vmatpush.msra.mxu0 %v1648
      %1668 = vmatpush.msra.mxu0 %v1647
      %1669 = vmatpush.msra.mxu0 %v1646
      %1670 = vmatpush.msra.mxu0 %v1645
      %1671 = vmatpush.msra.mxu0 %v1644
      %1672 = vmatpush.msra.mxu0 %v1643
      %1673 = vmatpush.msra.mxu0 %v1642
      %1674 = vmatmul.f32.gmra.mxu0 %v1609
      %v1675 = vpop.f32.mrf.mxu0
      %v1676 = vadd.f32 0.0, %v1675
      %1677 = vmatmul.f32.gmra.mxu0 %v1610
      %v1678 = vpop.f32.mrf.mxu0
      %v1679 = vadd.f32 0.0, %v1678
      %1680 = vmatmul.f32.gmra.mxu0 %v1611
      %v1681 = vpop.f32.mrf.mxu0
      %v1682 = vadd.f32 0.0, %v1681
      %1683 = vmatmul.f32.gmra.mxu0 %v1612
      %v1684 = vpop.f32.mrf.mxu0
      %v1685 = vadd.f32 0.0, %v1684
      %1686 = vmatmul.f32.gmra.mxu0 %v1613
      %v1687 = vpop.f32.mrf.mxu0
      %v1688 = vadd.f32 0.0, %v1687
      %1689 = vmatmul.f32.gmra.mxu0 %v1614
      %v1690 = vpop.f32.mrf.mxu0
      %v1691 = vadd.f32 0.0, %v1690
      %1692 = vmatmul.f32.gmra.mxu0 %v1615
      %v1693 = vpop.f32.mrf.mxu0
      %v1694 = vadd.f32 0.0, %v1693
      %1695 = vmatmul.f32.gmra.mxu0 %v1616
      %v1696 = vpop.f32.mrf.mxu0
      %v1697 = vadd.f32 0.0, %v1696
      %1698 = vmatmul.f32.gmra.mxu0 %v1617
      %v1699 = vpop.f32.mrf.mxu0
      %v1700 = vadd.f32 0.0, %v1699
      %1701 = vmatmul.f32.gmra.mxu0 %v1618
      %v1702 = vpop.f32.mrf.mxu0
      %v1703 = vadd.f32 0.0, %v1702
      %1704 = vmatmul.f32.gmra.mxu0 %v1619
      %v1705 = vpop.f32.mrf.mxu0
      %v1706 = vadd.f32 0.0, %v1705
      %1707 = vmatmul.f32.gmra.mxu0 %v1620
      %v1708 = vpop.f32.mrf.mxu0
      %v1709 = vadd.f32 0.0, %v1708
      %1710 = vmatmul.f32.gmra.mxu0 %v1621
      %v1711 = vpop.f32.mrf.mxu0
      %v1712 = vadd.f32 0.0, %v1711
      %1713 = vmatmul.f32.gmra.mxu0 %v1622
      %v1714 = vpop.f32.mrf.mxu0
      %v1715 = vadd.f32 0.0, %v1714
      %1716 = vmatmul.f32.gmra.mxu0 %v1623
      %v1717 = vpop.f32.mrf.mxu0
      %v1718 = vadd.f32 0.0, %v1717
      %1719 = vmatmul.f32.gmra.mxu0 %v1624
      %v1720 = vpop.f32.mrf.mxu0
      %v1721 = vadd.f32 0.0, %v1720
      %1722 = vmatmul.f32.gmra.mxu0 %v1625
      %v1723 = vpop.f32.mrf.mxu0
      %v1724 = vadd.f32 0.0, %v1723
      %1725 = vmatmul.f32.gmra.mxu0 %v1626
      %v1726 = vpop.f32.mrf.mxu0
      %v1727 = vadd.f32 0.0, %v1726
      %1728 = vmatmul.f32.gmra.mxu0 %v1627
      %v1729 = vpop.f32.mrf.mxu0
      %v1730 = vadd.f32 0.0, %v1729
      %1731 = vmatmul.f32.gmra.mxu0 %v1628
      %v1732 = vpop.f32.mrf.mxu0
      %v1733 = vadd.f32 0.0, %v1732
      %1734 = vmatmul.f32.gmra.mxu0 %v1629
      %v1735 = vpop.f32.mrf.mxu0
      %v1736 = vadd.f32 0.0, %v1735
      %1737 = vmatmul.f32.gmra.mxu0 %v1630
      %v1738 = vpop.f32.mrf.mxu0
      %v1739 = vadd.f32 0.0, %v1738
      %1740 = vmatmul.f32.gmra.mxu0 %v1631
      %v1741 = vpop.f32.mrf.mxu0
      %v1742 = vadd.f32 0.0, %v1741
      %1743 = vmatmul.f32.gmra.mxu0 %v1632
      %v1744 = vpop.f32.mrf.mxu0
      %v1745 = vadd.f32 0.0, %v1744
      %1746 = vmatmul.f32.gmra.mxu0 %v1633
      %v1747 = vpop.f32.mrf.mxu0
      %v1748 = vadd.f32 0.0, %v1747
      %1749 = vmatmul.f32.gmra.mxu0 %v1634
      %v1750 = vpop.f32.mrf.mxu0
      %v1751 = vadd.f32 0.0, %v1750
      %1752 = vmatmul.f32.gmra.mxu0 %v1635
      %v1753 = vpop.f32.mrf.mxu0
      %v1754 = vadd.f32 0.0, %v1753
      %1755 = vmatmul.f32.gmra.mxu0 %v1636
      %v1756 = vpop.f32.mrf.mxu0
      %v1757 = vadd.f32 0.0, %v1756
      %1758 = vmatmul.f32.gmra.mxu0 %v1637
      %v1759 = vpop.f32.mrf.mxu0
      %v1760 = vadd.f32 0.0, %v1759
      %1761 = vmatmul.f32.gmra.mxu0 %v1638
      %v1762 = vpop.f32.mrf.mxu0
      %v1763 = vadd.f32 0.0, %v1762
      %1764 = vmatmul.f32.gmra.mxu0 %v1639
      %v1765 = vpop.f32.mrf.mxu0
      %v1766 = vadd.f32 0.0, %v1765
      %1767 = vmatmul.f32.gmra.mxu0 %v1640
      %v1768 = vpop.f32.mrf.mxu0
      %v1769 = vadd.f32 0.0, %v1768
      %1770 = vdwg.mxu0
      %v1771 = vadd.f32 %v1514, %v1676
      %v1772 = vadd.f32 %v1517, %v1679
      %v1773 = vadd.f32 %v1520, %v1682
      %v1774 = vadd.f32 %v1523, %v1685
      %v1775 = vadd.f32 %v1526, %v1688
      %v1776 = vadd.f32 %v1529, %v1691
      %v1777 = vadd.f32 %v1532, %v1694
      %v1778 = vadd.f32 %v1535, %v1697
      %v1779 = vadd.f32 %v1538, %v1700
      %v1780 = vadd.f32 %v1541, %v1703
      %v1781 = vadd.f32 %v1544, %v1706
      %v1782 = vadd.f32 %v1547, %v1709
      %v1783 = vadd.f32 %v1550, %v1712
      %v1784 = vadd.f32 %v1553, %v1715
      %v1785 = vadd.f32 %v1556, %v1718
      %v1786 = vadd.f32 %v1559, %v1721
      %v1787 = vadd.f32 %v1562, %v1724
      %v1788 = vadd.f32 %v1565, %v1727
      %v1789 = vadd.f32 %v1568, %v1730
      %v1790 = vadd.f32 %v1571, %v1733
      %v1791 = vadd.f32 %v1574, %v1736
      %v1792 = vadd.f32 %v1577, %v1739
      %v1793 = vadd.f32 %v1580, %v1742
      %v1794 = vadd.f32 %v1583, %v1745
      %v1795 = vadd.f32 %v1586, %v1748
      %v1796 = vadd.f32 %v1589, %v1751
      %v1797 = vadd.f32 %v1592, %v1754
      %v1798 = vadd.f32 %v1595, %v1757
      %v1799 = vadd.f32 %v1598, %v1760
      %v1800 = vadd.f32 %v1601, %v1763
      %v1801 = vadd.f32 %v1604, %v1766
      %v1802 = vadd.f32 %v1607, %v1769
      %v1803 = vld [vmem:[#allocation3 + $0x3] sm:$0xff]
      %v1804 = vld [vmem:[#allocation3 + $0xb] sm:$0xff]
      %v1805 = vld [vmem:[#allocation3 + $0x13] sm:$0xff]
      %v1806 = vld [vmem:[#allocation3 + $0x1b] sm:$0xff]
      %v1807 = vld [vmem:[#allocation3 + $0x23] sm:$0xff]
      %v1808 = vld [vmem:[#allocation3 + $0x2b] sm:$0xff]
      %v1809 = vld [vmem:[#allocation3 + $0x33] sm:$0xff]
      %v1810 = vld [vmem:[#allocation3 + $0x3b] sm:$0xff]
      %v1811 = vld [vmem:[#allocation3 + $0x43] sm:$0xff]
      %v1812 = vld [vmem:[#allocation3 + $0x4b] sm:$0xff]
      %v1813 = vld [vmem:[#allocation3 + $0x53] sm:$0xff]
      %v1814 = vld [vmem:[#allocation3 + $0x5b] sm:$0xff]
      %v1815 = vld [vmem:[#allocation3 + $0x63] sm:$0xff]
      %v1816 = vld [vmem:[#allocation3 + $0x6b] sm:$0xff]
      %v1817 = vld [vmem:[#allocation3 + $0x73] sm:$0xff]
      %v1818 = vld [vmem:[#allocation3 + $0x7b] sm:$0xff]
      %v1819 = vld [vmem:[#allocation3 + $0x83] sm:$0xff]
      %v1820 = vld [vmem:[#allocation3 + $0x8b] sm:$0xff]
      %v1821 = vld [vmem:[#allocation3 + $0x93] sm:$0xff]
      %v1822 = vld [vmem:[#allocation3 + $0x9b] sm:$0xff]
      %v1823 = vld [vmem:[#allocation3 + $0xa3] sm:$0xff]
      %v1824 = vld [vmem:[#allocation3 + $0xab] sm:$0xff]
      %v1825 = vld [vmem:[#allocation3 + $0xb3] sm:$0xff]
      %v1826 = vld [vmem:[#allocation3 + $0xbb] sm:$0xff]
      %v1827 = vld [vmem:[#allocation3 + $0xc3] sm:$0xff]
      %v1828 = vld [vmem:[#allocation3 + $0xcb] sm:$0xff]
      %v1829 = vld [vmem:[#allocation3 + $0xd3] sm:$0xff]
      %v1830 = vld [vmem:[#allocation3 + $0xdb] sm:$0xff]
      %v1831 = vld [vmem:[#allocation3 + $0xe3] sm:$0xff]
      %v1832 = vld [vmem:[#allocation3 + $0xeb] sm:$0xff]
      %v1833 = vld [vmem:[#allocation3 + $0xf3] sm:$0xff]
      %v1834 = vld [vmem:[#allocation3 + $0xfb] sm:$0xf]
      %s1835 = scalar_lea.vmem %s1, 1024
      %v1836 = vld [vmem:[%s1835] sm:$0xff]
      %v1837 = vld [vmem:[%s1835 + $0x8] sm:$0xff]
      %v1838 = vld [vmem:[%s1835 + $0x10] sm:$0xff]
      %v1839 = vld [vmem:[%s1835 + $0x18] sm:$0xff]
      %v1840 = vld [vmem:[%s1835 + $0x20] sm:$0xff]
      %v1841 = vld [vmem:[%s1835 + $0x28] sm:$0xff]
      %v1842 = vld [vmem:[%s1835 + $0x30] sm:$0xff]
      %v1843 = vld [vmem:[%s1835 + $0x38] sm:$0xff]
      %v1844 = vld [vmem:[%s1835 + $0x40] sm:$0xff]
      %v1845 = vld [vmem:[%s1835 + $0x48] sm:$0xff]
      %v1846 = vld [vmem:[%s1835 + $0x50] sm:$0xff]
      %v1847 = vld [vmem:[%s1835 + $0x58] sm:$0xff]
      %v1848 = vld [vmem:[%s1835 + $0x60] sm:$0xff]
      %v1849 = vld [vmem:[%s1835 + $0x68] sm:$0xff]
      %v1850 = vld [vmem:[%s1835 + $0x70] sm:$0xff]
      %v1851 = vld [vmem:[%s1835 + $0x78] sm:$0xff]
      %1852 = vmatpush.msra.mxu0 %v1851
      %1853 = vmatpush.msra.mxu0 %v1850
      %1854 = vmatpush.msra.mxu0 %v1849
      %1855 = vmatpush.msra.mxu0 %v1848
      %1856 = vmatpush.msra.mxu0 %v1847
      %1857 = vmatpush.msra.mxu0 %v1846
      %1858 = vmatpush.msra.mxu0 %v1845
      %1859 = vmatpush.msra.mxu0 %v1844
      %1860 = vmatpush.msra.mxu0 %v1843
      %1861 = vmatpush.msra.mxu0 %v1842
      %1862 = vmatpush.msra.mxu0 %v1841
      %1863 = vmatpush.msra.mxu0 %v1840
      %1864 = vmatpush.msra.mxu0 %v1839
      %1865 = vmatpush.msra.mxu0 %v1838
      %1866 = vmatpush.msra.mxu0 %v1837
      %1867 = vmatpush.msra.mxu0 %v1836
      %1868 = vmatmul.f32.gmra.mxu0 %v1803
      %v1869 = vpop.f32.mrf.mxu0
      %v1870 = vadd.f32 0.0, %v1869
      %1871 = vmatmul.f32.gmra.mxu0 %v1804
      %v1872 = vpop.f32.mrf.mxu0
      %v1873 = vadd.f32 0.0, %v1872
      %1874 = vmatmul.f32.gmra.mxu0 %v1805
      %v1875 = vpop.f32.mrf.mxu0
      %v1876 = vadd.f32 0.0, %v1875
      %1877 = vmatmul.f32.gmra.mxu0 %v1806
      %v1878 = vpop.f32.mrf.mxu0
      %v1879 = vadd.f32 0.0, %v1878
      %1880 = vmatmul.f32.gmra.mxu0 %v1807
      %v1881 = vpop.f32.mrf.mxu0
      %v1882 = vadd.f32 0.0, %v1881
      %1883 = vmatmul.f32.gmra.mxu0 %v1808
      %v1884 = vpop.f32.mrf.mxu0
      %v1885 = vadd.f32 0.0, %v1884
      %1886 = vmatmul.f32.gmra.mxu0 %v1809
      %v1887 = vpop.f32.mrf.mxu0
      %v1888 = vadd.f32 0.0, %v1887
      %1889 = vmatmul.f32.gmra.mxu0 %v1810
      %v1890 = vpop.f32.mrf.mxu0
      %v1891 = vadd.f32 0.0, %v1890
      %1892 = vmatmul.f32.gmra.mxu0 %v1811
      %v1893 = vpop.f32.mrf.mxu0
      %v1894 = vadd.f32 0.0, %v1893
      %1895 = vmatmul.f32.gmra.mxu0 %v1812
      %v1896 = vpop.f32.mrf.mxu0
      %v1897 = vadd.f32 0.0, %v1896
      %1898 = vmatmul.f32.gmra.mxu0 %v1813
      %v1899 = vpop.f32.mrf.mxu0
      %v1900 = vadd.f32 0.0, %v1899
      %1901 = vmatmul.f32.gmra.mxu0 %v1814
      %v1902 = vpop.f32.mrf.mxu0
      %v1903 = vadd.f32 0.0, %v1902
      %1904 = vmatmul.f32.gmra.mxu0 %v1815
      %v1905 = vpop.f32.mrf.mxu0
      %v1906 = vadd.f32 0.0, %v1905
      %1907 = vmatmul.f32.gmra.mxu0 %v1816
      %v1908 = vpop.f32.mrf.mxu0
      %v1909 = vadd.f32 0.0, %v1908
      %1910 = vmatmul.f32.gmra.mxu0 %v1817
      %v1911 = vpop.f32.mrf.mxu0
      %v1912 = vadd.f32 0.0, %v1911
      %1913 = vmatmul.f32.gmra.mxu0 %v1818
      %v1914 = vpop.f32.mrf.mxu0
      %v1915 = vadd.f32 0.0, %v1914
      %1916 = vmatmul.f32.gmra.mxu0 %v1819
      %v1917 = vpop.f32.mrf.mxu0
      %v1918 = vadd.f32 0.0, %v1917
      %1919 = vmatmul.f32.gmra.mxu0 %v1820
      %v1920 = vpop.f32.mrf.mxu0
      %v1921 = vadd.f32 0.0, %v1920
      %1922 = vmatmul.f32.gmra.mxu0 %v1821
      %v1923 = vpop.f32.mrf.mxu0
      %v1924 = vadd.f32 0.0, %v1923
      %1925 = vmatmul.f32.gmra.mxu0 %v1822
      %v1926 = vpop.f32.mrf.mxu0
      %v1927 = vadd.f32 0.0, %v1926
      %1928 = vmatmul.f32.gmra.mxu0 %v1823
      %v1929 = vpop.f32.mrf.mxu0
      %v1930 = vadd.f32 0.0, %v1929
      %1931 = vmatmul.f32.gmra.mxu0 %v1824
      %v1932 = vpop.f32.mrf.mxu0
      %v1933 = vadd.f32 0.0, %v1932
      %1934 = vmatmul.f32.gmra.mxu0 %v1825
      %v1935 = vpop.f32.mrf.mxu0
      %v1936 = vadd.f32 0.0, %v1935
      %1937 = vmatmul.f32.gmra.mxu0 %v1826
      %v1938 = vpop.f32.mrf.mxu0
      %v1939 = vadd.f32 0.0, %v1938
      %1940 = vmatmul.f32.gmra.mxu0 %v1827
      %v1941 = vpop.f32.mrf.mxu0
      %v1942 = vadd.f32 0.0, %v1941
      %1943 = vmatmul.f32.gmra.mxu0 %v1828
      %v1944 = vpop.f32.mrf.mxu0
      %v1945 = vadd.f32 0.0, %v1944
      %1946 = vmatmul.f32.gmra.mxu0 %v1829
      %v1947 = vpop.f32.mrf.mxu0
      %v1948 = vadd.f32 0.0, %v1947
      %1949 = vmatmul.f32.gmra.mxu0 %v1830
      %v1950 = vpop.f32.mrf.mxu0
      %v1951 = vadd.f32 0.0, %v1950
      %1952 = vmatmul.f32.gmra.mxu0 %v1831
      %v1953 = vpop.f32.mrf.mxu0
      %v1954 = vadd.f32 0.0, %v1953
      %1955 = vmatmul.f32.gmra.mxu0 %v1832
      %v1956 = vpop.f32.mrf.mxu0
      %v1957 = vadd.f32 0.0, %v1956
      %1958 = vmatmul.f32.gmra.mxu0 %v1833
      %v1959 = vpop.f32.mrf.mxu0
      %v1960 = vadd.f32 0.0, %v1959
      %1961 = vmatmul.f32.gmra.mxu0 %v1834
      %v1962 = vpop.f32.mrf.mxu0
      %v1963 = vadd.f32 0.0, %v1962
      %1964 = vdwg.mxu0
      %v1965 = vadd.f32 %v1771, %v1870
      %v1966 = vadd.f32 %v1772, %v1873
      %v1967 = vadd.f32 %v1773, %v1876
      %v1968 = vadd.f32 %v1774, %v1879
      %v1969 = vadd.f32 %v1775, %v1882
      %v1970 = vadd.f32 %v1776, %v1885
      %v1971 = vadd.f32 %v1777, %v1888
      %v1972 = vadd.f32 %v1778, %v1891
      %v1973 = vadd.f32 %v1779, %v1894
      %v1974 = vadd.f32 %v1780, %v1897
      %v1975 = vadd.f32 %v1781, %v1900
      %v1976 = vadd.f32 %v1782, %v1903
      %v1977 = vadd.f32 %v1783, %v1906
      %v1978 = vadd.f32 %v1784, %v1909
      %v1979 = vadd.f32 %v1785, %v1912
      %v1980 = vadd.f32 %v1786, %v1915
      %v1981 = vadd.f32 %v1787, %v1918
      %v1982 = vadd.f32 %v1788, %v1921
      %v1983 = vadd.f32 %v1789, %v1924
      %v1984 = vadd.f32 %v1790, %v1927
      %v1985 = vadd.f32 %v1791, %v1930
      %v1986 = vadd.f32 %v1792, %v1933
      %v1987 = vadd.f32 %v1793, %v1936
      %v1988 = vadd.f32 %v1794, %v1939
      %v1989 = vadd.f32 %v1795, %v1942
      %v1990 = vadd.f32 %v1796, %v1945
      %v1991 = vadd.f32 %v1797, %v1948
      %v1992 = vadd.f32 %v1798, %v1951
      %v1993 = vadd.f32 %v1799, %v1954
      %v1994 = vadd.f32 %v1800, %v1957
      %v1995 = vadd.f32 %v1801, %v1960
      %v1996 = vadd.f32 %v1802, %v1963
      %v1997 = vld [vmem:[#allocation3 + $0x4] sm:$0xff]
      %v1998 = vld [vmem:[#allocation3 + $0xc] sm:$0xff]
      %v1999 = vld [vmem:[#allocation3 + $0x14] sm:$0xff]
      %v2000 = vld [vmem:[#allocation3 + $0x1c] sm:$0xff]
      %v2001 = vld [vmem:[#allocation3 + $0x24] sm:$0xff]
      %v2002 = vld [vmem:[#allocation3 + $0x2c] sm:$0xff]
      %v2003 = vld [vmem:[#allocation3 + $0x34] sm:$0xff]
      %v2004 = vld [vmem:[#allocation3 + $0x3c] sm:$0xff]
      %v2005 = vld [vmem:[#allocation3 + $0x44] sm:$0xff]
      %v2006 = vld [vmem:[#allocation3 + $0x4c] sm:$0xff]
      %v2007 = vld [vmem:[#allocation3 + $0x54] sm:$0xff]
      %v2008 = vld [vmem:[#allocation3 + $0x5c] sm:$0xff]
      %v2009 = vld [vmem:[#allocation3 + $0x64] sm:$0xff]
      %v2010 = vld [vmem:[#allocation3 + $0x6c] sm:$0xff]
      %v2011 = vld [vmem:[#allocation3 + $0x74] sm:$0xff]
      %v2012 = vld [vmem:[#allocation3 + $0x7c] sm:$0xff]
      %v2013 = vld [vmem:[#allocation3 + $0x84] sm:$0xff]
      %v2014 = vld [vmem:[#allocation3 + $0x8c] sm:$0xff]
      %v2015 = vld [vmem:[#allocation3 + $0x94] sm:$0xff]
      %v2016 = vld [vmem:[#allocation3 + $0x9c] sm:$0xff]
      %v2017 = vld [vmem:[#allocation3 + $0xa4] sm:$0xff]
      %v2018 = vld [vmem:[#allocation3 + $0xac] sm:$0xff]
      %v2019 = vld [vmem:[#allocation3 + $0xb4] sm:$0xff]
      %v2020 = vld [vmem:[#allocation3 + $0xbc] sm:$0xff]
      %v2021 = vld [vmem:[#allocation3 + $0xc4] sm:$0xff]
      %v2022 = vld [vmem:[#allocation3 + $0xcc] sm:$0xff]
      %v2023 = vld [vmem:[#allocation3 + $0xd4] sm:$0xff]
      %v2024 = vld [vmem:[#allocation3 + $0xdc] sm:$0xff]
      %v2025 = vld [vmem:[#allocation3 + $0xe4] sm:$0xff]
      %v2026 = vld [vmem:[#allocation3 + $0xec] sm:$0xff]
      %v2027 = vld [vmem:[#allocation3 + $0xf4] sm:$0xff]
      %v2028 = vld [vmem:[#allocation3 + $0xfc] sm:$0xf]
      %s2029 = scalar_lea.vmem %s1, 1152
      %v2030 = vld [vmem:[%s2029] sm:$0xff]
      %v2031 = vld [vmem:[%s2029 + $0x8] sm:$0xff]
      %v2032 = vld [vmem:[%s2029 + $0x10] sm:$0xff]
      %v2033 = vld [vmem:[%s2029 + $0x18] sm:$0xff]
      %v2034 = vld [vmem:[%s2029 + $0x20] sm:$0xff]
      %v2035 = vld [vmem:[%s2029 + $0x28] sm:$0xff]
      %v2036 = vld [vmem:[%s2029 + $0x30] sm:$0xff]
      %v2037 = vld [vmem:[%s2029 + $0x38] sm:$0xff]
      %v2038 = vld [vmem:[%s2029 + $0x40] sm:$0xff]
      %v2039 = vld [vmem:[%s2029 + $0x48] sm:$0xff]
      %v2040 = vld [vmem:[%s2029 + $0x50] sm:$0xff]
      %v2041 = vld [vmem:[%s2029 + $0x58] sm:$0xff]
      %v2042 = vld [vmem:[%s2029 + $0x60] sm:$0xff]
      %v2043 = vld [vmem:[%s2029 + $0x68] sm:$0xff]
      %v2044 = vld [vmem:[%s2029 + $0x70] sm:$0xff]
      %v2045 = vld [vmem:[%s2029 + $0x78] sm:$0xff]
      %2046 = vmatpush.msra.mxu0 %v2045
      %2047 = vmatpush.msra.mxu0 %v2044
      %2048 = vmatpush.msra.mxu0 %v2043
      %2049 = vmatpush.msra.mxu0 %v2042
      %2050 = vmatpush.msra.mxu0 %v2041
      %2051 = vmatpush.msra.mxu0 %v2040
      %2052 = vmatpush.msra.mxu0 %v2039
      %2053 = vmatpush.msra.mxu0 %v2038
      %2054 = vmatpush.msra.mxu0 %v2037
      %2055 = vmatpush.msra.mxu0 %v2036
      %2056 = vmatpush.msra.mxu0 %v2035
      %2057 = vmatpush.msra.mxu0 %v2034
      %2058 = vmatpush.msra.mxu0 %v2033
      %2059 = vmatpush.msra.mxu0 %v2032
      %2060 = vmatpush.msra.mxu0 %v2031
      %2061 = vmatpush.msra.mxu0 %v2030
      %2062 = vmatmul.f32.gmra.mxu0 %v1997
      %v2063 = vpop.f32.mrf.mxu0
      %v2064 = vadd.f32 0.0, %v2063
      %2065 = vmatmul.f32.gmra.mxu0 %v1998
      %v2066 = vpop.f32.mrf.mxu0
      %v2067 = vadd.f32 0.0, %v2066
      %2068 = vmatmul.f32.gmra.mxu0 %v1999
      %v2069 = vpop.f32.mrf.mxu0
      %v2070 = vadd.f32 0.0, %v2069
      %2071 = vmatmul.f32.gmra.mxu0 %v2000
      %v2072 = vpop.f32.mrf.mxu0
      %v2073 = vadd.f32 0.0, %v2072
      %2074 = vmatmul.f32.gmra.mxu0 %v2001
      %v2075 = vpop.f32.mrf.mxu0
      %v2076 = vadd.f32 0.0, %v2075
      %2077 = vmatmul.f32.gmra.mxu0 %v2002
      %v2078 = vpop.f32.mrf.mxu0
      %v2079 = vadd.f32 0.0, %v2078
      %2080 = vmatmul.f32.gmra.mxu0 %v2003
      %v2081 = vpop.f32.mrf.mxu0
      %v2082 = vadd.f32 0.0, %v2081
      %2083 = vmatmul.f32.gmra.mxu0 %v2004
      %v2084 = vpop.f32.mrf.mxu0
      %v2085 = vadd.f32 0.0, %v2084
      %2086 = vmatmul.f32.gmra.mxu0 %v2005
      %v2087 = vpop.f32.mrf.mxu0
      %v2088 = vadd.f32 0.0, %v2087
      %2089 = vmatmul.f32.gmra.mxu0 %v2006
      %v2090 = vpop.f32.mrf.mxu0
      %v2091 = vadd.f32 0.0, %v2090
      %2092 = vmatmul.f32.gmra.mxu0 %v2007
      %v2093 = vpop.f32.mrf.mxu0
      %v2094 = vadd.f32 0.0, %v2093
      %2095 = vmatmul.f32.gmra.mxu0 %v2008
      %v2096 = vpop.f32.mrf.mxu0
      %v2097 = vadd.f32 0.0, %v2096
      %2098 = vmatmul.f32.gmra.mxu0 %v2009
      %v2099 = vpop.f32.mrf.mxu0
      %v2100 = vadd.f32 0.0, %v2099
      %2101 = vmatmul.f32.gmra.mxu0 %v2010
      %v2102 = vpop.f32.mrf.mxu0
      %v2103 = vadd.f32 0.0, %v2102
      %2104 = vmatmul.f32.gmra.mxu0 %v2011
      %v2105 = vpop.f32.mrf.mxu0
      %v2106 = vadd.f32 0.0, %v2105
      %2107 = vmatmul.f32.gmra.mxu0 %v2012
      %v2108 = vpop.f32.mrf.mxu0
      %v2109 = vadd.f32 0.0, %v2108
      %2110 = vmatmul.f32.gmra.mxu0 %v2013
      %v2111 = vpop.f32.mrf.mxu0
      %v2112 = vadd.f32 0.0, %v2111
      %2113 = vmatmul.f32.gmra.mxu0 %v2014
      %v2114 = vpop.f32.mrf.mxu0
      %v2115 = vadd.f32 0.0, %v2114
      %2116 = vmatmul.f32.gmra.mxu0 %v2015
      %v2117 = vpop.f32.mrf.mxu0
      %v2118 = vadd.f32 0.0, %v2117
      %2119 = vmatmul.f32.gmra.mxu0 %v2016
      %v2120 = vpop.f32.mrf.mxu0
      %v2121 = vadd.f32 0.0, %v2120
      %2122 = vmatmul.f32.gmra.mxu0 %v2017
      %v2123 = vpop.f32.mrf.mxu0
      %v2124 = vadd.f32 0.0, %v2123
      %2125 = vmatmul.f32.gmra.mxu0 %v2018
      %v2126 = vpop.f32.mrf.mxu0
      %v2127 = vadd.f32 0.0, %v2126
      %2128 = vmatmul.f32.gmra.mxu0 %v2019
      %v2129 = vpop.f32.mrf.mxu0
      %v2130 = vadd.f32 0.0, %v2129
      %2131 = vmatmul.f32.gmra.mxu0 %v2020
      %v2132 = vpop.f32.mrf.mxu0
      %v2133 = vadd.f32 0.0, %v2132
      %2134 = vmatmul.f32.gmra.mxu0 %v2021
      %v2135 = vpop.f32.mrf.mxu0
      %v2136 = vadd.f32 0.0, %v2135
      %2137 = vmatmul.f32.gmra.mxu0 %v2022
      %v2138 = vpop.f32.mrf.mxu0
      %v2139 = vadd.f32 0.0, %v2138
      %2140 = vmatmul.f32.gmra.mxu0 %v2023
      %v2141 = vpop.f32.mrf.mxu0
      %v2142 = vadd.f32 0.0, %v2141
      %2143 = vmatmul.f32.gmra.mxu0 %v2024
      %v2144 = vpop.f32.mrf.mxu0
      %v2145 = vadd.f32 0.0, %v2144
      %2146 = vmatmul.f32.gmra.mxu0 %v2025
      %v2147 = vpop.f32.mrf.mxu0
      %v2148 = vadd.f32 0.0, %v2147
      %2149 = vmatmul.f32.gmra.mxu0 %v2026
      %v2150 = vpop.f32.mrf.mxu0
      %v2151 = vadd.f32 0.0, %v2150
      %2152 = vmatmul.f32.gmra.mxu0 %v2027
      %v2153 = vpop.f32.mrf.mxu0
      %v2154 = vadd.f32 0.0, %v2153
      %2155 = vmatmul.f32.gmra.mxu0 %v2028
      %v2156 = vpop.f32.mrf.mxu0
      %v2157 = vadd.f32 0.0, %v2156
      %2158 = vdwg.mxu0
      %v2159 = vadd.f32 %v1965, %v2064
      %v2160 = vadd.f32 %v1966, %v2067
      %v2161 = vadd.f32 %v1967, %v2070
      %v2162 = vadd.f32 %v1968, %v2073
      %v2163 = vadd.f32 %v1969, %v2076
      %v2164 = vadd.f32 %v1970, %v2079
      %v2165 = vadd.f32 %v1971, %v2082
      %v2166 = vadd.f32 %v1972, %v2085
      %v2167 = vadd.f32 %v1973, %v2088
      %v2168 = vadd.f32 %v1974, %v2091
      %v2169 = vadd.f32 %v1975, %v2094
      %v2170 = vadd.f32 %v1976, %v2097
      %v2171 = vadd.f32 %v1977, %v2100
      %v2172 = vadd.f32 %v1978, %v2103
      %v2173 = vadd.f32 %v1979, %v2106
      %v2174 = vadd.f32 %v1980, %v2109
      %v2175 = vadd.f32 %v1981, %v2112
      %v2176 = vadd.f32 %v1982, %v2115
      %v2177 = vadd.f32 %v1983, %v2118
      %v2178 = vadd.f32 %v1984, %v2121
      %v2179 = vadd.f32 %v1985, %v2124
      %v2180 = vadd.f32 %v1986, %v2127
      %v2181 = vadd.f32 %v1987, %v2130
      %v2182 = vadd.f32 %v1988, %v2133
      %v2183 = vadd.f32 %v1989, %v2136
      %v2184 = vadd.f32 %v1990, %v2139
      %v2185 = vadd.f32 %v1991, %v2142
      %v2186 = vadd.f32 %v1992, %v2145
      %v2187 = vadd.f32 %v1993, %v2148
      %v2188 = vadd.f32 %v1994, %v2151
      %v2189 = vadd.f32 %v1995, %v2154
      %v2190 = vadd.f32 %v1996, %v2157
      %v2191 = vld [vmem:[%s2 + $0x1] sm:$0x1]
      %v2192 = vperm.slane %v2191, 0
      %v2193 = vadd.f32 %v2159, %v2192
      %v2194 = vadd.f32 %v2160, %v2192
      %v2195 = vadd.f32 %v2161, %v2192
      %v2196 = vadd.f32 %v2162, %v2192
      %v2197 = vadd.f32 %v2163, %v2192
      %v2198 = vadd.f32 %v2164, %v2192
      %v2199 = vadd.f32 %v2165, %v2192
      %v2200 = vadd.f32 %v2166, %v2192
      %v2201 = vadd.f32 %v2167, %v2192
      %v2202 = vadd.f32 %v2168, %v2192
      %v2203 = vadd.f32 %v2169, %v2192
      %v2204 = vadd.f32 %v2170, %v2192
      %v2205 = vadd.f32 %v2171, %v2192
      %v2206 = vadd.f32 %v2172, %v2192
      %v2207 = vadd.f32 %v2173, %v2192
      %v2208 = vadd.f32 %v2174, %v2192
      %v2209 = vadd.f32 %v2175, %v2192
      %v2210 = vadd.f32 %v2176, %v2192
      %v2211 = vadd.f32 %v2177, %v2192
      %v2212 = vadd.f32 %v2178, %v2192
      %v2213 = vadd.f32 %v2179, %v2192
      %v2214 = vadd.f32 %v2180, %v2192
      %v2215 = vadd.f32 %v2181, %v2192
      %v2216 = vadd.f32 %v2182, %v2192
      %v2217 = vadd.f32 %v2183, %v2192
      %v2218 = vadd.f32 %v2184, %v2192
      %v2219 = vadd.f32 %v2185, %v2192
      %v2220 = vadd.f32 %v2186, %v2192
      %v2221 = vadd.f32 %v2187, %v2192
      %v2222 = vadd.f32 %v2188, %v2192
      %v2223 = vadd.f32 %v2189, %v2192
      %v2224 = vadd.f32 %v2190, %v2192
      %v2225 = vld [vmem:[%s170] sm:$0xff]
      %v2226 = vld [vmem:[%s170 + $0x8] sm:$0xff]
      %v2227 = vld [vmem:[%s170 + $0x10] sm:$0xff]
      %v2228 = vld [vmem:[%s170 + $0x18] sm:$0x3]
      %v2229 = vadd.f32 %v2225, %v2193
      %v2230 = vadd.f32 %v2226, %v2194
      %v2231 = vadd.f32 %v2227, %v2195
      %v2232 = vadd.f32 %v2228, %v2196
      %v2233 = vmax.f32 %v2229, 0.0
      %v2234 = vmax.f32 %v2230, 0.0
      %v2235 = vmax.f32 %v2231, 0.0
      %v2236 = vmax.f32 %v2232, 0.0
      %2237 = vst [vmem:[%s177] sm:$0xff] %v2233
      %2238 = vst [vmem:[%s177 + $0x8] sm:$0xff] %v2234
      %2239 = vst [vmem:[%s177 + $0x10] sm:$0xff] %v2235
      %2240 = vst [vmem:[%s177 + $0x18] sm:$0x3] %v2236
      %v2241 = vld [vmem:[%s190] sm:$0xff]
      %v2242 = vld [vmem:[%s190 + $0x8] sm:$0xff]
      %v2243 = vld [vmem:[%s190 + $0x10] sm:$0xff]
      %v2244 = vld [vmem:[%s190 + $0x18] sm:$0x3]
      %v2245 = vadd.f32 %v2241, %v2197
      %v2246 = vadd.f32 %v2242, %v2198
      %v2247 = vadd.f32 %v2243, %v2199
      %v2248 = vadd.f32 %v2244, %v2200
      %v2249 = vmax.f32 %v2245, 0.0
      %v2250 = vmax.f32 %v2246, 0.0
      %v2251 = vmax.f32 %v2247, 0.0
      %v2252 = vmax.f32 %v2248, 0.0
      %s2253 = scalar_lea.vmem %s177, 32
      %2254 = vst [vmem:[%s2253] sm:$0xff] %v2249
      %2255 = vst [vmem:[%s2253 + $0x8] sm:$0xff] %v2250
      %2256 = vst [vmem:[%s2253 + $0x10] sm:$0xff] %v2251
      %2257 = vst [vmem:[%s2253 + $0x18] sm:$0x3] %v2252
      %v2258 = vld [vmem:[%s201] sm:$0xff]
      %v2259 = vld [vmem:[%s201 + $0x8] sm:$0xff]
      %v2260 = vld [vmem:[%s201 + $0x10] sm:$0xff]
      %v2261 = vld [vmem:[%s201 + $0x18] sm:$0x3]
      %v2262 = vadd.f32 %v2258, %v2201
      %v2263 = vadd.f32 %v2259, %v2202
      %v2264 = vadd.f32 %v2260, %v2203
      %v2265 = vadd.f32 %v2261, %v2204
      %v2266 = vmax.f32 %v2262, 0.0
      %v2267 = vmax.f32 %v2263, 0.0
      %v2268 = vmax.f32 %v2264, 0.0
      %v2269 = vmax.f32 %v2265, 0.0
      %s2270 = scalar_lea.vmem %s177, 64
      %2271 = vst [vmem:[%s2270] sm:$0xff] %v2266
      %2272 = vst [vmem:[%s2270 + $0x8] sm:$0xff] %v2267
      %2273 = vst [vmem:[%s2270 + $0x10] sm:$0xff] %v2268
      %2274 = vst [vmem:[%s2270 + $0x18] sm:$0x3] %v2269
      %v2275 = vld [vmem:[%s212] sm:$0xff]
      %v2276 = vld [vmem:[%s212 + $0x8] sm:$0xff]
      %v2277 = vld [vmem:[%s212 + $0x10] sm:$0xff]
      %v2278 = vld [vmem:[%s212 + $0x18] sm:$0x3]
      %v2279 = vadd.f32 %v2275, %v2205
      %v2280 = vadd.f32 %v2276, %v2206
      %v2281 = vadd.f32 %v2277, %v2207
      %v2282 = vadd.f32 %v2278, %v2208
      %v2283 = vmax.f32 %v2279, 0.0
      %v2284 = vmax.f32 %v2280, 0.0
      %v2285 = vmax.f32 %v2281, 0.0
      %v2286 = vmax.f32 %v2282, 0.0
      %s2287 = scalar_lea.vmem %s177, 96
      %2288 = vst [vmem:[%s2287] sm:$0xff] %v2283
      %2289 = vst [vmem:[%s2287 + $0x8] sm:$0xff] %v2284
      %2290 = vst [vmem:[%s2287 + $0x10] sm:$0xff] %v2285
      %2291 = vst [vmem:[%s2287 + $0x18] sm:$0x3] %v2286
      %v2292 = vld [vmem:[%s223] sm:$0xff]
      %v2293 = vld [vmem:[%s223 + $0x8] sm:$0xff]
      %v2294 = vld [vmem:[%s223 + $0x10] sm:$0xff]
      %v2295 = vld [vmem:[%s223 + $0x18] sm:$0x3]
      %v2296 = vadd.f32 %v2292, %v2209
      %v2297 = vadd.f32 %v2293, %v2210
      %v2298 = vadd.f32 %v2294, %v2211
      %v2299 = vadd.f32 %v2295, %v2212
      %v2300 = vmax.f32 %v2296, 0.0
      %v2301 = vmax.f32 %v2297, 0.0
      %v2302 = vmax.f32 %v2298, 0.0
      %v2303 = vmax.f32 %v2299, 0.0
      %s2304 = scalar_lea.vmem %s177, 128
      %2305 = vst [vmem:[%s2304] sm:$0xff] %v2300
      %2306 = vst [vmem:[%s2304 + $0x8] sm:$0xff] %v2301
      %2307 = vst [vmem:[%s2304 + $0x10] sm:$0xff] %v2302
      %2308 = vst [vmem:[%s2304 + $0x18] sm:$0x3] %v2303
      %v2309 = vld [vmem:[%s234] sm:$0xff]
      %v2310 = vld [vmem:[%s234 + $0x8] sm:$0xff]
      %v2311 = vld [vmem:[%s234 + $0x10] sm:$0xff]
      %v2312 = vld [vmem:[%s234 + $0x18] sm:$0x3]
      %v2313 = vadd.f32 %v2309, %v2213
      %v2314 = vadd.f32 %v2310, %v2214
      %v2315 = vadd.f32 %v2311, %v2215
      %v2316 = vadd.f32 %v2312, %v2216
      %v2317 = vmax.f32 %v2313, 0.0
      %v2318 = vmax.f32 %v2314, 0.0
      %v2319 = vmax.f32 %v2315, 0.0
      %v2320 = vmax.f32 %v2316, 0.0
      %s2321 = scalar_lea.vmem %s177, 160
      %2322 = vst [vmem:[%s2321] sm:$0xff] %v2317
      %2323 = vst [vmem:[%s2321 + $0x8] sm:$0xff] %v2318
      %2324 = vst [vmem:[%s2321 + $0x10] sm:$0xff] %v2319
      %2325 = vst [vmem:[%s2321 + $0x18] sm:$0x3] %v2320
      %v2326 = vld [vmem:[%s245] sm:$0xff]
      %v2327 = vld [vmem:[%s245 + $0x8] sm:$0xff]
      %v2328 = vld [vmem:[%s245 + $0x10] sm:$0xff]
      %v2329 = vld [vmem:[%s245 + $0x18] sm:$0x3]
      %v2330 = vadd.f32 %v2326, %v2217
      %v2331 = vadd.f32 %v2327, %v2218
      %v2332 = vadd.f32 %v2328, %v2219
      %v2333 = vadd.f32 %v2329, %v2220
      %v2334 = vmax.f32 %v2330, 0.0
      %v2335 = vmax.f32 %v2331, 0.0
      %v2336 = vmax.f32 %v2332, 0.0
      %v2337 = vmax.f32 %v2333, 0.0
      %s2338 = scalar_lea.vmem %s177, 192
      %2339 = vst [vmem:[%s2338] sm:$0xff] %v2334
      %2340 = vst [vmem:[%s2338 + $0x8] sm:$0xff] %v2335
      %2341 = vst [vmem:[%s2338 + $0x10] sm:$0xff] %v2336
      %2342 = vst [vmem:[%s2338 + $0x18] sm:$0x3] %v2337
      %v2343 = vld [vmem:[%s256] sm:$0xff]
      %v2344 = vld [vmem:[%s256 + $0x8] sm:$0xff]
      %v2345 = vld [vmem:[%s256 + $0x10] sm:$0xff]
      %v2346 = vld [vmem:[%s256 + $0x18] sm:$0x3]
      %v2347 = vadd.f32 %v2343, %v2221
      %v2348 = vadd.f32 %v2344, %v2222
      %v2349 = vadd.f32 %v2345, %v2223
      %v2350 = vadd.f32 %v2346, %v2224
      %v2351 = vmax.f32 %v2347, 0.0
      %v2352 = vmax.f32 %v2348, 0.0
      %v2353 = vmax.f32 %v2349, 0.0
      %v2354 = vmax.f32 %v2350, 0.0
      %s2355 = scalar_lea.vmem %s177, 224
      %2356 = vst [vmem:[%s2355] sm:$0xff] %v2351
      %2357 = vst [vmem:[%s2355 + $0x8] sm:$0xff] %v2352
      %2358 = vst [vmem:[%s2355 + $0x10] sm:$0xff] %v2353
      %2359 = vst [vmem:[%s2355 + $0x18] sm:$0x3] %v2354
      %s2360 = smul.u32 8, %s14
      %p2361 = scmp.lt.s32.totalorder %s2360, 31
      %s2362 = scalar_select %p2361, %s2360, 31
      %s2363 = smul.addr %s2362, 4
      %s2364 = smul.addr %s2363, 8
      %s2365 = scalar_lea.vmem %s3, %s2364
      // Predicated region
      $region33: #{tpu_custom_call.1} parent=31 // pred_check
        %p2366 = pneg %p100
      $region34: #{tpu_custom_call.1} parent=31 // pred_check_branch
        %2368 = sbr.rel (%p2366) target = $region36
      $region35: #{tpu_custom_call.1} parent=31 // pred_region
        %s2369 = smul.u32 8, %s14
      $region36: #{tpu_custom_call.1} parent=31 // pred_fallthru
        _
    $region32: #{tpu_custom_call.1} parent=5 // pred_fallthru
      _
    %p2370 = scmp.le.s32.totalorder 2, %s9
    // Predicated region
    $region37: #{tpu_custom_call.1} parent=5 // pred_check
      %p2371 = pneg %p2370
    $region38: #{tpu_custom_call.1} parent=5 // pred_check_branch
      %2373 = sbr.rel (%p2371) target = $region40
    $region39: #{tpu_custom_call.1} parent=5 // pred_region
      %s2374 = ssub.s32 %s9, 2
      // Predicated region
      $region41: #{tpu_custom_call.1} parent=39 // pred_check
        %p2375 = pneg %p106
      $region42: #{tpu_custom_call.1} parent=39 // pred_check_branch
        %2377 = sbr.rel (%p2375) target = $region44
      $region43: #{tpu_custom_call.1} parent=39 // pred_region
        %s2378 = smul.u32 8, %s15
        %p2379 = scmp.lt.s32.totalorder %s2378, 31
        %s2380 = scalar_select %p2379, %s2378, 31
        %s2381 = smul.addr %s2380, 4
        %s2382 = smul.addr %s2381, 8
        %s2383 = scalar_lea.vmem %s3, %s2382
      $region44: #{tpu_custom_call.1} parent=39 // pred_fallthru
        _
    $region40: #{tpu_custom_call.1} parent=5 // pred_fallthru
      _
  $region6: #{tpu_custom_call.1} parent=0 // loop_footer
    %s13 = sadd.s32 1, %s9
  $region7: #{tpu_custom_call.1} parent=0 // loop_footer_branch
    %8 = sbr.rel target = $region3
  $region8: #{tpu_custom_call.1} parent=0 // loop_exit
    _

</llo_original>
